<compile_context>
chip_gen: v7x
topology: tpu7x:2x2x1
jax: 0.10.0
libtpu: 0.0.40
codegen_flags: <defaults>
</compile_context>

<pallas_src>
import functools

import jax
import jax.numpy as jnp
from jax import lax
from jax.experimental import pallas as pl
from jax.experimental.pallas import tpu as pltpu


def _pick_tile(n, prefs):
    """Largest preferred tile that divides n with at least 2 tiles, else n."""
    for p in prefs:
        if p < n and n % p == 0:
            return p
    return n


# ----------------------------------------------------------------------------
# Conv 3x3 (stride 1, "same") + bias + ReLU, row-tiled, K = 3*Cin matmuls
# ----------------------------------------------------------------------------
def _conv3x3_relu_kernel(x_ref, w_ref, b_ref, o_ref, xf_ref,
                         *, H, W, TH, Cin, Cout):
    """x_ref: (H, W, Cin) full image (revisited across row tiles)
    w_ref : (3, 3*Cin, Cout) column-fused weights
    b_ref : (1, Cout) f32
    o_ref : (TH, W, Cout) output row tile
    xf_ref: VMEM scratch (H+2, W, 3*Cin) -- zero-row-padded, column-im2col'd
            copy of the image, built once per batch element at ri == 0."""
    ri = pl.program_id(1)
    cdt = xf_ref.dtype

    @pl.when(ri == 0)
    def _stage_image():
        xc = x_ref[...].astype(cdt)                               # (H, W, Cin)
        zero_col = jnp.zeros((H, 1, Cin), cdt)
        zero_row = jnp.zeros((1, W, 3 * Cin), cdt)
        # kw = 0 / 1 / 2 column shifts with the 1-pixel zero halo folded in.
        left = jnp.concatenate([zero_col, xc[:, :W - 1, :]], axis=1)
        right = jnp.concatenate([xc[:, 1:, :], zero_col], axis=1)
        xf_ref[1:H + 1, :, 0:Cin] = left
        xf_ref[1:H + 1, :, Cin:2 * Cin] = xc
        xf_ref[1:H + 1, :, 2 * Cin:3 * Cin] = right
        xf_ref[0:1, :, :] = zero_row                              # top halo
        xf_ref[H + 1:H + 2, :, :] = zero_row                      # bottom halo

    r0 = pl.multiple_of(ri * TH, TH)
    acc = jnp.zeros((TH * W, Cout), jnp.float32)
    for di in range(3):                                           # kh shifts
        rows = xf_ref[pl.ds(r0 + di, TH), :, :]                   # (TH, W, 3Cin)
        acc = acc + jnp.dot(rows.reshape(TH * W, 3 * Cin), w_ref[di],
                            preferred_element_type=jnp.float32)
    acc = jnp.maximum(acc + b_ref[...], 0.0)                      # bias + ReLU
    o_ref[...] = acc.reshape(TH, W, Cout).astype(o_ref.dtype)


def conv3x3_relu(x, w, b, *, compute_dtype=jnp.bfloat16, out_dtype=jnp.bfloat16):
    """x: (B,H,W,Cin), w: (3,3,Cin,Cout) HWIO, b: (Cout,) -> relu(conv(x)+b)."""
    B, H, W, Cin = x.shape
    Cout = w.shape[-1]
    th = _pick_tile(H, (32, 16, 8))
    wf = w.astype(compute_dtype).reshape(3, 3 * Cin, Cout)
    kernel = functools.partial(_conv3x3_relu_kernel,
                               H=H, W=W, TH=th, Cin=Cin, Cout=Cout)
    return pl.pallas_call(
        kernel,
        out_shape=jax.ShapeDtypeStruct((B, H, W, Cout), out_dtype),
        grid=(B, H // th),
        in_specs=[
            pl.BlockSpec((None, H, W, Cin), lambda bi, ri: (bi, 0, 0, 0)),
            pl.BlockSpec((3, 3 * Cin, Cout), lambda bi, ri: (0, 0, 0)),
            pl.BlockSpec((1, Cout), lambda bi, ri: (0, 0)),
        ],
        out_specs=pl.BlockSpec((None, th, W, Cout), lambda bi, ri: (bi, ri, 0, 0)),
        scratch_shapes=[pltpu.VMEM((H + 2, W, 3 * Cin), compute_dtype)],
        compiler_params=pltpu.CompilerParams(
            dimension_semantics=("parallel", "arbitrary")),
    )(x, wf, b.astype(jnp.float32).reshape(1, Cout))


# ----------------------------------------------------------------------------
# Joint LayerNorm((N, C)) pass 1: per-batch mean / rstd (N-tiled, SMEM acc)
# ----------------------------------------------------------------------------
def _ln_stats_kernel(z_ref, pos_ref, stat_ref, acc_ref, *, inv_count, eps):
    ti = pl.program_id(1)

    @pl.when(ti == 0)
    def _init():
        acc_ref[0] = jnp.float32(0.0)
        acc_ref[1] = jnp.float32(0.0)

    x = z_ref[...].astype(jnp.float32) + pos_ref[...]
    acc_ref[0] = acc_ref[0] + jnp.sum(x)
    acc_ref[1] = acc_ref[1] + jnp.sum(x * x)

    @pl.when(ti == pl.num_programs(1) - 1)
    def _finalize():
        mean = acc_ref[0] * inv_count
        var = acc_ref[1] * inv_count - mean * mean
        rstd = lax.rsqrt(var + eps)
        lane = lax.broadcasted_iota(jnp.int32, (1, 128), 1)
        stat_ref[...] = jnp.where(lane == 0, mean,
                                  jnp.where(lane == 1, rstd, 0.0))


def layer_norm_stats(z, pos_proj, *, eps=1e-5):
    B, N, C = z.shape
    tn = _pick_tile(N, (1024, 512, 256, 128, 64, 32, 16, 8))
    kernel = functools.partial(_ln_stats_kernel,
                               inv_count=1.0 / float(N * C), eps=eps)
    return pl.pallas_call(
        kernel,
        out_shape=jax.ShapeDtypeStruct((B, 1, 128), jnp.float32),
        grid=(B, N // tn),
        in_specs=[
            pl.BlockSpec((None, tn, C), lambda bi, ti: (bi, ti, 0)),
            pl.BlockSpec((tn, C), lambda bi, ti: (ti, 0)),
        ],
        out_specs=pl.BlockSpec((None, 1, 128), lambda bi, ti: (bi, 0, 0)),
        scratch_shapes=[pltpu.SMEM((2,), jnp.float32)],
        compiler_params=pltpu.CompilerParams(
            dimension_semantics=("parallel", "arbitrary")),
    )(z, pos_proj)


# ----------------------------------------------------------------------------
# Tail pass 2: pos-add + normalize + affine + linear1 + ReLU + linear2
# ----------------------------------------------------------------------------
def _tail_kernel(stat_ref, z_ref, pos_ref, g_ref, be_ref,
                 w1_ref, b1_ref, w2_ref, b2_ref, o_ref):
    mean = stat_ref[0:1, 0:1]                                     # (1, 1) f32
    rstd = stat_ref[0:1, 1:2]                                     # (1, 1) f32
    x = z_ref[...].astype(jnp.float32) + pos_ref[...]             # (TN, C)
    xn = (x - mean) * rstd * g_ref[...] + be_ref[...]
    h = jnp.dot(xn.astype(w1_ref.dtype), w1_ref[...],
                preferred_element_type=jnp.float32) + b1_ref[...]
    h = jnp.maximum(h, 0.0)
    y = jnp.dot(h.astype(w2_ref.dtype), w2_ref[...],
                preferred_element_type=jnp.float32) + b2_ref[...]
    o_ref[...] = y.astype(o_ref.dtype)


def tail_transform(z, pos_proj, stats, params, *, compute_dtype=jnp.bfloat16):
    B, N, C = z.shape
    tn = _pick_tile(N, (1024, 512, 256, 128, 64, 32, 16, 8))
    const2d = lambda bi, ti: (0, 0)
    return pl.pallas_call(
        _tail_kernel,
        out_shape=jax.ShapeDtypeStruct((B, N, C), jnp.float32),
        grid=(B, N // tn),
        in_specs=[
            pl.BlockSpec((None, 1, 128), lambda bi, ti: (bi, 0, 0)),   # stats
            pl.BlockSpec((None, tn, C), lambda bi, ti: (bi, ti, 0)),   # z
            pl.BlockSpec((tn, C), lambda bi, ti: (ti, 0)),             # pos_proj
            pl.BlockSpec((tn, C), lambda bi, ti: (ti, 0)),             # ln gamma
            pl.BlockSpec((tn, C), lambda bi, ti: (ti, 0)),             # ln beta
            pl.BlockSpec((C, C), const2d),                             # w_lin1
            pl.BlockSpec((1, C), const2d),                             # b_lin1
            pl.BlockSpec((C, C), const2d),                             # w_lin2
            pl.BlockSpec((1, C), const2d),                             # b_lin2
        ],
        out_specs=pl.BlockSpec((None, tn, C), lambda bi, ti: (bi, ti, 0)),
        compiler_params=pltpu.CompilerParams(
            dimension_semantics=("parallel", "parallel")),
    )(stats, z, pos_proj, params["ln_gamma"], params["ln_beta"],
      params["w_lin1"].astype(compute_dtype), params["b_lin1"].reshape(1, C),
      params["w_lin2"].astype(compute_dtype), params["b_lin2"].reshape(1, C))


# ----------------------------------------------------------------------------
# pos_embedd_layer position tensor (matches _create_position_tensor)
# ----------------------------------------------------------------------------
def create_position_tensor(w, h):
    xs = jnp.arange(w, dtype=jnp.float32) / w
    ys = jnp.arange(h, dtype=jnp.float32) / h
    p1 = jnp.tile(xs, (h, 1))                 # (h, w)
    p2 = jnp.tile(1.0 - xs, (h, 1))           # (h, w)
    p3 = jnp.tile(ys, (w, 1)).T               # (h, w)
    p4 = jnp.tile(1.0 - ys, (w, 1)).T         # (h, w)
    P = jnp.stack([p1, p2, p3, p4], axis=2)   # (h, w, 4)
    return P.reshape(w * h, 4)


# ----------------------------------------------------------------------------
# Full forward (wrapper = glue only; hot compute lives in Pallas kernels)
# ----------------------------------------------------------------------------
def conv_backend_forward(x_nchw, params, pos_flat, eps=1e-5):
    x = jnp.transpose(x_nchw, (0, 2, 3, 1))                      # NCHW -> NHWC
    x = conv3x3_relu(x, params["w_conv1"], params["b_conv1"])
    x = conv3x3_relu(x, params["w_conv2"], params["b_conv2"])
    x = conv3x3_relu(x, params["w_conv3"], params["b_conv3"])
    x = conv3x3_relu(x, params["w_conv4"], params["b_conv4"])
    B, H, W, C = x.shape
    z = x.reshape(B, H * W, C)                                   # bf16
    # Batch-invariant pos-embedding projection hoisted out of the kernels.
    pos_proj = (pos_flat @ params["w_pos"] + params["b_pos"]).astype(jnp.float32)
    stats = layer_norm_stats(z, pos_proj, eps=eps)
    return tail_transform(z, pos_proj, stats, params)


# ----------------------------------------------------------------------------
# Pure-JAX reference (same mixed-precision rounding points, f32 accumulation)
# ----------------------------------------------------------------------------
def reference_forward(x_nchw, params, pos_flat, eps=1e-5, cdt=jnp.bfloat16):
    x = jnp.transpose(x_nchw, (0, 2, 3, 1))
    for i in range(1, 5):
        x = lax.conv_general_dilated(
            x.astype(cdt), params[f"w_conv{i}"].astype(cdt), (1, 1), "SAME",
            dimension_numbers=("NHWC", "HWIO", "NHWC"),
            preferred_element_type=jnp.float32)
        x = jnp.maximum(x + params[f"b_conv{i}"], 0.0)
    B, H, W, C = x.shape
    z = x.astype(cdt).astype(jnp.float32).reshape(B, H * W, C)
    pos_proj = pos_flat @ params["w_pos"] + params["b_pos"]
    z = z + pos_proj[None]
    mean = jnp.mean(z, axis=(1, 2), keepdims=True)
    var = jnp.mean(jnp.square(z - mean), axis=(1, 2), keepdims=True)
    zn = (z - mean) / jnp.sqrt(var + eps)
    zn = zn * params["ln_gamma"][None] + params["ln_beta"][None]
    h = jnp.maximum(
        jnp.dot(zn.astype(cdt), params["w_lin1"].astype(cdt),
                preferred_element_type=jnp.float32) + params["b_lin1"], 0.0)
    return jnp.dot(h.astype(cdt), params["w_lin2"].astype(cdt),
                   preferred_element_type=jnp.float32) + params["b_lin2"]


# ----------------------------------------------------------------------------
# Deterministic parameter init
# ----------------------------------------------------------------------------
def init_params(key, input_dim, c_in=1, c_hid=64):
    N = input_dim * input_dim
    keys = jax.random.split(key, 12)
    p = {}
    cins = [c_in, c_hid, c_hid, c_hid]
    for i in range(4):
        fan_in = 9 * cins[i]
        p[f"w_conv{i + 1}"] = (jax.random.normal(
            keys[i], (3, 3, cins[i], c_hid), jnp.float32)
            * (2.0 / fan_in) ** 0.5)
        p[f"b_conv{i + 1}"] = jnp.zeros((c_hid,), jnp.float32)
    p["w_pos"] = jax.random.normal(keys[4], (4, c_hid), jnp.float32) * 0.5
    p["b_pos"] = jax.random.normal(keys[5], (c_hid,), jnp.float32) * 0.1
    p["ln_gamma"] = jnp.ones((N, c_hid), jnp.float32)
    p["ln_beta"] = jnp.zeros((N, c_hid), jnp.float32)
    p["w_lin1"] = (jax.random.normal(keys[6], (c_hid, c_hid), jnp.float32)
                   / (c_hid ** 0.5))
    p["b_lin1"] = jax.random.normal(keys[7], (c_hid,), jnp.float32) * 0.1
    p["w_lin2"] = (jax.random.normal(keys[8], (c_hid, c_hid), jnp.float32)
                   / (c_hid ** 0.5))
    p["b_lin2"] = jax.random.normal(keys[9], (c_hid,), jnp.float32) * 0.1
    return p


if __name__ == "__main__":
    B = 2
    INPUT_DIM = 16          # small stand-in for the module's 128x128 input
    C_HID = 64              # conv / linear width, hard-coded 64 in the module

    key = jax.random.PRNGKey(0)
    k_x, k_p = jax.random.split(key)

    # PyTorch-style NCHW input: (B, 1, H, W)
    x = jax.random.normal(k_x, (B, 1, INPUT_DIM, INPUT_DIM), jnp.float32)
    params = init_params(k_p, INPUT_DIM, c_in=1, c_hid=C_HID)
    pos_flat = create_position_tensor(INPUT_DIM, INPUT_DIM)      # (N, 4)

    fwd = jax.jit(conv_backend_forward)
    out = jax.block_until_ready(fwd(x, params, pos_flat))

    ref = jax.block_until_ready(reference_forward(x, params, pos_flat))
    assert out.shape == (B, INPUT_DIM * INPUT_DIM, C_HID), out.shape
    max_err = float(jnp.max(jnp.abs(out - ref)))
    assert jnp.allclose(out, ref, atol=1e-2, rtol=1e-2), max_err
    print("KERNEL_OK")
</pallas_src>

<mosaic_0001>
module attributes {stable_mosaic.version = 11 : i64} {
  func.func @_conv3x3_relu_kernel(%arg0: i32, %arg1: i32, %arg2: memref<1x16x16x1xf32, #tpu.memory_space<vmem>>, %arg3: memref<3x3x64xbf16, #tpu.memory_space<vmem>>, %arg4: memref<1x64xf32, #tpu.memory_space<vmem>>, %arg5: memref<1x8x16x64xbf16, #tpu.memory_space<vmem>>, %arg6: memref<18x16x3xbf16, #tpu.memory_space<vmem>>) attributes {dimension_semantics = [#tpu.dimension_semantics<parallel>, #tpu.dimension_semantics<arbitrary>], iteration_bounds = array<i64: 2, 2>, scalar_prefetch = 0 : i64, scratch_operands = 1 : i64, tpu.core_type = #tpu.core_type<tc>, window_params = [{transform_indices = @transform_0, window_bounds = array<i64: 1, 16, 16, 1>}, {pipeline_mode = #tpu.pipeline_mode<synchronous>, transform_indices = @transform_1, window_bounds = array<i64: 3, 3, 64>}, {pipeline_mode = #tpu.pipeline_mode<synchronous>, transform_indices = @transform_2, window_bounds = array<i64: 1, 64>}, {transform_indices = @transform_3, window_bounds = array<i64: 1, 8, 16, 64>}]} {
    %c0_i32 = arith.constant 0 : i32
    %0 = arith.cmpi eq, %arg1, %c0_i32 : i32
    %1 = arith.extui %0 : i1 to i32
    %c0_i32_0 = arith.constant 0 : i32
    %2 = arith.cmpi ne, %1, %c0_i32_0 : i32
    scf.if %2 {
      %c0_24 = arith.constant 0 : index
      %c0_25 = arith.constant 0 : index
      %c0_26 = arith.constant 0 : index
      %c0_27 = arith.constant 0 : index
      %40 = vector.load %arg2[%c0_24, %c0_25, %c0_26, %c0_27] : memref<1x16x16x1xf32, #tpu.memory_space<vmem>>, vector<1x16x16x1xf32>
      %41 = vector.shape_cast %40 : vector<1x16x16x1xf32> to vector<16x16x1xf32>
      %42 = arith.truncf %41 : vector<16x16x1xf32> to vector<16x16x1xbf16>
      %cst_28 = arith.constant 0.000000e+00 : bf16
      %43 = vector.broadcast %cst_28 : bf16 to vector<16x1x1xbf16>
      %cst_29 = arith.constant 0.000000e+00 : bf16
      %44 = vector.broadcast %cst_29 : bf16 to vector<1x16x3xbf16>
      %45 = vector.extract_strided_slice %42 {offsets = [0, 0, 0], sizes = [16, 15, 1], strides = [1, 1, 1]} : vector<16x16x1xbf16> to vector<16x15x1xbf16>
      %46 = tpu.concatenate %43, %45 in 1 : vector<16x1x1xbf16>, vector<16x15x1xbf16> -> vector<16x16x1xbf16>
      %47 = vector.extract_strided_slice %42 {offsets = [0, 1, 0], sizes = [16, 15, 1], strides = [1, 1, 1]} : vector<16x16x1xbf16> to vector<16x15x1xbf16>
      %48 = tpu.concatenate %47, %43 in 1 : vector<16x15x1xbf16>, vector<16x1x1xbf16> -> vector<16x16x1xbf16>
      %c1_30 = arith.constant 1 : index
      %c0_31 = arith.constant 0 : index
      %c0_32 = arith.constant 0 : index
      %49 = vector.load %arg6[%c1_30, %c0_31, %c0_32] : memref<18x16x3xbf16, #tpu.memory_space<vmem>>, vector<16x16x1xbf16>
      tpu.vector_store %arg6[%c1_30, %c0_31, %c0_32], %46 {strides = array<i32>} : memref<18x16x3xbf16, #tpu.memory_space<vmem>>, vector<16x16x1xbf16>,
      %c1_33 = arith.constant 1 : index
      %c0_34 = arith.constant 0 : index
      %c1_35 = arith.constant 1 : index
      %50 = vector.load %arg6[%c1_33, %c0_34, %c1_35] : memref<18x16x3xbf16, #tpu.memory_space<vmem>>, vector<16x16x1xbf16>
      tpu.vector_store %arg6[%c1_33, %c0_34, %c1_35], %42 {strides = array<i32>} : memref<18x16x3xbf16, #tpu.memory_space<vmem>>, vector<16x16x1xbf16>,
      %c1_36 = arith.constant 1 : index
      %c0_37 = arith.constant 0 : index
      %c2_38 = arith.constant 2 : index
      %51 = vector.load %arg6[%c1_36, %c0_37, %c2_38] : memref<18x16x3xbf16, #tpu.memory_space<vmem>>, vector<16x16x1xbf16>
      tpu.vector_store %arg6[%c1_36, %c0_37, %c2_38], %48 {strides = array<i32>} : memref<18x16x3xbf16, #tpu.memory_space<vmem>>, vector<16x16x1xbf16>,
      %c0_39 = arith.constant 0 : index
      %c0_40 = arith.constant 0 : index
      %c0_41 = arith.constant 0 : index
      %52 = vector.load %arg6[%c0_39, %c0_40, %c0_41] : memref<18x16x3xbf16, #tpu.memory_space<vmem>>, vector<1x16x3xbf16>
      tpu.vector_store %arg6[%c0_39, %c0_40, %c0_41], %44 {strides = array<i32>} : memref<18x16x3xbf16, #tpu.memory_space<vmem>>, vector<1x16x3xbf16>,
      %c17 = arith.constant 17 : index
      %c0_42 = arith.constant 0 : index
      %c0_43 = arith.constant 0 : index
      %53 = vector.load %arg6[%c17, %c0_42, %c0_43] : memref<18x16x3xbf16, #tpu.memory_space<vmem>>, vector<1x16x3xbf16>
      tpu.vector_store %arg6[%c17, %c0_42, %c0_43], %44 {strides = array<i32>} : memref<18x16x3xbf16, #tpu.memory_space<vmem>>, vector<1x16x3xbf16>,
    } else {
    }
    %c8_i32 = arith.constant 8 : i32
    %3 = arith.muli %arg1, %c8_i32 : i32
    %4 = tpu.assume_multiple %3, 8 : i32
    %cst = arith.constant 0.000000e+00 : f32
    %5 = vector.broadcast %cst : f32 to vector<128x64xf32>
    %c0_i32_1 = arith.constant 0 : i32
    %6 = arith.addi %4, %c0_i32_1 : i32
    %7 = arith.index_cast %6 : i32 to index
    %c0 = arith.constant 0 : index
    %c0_2 = arith.constant 0 : index
    %8 = vector.load %arg6[%7, %c0, %c0_2] : memref<18x16x3xbf16, #tpu.memory_space<vmem>>, vector<8x16x3xbf16>
    %9 = vector.shape_cast %8 : vector<8x16x3xbf16> to vector<128x3xbf16>
    %c0_3 = arith.constant 0 : index
    %c0_4 = arith.constant 0 : index
    %c0_5 = arith.constant 0 : index
    %10 = vector.load %arg3[%c0_3, %c0_4, %c0_5] : memref<3x3x64xbf16, #tpu.memory_space<vmem>>, vector<1x3x64xbf16>
    %11 = vector.shape_cast %10 : vector<1x3x64xbf16> to vector<3x64xbf16>
    %cst_6 = arith.constant dense<0.000000e+00> : vector<128x64xf32>
    %12 = tpu.matmul %9, %11, %cst_6 {dimension_numbers = #tpu.dot_dimension_numbers<[1], [0], [0], [1], [0, 0, 1, 1], [], []>} : vector<128x3xbf16>, vector<3x64xbf16>, vector<128x64xf32> -> vector<128x64xf32>
    %13 = arith.addf %5, %12 : vector<128x64xf32>
    %c1_i32 = arith.constant 1 : i32
    %14 = arith.addi %4, %c1_i32 : i32
    %15 = arith.index_cast %14 : i32 to index
    %c0_7 = arith.constant 0 : index
    %c0_8 = arith.constant 0 : index
    %16 = vector.load %arg6[%15, %c0_7, %c0_8] : memref<18x16x3xbf16, #tpu.memory_space<vmem>>, vector<8x16x3xbf16>
    %17 = vector.shape_cast %16 : vector<8x16x3xbf16> to vector<128x3xbf16>
    %c1 = arith.constant 1 : index
    %c0_9 = arith.constant 0 : index
    %c0_10 = arith.constant 0 : index
    %18 = vector.load %arg3[%c1, %c0_9, %c0_10] : memref<3x3x64xbf16, #tpu.memory_space<vmem>>, vector<1x3x64xbf16>
    %19 = vector.shape_cast %18 : vector<1x3x64xbf16> to vector<3x64xbf16>
    %cst_11 = arith.constant dense<0.000000e+00> : vector<128x64xf32>
    %20 = tpu.matmul %17, %19, %cst_11 {dimension_numbers = #tpu.dot_dimension_numbers<[1], [0], [0], [1], [0, 0, 1, 1], [], []>} : vector<128x3xbf16>, vector<3x64xbf16>, vector<128x64xf32> -> vector<128x64xf32>
    %21 = arith.addf %13, %20 : vector<128x64xf32>
    %c2_i32 = arith.constant 2 : i32
    %22 = arith.addi %4, %c2_i32 : i32
    %23 = arith.index_cast %22 : i32 to index
    %c0_12 = arith.constant 0 : index
    %c0_13 = arith.constant 0 : index
    %24 = vector.load %arg6[%23, %c0_12, %c0_13] : memref<18x16x3xbf16, #tpu.memory_space<vmem>>, vector<8x16x3xbf16>
    %25 = vector.shape_cast %24 : vector<8x16x3xbf16> to vector<128x3xbf16>
    %c2 = arith.constant 2 : index
    %c0_14 = arith.constant 0 : index
    %c0_15 = arith.constant 0 : index
    %26 = vector.load %arg3[%c2, %c0_14, %c0_15] : memref<3x3x64xbf16, #tpu.memory_space<vmem>>, vector<1x3x64xbf16>
    %27 = vector.shape_cast %26 : vector<1x3x64xbf16> to vector<3x64xbf16>
    %cst_16 = arith.constant dense<0.000000e+00> : vector<128x64xf32>
    %28 = tpu.matmul %25, %27, %cst_16 {dimension_numbers = #tpu.dot_dimension_numbers<[1], [0], [0], [1], [0, 0, 1, 1], [], []>} : vector<128x3xbf16>, vector<3x64xbf16>, vector<128x64xf32> -> vector<128x64xf32>
    %29 = arith.addf %21, %28 : vector<128x64xf32>
    %c0_17 = arith.constant 0 : index
    %c0_18 = arith.constant 0 : index
    %30 = vector.load %arg4[%c0_17, %c0_18] : memref<1x64xf32, #tpu.memory_space<vmem>>, vector<1x64xf32>
    %31 = vector.broadcast %30 : vector<1x64xf32> to vector<128x64xf32>
    %32 = arith.addf %29, %31 : vector<128x64xf32>
    %cst_19 = arith.constant 0.000000e+00 : f32
    %33 = vector.broadcast %cst_19 : f32 to vector<128x64xf32>
    %34 = arith.maximumf %32, %33 : vector<128x64xf32>
    %35 = vector.shape_cast %34 : vector<128x64xf32> to vector<8x16x64xf32>
    %36 = arith.truncf %35 : vector<8x16x64xf32> to vector<8x16x64xbf16>
    %c0_20 = arith.constant 0 : index
    %c0_21 = arith.constant 0 : index
    %c0_22 = arith.constant 0 : index
    %c0_23 = arith.constant 0 : index
    %37 = vector.load %arg5[%c0_20, %c0_21, %c0_22, %c0_23] : memref<1x8x16x64xbf16, #tpu.memory_space<vmem>>, vector<1x8x16x64xbf16>
    %38 = vector.shape_cast %37 : vector<1x8x16x64xbf16> to vector<8x16x64xbf16>
    %39 = vector.shape_cast %36 : vector<8x16x64xbf16> to vector<1x8x16x64xbf16>
    tpu.vector_store %arg5[%c0_20, %c0_21, %c0_22, %c0_23], %39 {strides = array<i32>} : memref<1x8x16x64xbf16, #tpu.memory_space<vmem>>, vector<1x8x16x64xbf16>,
    return
  }
  func.func @transform_0(%arg0: i32, %arg1: i32) -> (i32, i32, i32, i32) {
    %c0_i32 = arith.constant 0 : i32
    %c0_i32_0 = arith.constant 0 : i32
    %c0_i32_1 = arith.constant 0 : i32
    %c0_i32_2 = arith.constant 0 : i32
    return %arg0, %c0_i32, %c0_i32_0, %c0_i32_1 : i32, i32, i32, i32
  }
  func.func @transform_1(%arg0: i32, %arg1: i32) -> (i32, i32, i32) {
    %c0_i32 = arith.constant 0 : i32
    %c0_i32_0 = arith.constant 0 : i32
    %c0_i32_1 = arith.constant 0 : i32
    %c0_i32_2 = arith.constant 0 : i32
    return %c0_i32, %c0_i32_0, %c0_i32_1 : i32, i32, i32
  }
  func.func @transform_2(%arg0: i32, %arg1: i32) -> (i32, i32) {
    %c0_i32 = arith.constant 0 : i32
    %c0_i32_0 = arith.constant 0 : i32
    %c0_i32_1 = arith.constant 0 : i32
    return %c0_i32, %c0_i32_0 : i32, i32
  }
  func.func @transform_3(%arg0: i32, %arg1: i32) -> (i32, i32, i32, i32) {
    %c0_i32 = arith.constant 0 : i32
    %c0_i32_0 = arith.constant 0 : i32
    %c0_i32_1 = arith.constant 0 : i32
    return %arg0, %arg1, %c0_i32, %c0_i32_0 : i32, i32, i32, i32
  }
}

module attributes {stable_mosaic.version = 11 : i64} {
  func.func @_conv3x3_relu_kernel(%arg0: i32, %arg1: i32, %arg2: memref<1x16x16x64xbf16, #tpu.memory_space<vmem>>, %arg3: memref<3x192x64xbf16, #tpu.memory_space<vmem>>, %arg4: memref<1x64xf32, #tpu.memory_space<vmem>>, %arg5: memref<1x8x16x64xbf16, #tpu.memory_space<vmem>>, %arg6: memref<18x16x192xbf16, #tpu.memory_space<vmem>>) attributes {dimension_semantics = [#tpu.dimension_semantics<parallel>, #tpu.dimension_semantics<arbitrary>], iteration_bounds = array<i64: 2, 2>, scalar_prefetch = 0 : i64, scratch_operands = 1 : i64, tpu.core_type = #tpu.core_type<tc>, window_params = [{transform_indices = @transform_0, window_bounds = array<i64: 1, 16, 16, 64>}, {pipeline_mode = #tpu.pipeline_mode<synchronous>, transform_indices = @transform_1, window_bounds = array<i64: 3, 192, 64>}, {pipeline_mode = #tpu.pipeline_mode<synchronous>, transform_indices = @transform_2, window_bounds = array<i64: 1, 64>}, {transform_indices = @transform_3, window_bounds = array<i64: 1, 8, 16, 64>}]} {
    %c0_i32 = arith.constant 0 : i32
    %0 = arith.cmpi eq, %arg1, %c0_i32 : i32
    %1 = arith.extui %0 : i1 to i32
    %c0_i32_0 = arith.constant 0 : i32
    %2 = arith.cmpi ne, %1, %c0_i32_0 : i32
    scf.if %2 {
      %c0_24 = arith.constant 0 : index
      %c0_25 = arith.constant 0 : index
      %c0_26 = arith.constant 0 : index
      %c0_27 = arith.constant 0 : index
      %40 = vector.load %arg2[%c0_24, %c0_25, %c0_26, %c0_27] : memref<1x16x16x64xbf16, #tpu.memory_space<vmem>>, vector<1x16x16x64xbf16>
      %41 = vector.shape_cast %40 : vector<1x16x16x64xbf16> to vector<16x16x64xbf16>
      %cst_28 = arith.constant 0.000000e+00 : bf16
      %42 = vector.broadcast %cst_28 : bf16 to vector<16x1x64xbf16>
      %cst_29 = arith.constant 0.000000e+00 : bf16
      %43 = vector.broadcast %cst_29 : bf16 to vector<1x16x192xbf16>
      %44 = vector.extract_strided_slice %41 {offsets = [0, 0, 0], sizes = [16, 15, 64], strides = [1, 1, 1]} : vector<16x16x64xbf16> to vector<16x15x64xbf16>
      %45 = tpu.concatenate %42, %44 in 1 : vector<16x1x64xbf16>, vector<16x15x64xbf16> -> vector<16x16x64xbf16>
      %46 = vector.extract_strided_slice %41 {offsets = [0, 1, 0], sizes = [16, 15, 64], strides = [1, 1, 1]} : vector<16x16x64xbf16> to vector<16x15x64xbf16>
      %47 = tpu.concatenate %46, %42 in 1 : vector<16x15x64xbf16>, vector<16x1x64xbf16> -> vector<16x16x64xbf16>
      %c1_30 = arith.constant 1 : index
      %c0_31 = arith.constant 0 : index
      %c0_32 = arith.constant 0 : index
      %48 = vector.load %arg6[%c1_30, %c0_31, %c0_32] : memref<18x16x192xbf16, #tpu.memory_space<vmem>>, vector<16x16x64xbf16>
      tpu.vector_store %arg6[%c1_30, %c0_31, %c0_32], %45 {strides = array<i32>} : memref<18x16x192xbf16, #tpu.memory_space<vmem>>, vector<16x16x64xbf16>,
      %c1_33 = arith.constant 1 : index
      %c0_34 = arith.constant 0 : index
      %c64 = arith.constant 64 : index
      %49 = vector.load %arg6[%c1_33, %c0_34, %c64] : memref<18x16x192xbf16, #tpu.memory_space<vmem>>, vector<16x16x64xbf16>
      tpu.vector_store %arg6[%c1_33, %c0_34, %c64], %41 {strides = array<i32>} : memref<18x16x192xbf16, #tpu.memory_space<vmem>>, vector<16x16x64xbf16>,
      %c1_35 = arith.constant 1 : index
      %c0_36 = arith.constant 0 : index
      %c128 = arith.constant 128 : index
      %50 = vector.load %arg6[%c1_35, %c0_36, %c128] : memref<18x16x192xbf16, #tpu.memory_space<vmem>>, vector<16x16x64xbf16>
      tpu.vector_store %arg6[%c1_35, %c0_36, %c128], %47 {strides = array<i32>} : memref<18x16x192xbf16, #tpu.memory_space<vmem>>, vector<16x16x64xbf16>,
      %c0_37 = arith.constant 0 : index
      %c0_38 = arith.constant 0 : index
      %c0_39 = arith.constant 0 : index
      %51 = vector.load %arg6[%c0_37, %c0_38, %c0_39] : memref<18x16x192xbf16, #tpu.memory_space<vmem>>, vector<1x16x192xbf16>
      tpu.vector_store %arg6[%c0_37, %c0_38, %c0_39], %43 {strides = array<i32>} : memref<18x16x192xbf16, #tpu.memory_space<vmem>>, vector<1x16x192xbf16>,
      %c17 = arith.constant 17 : index
      %c0_40 = arith.constant 0 : index
      %c0_41 = arith.constant 0 : index
      %52 = vector.load %arg6[%c17, %c0_40, %c0_41] : memref<18x16x192xbf16, #tpu.memory_space<vmem>>, vector<1x16x192xbf16>
      tpu.vector_store %arg6[%c17, %c0_40, %c0_41], %43 {strides = array<i32>} : memref<18x16x192xbf16, #tpu.memory_space<vmem>>, vector<1x16x192xbf16>,
    } else {
    }
    %c8_i32 = arith.constant 8 : i32
    %3 = arith.muli %arg1, %c8_i32 : i32
    %4 = tpu.assume_multiple %3, 8 : i32
    %cst = arith.constant 0.000000e+00 : f32
    %5 = vector.broadcast %cst : f32 to vector<128x64xf32>
    %c0_i32_1 = arith.constant 0 : i32
    %6 = arith.addi %4, %c0_i32_1 : i32
    %7 = arith.index_cast %6 : i32 to index
    %c0 = arith.constant 0 : index
    %c0_2 = arith.constant 0 : index
    %8 = vector.load %arg6[%7, %c0, %c0_2] : memref<18x16x192xbf16, #tpu.memory_space<vmem>>, vector<8x16x192xbf16>
    %9 = vector.shape_cast %8 : vector<8x16x192xbf16> to vector<128x192xbf16>
    %c0_3 = arith.constant 0 : index
    %c0_4 = arith.constant 0 : index
    %c0_5 = arith.constant 0 : index
    %10 = vector.load %arg3[%c0_3, %c0_4, %c0_5] : memref<3x192x64xbf16, #tpu.memory_space<vmem>>, vector<1x192x64xbf16>
    %11 = vector.shape_cast %10 : vector<1x192x64xbf16> to vector<192x64xbf16>
    %cst_6 = arith.constant dense<0.000000e+00> : vector<128x64xf32>
    %12 = tpu.matmul %9, %11, %cst_6 {dimension_numbers = #tpu.dot_dimension_numbers<[1], [0], [0], [1], [0, 0, 1, 1], [], []>} : vector<128x192xbf16>, vector<192x64xbf16>, vector<128x64xf32> -> vector<128x64xf32>
    %13 = arith.addf %5, %12 : vector<128x64xf32>
    %c1_i32 = arith.constant 1 : i32
    %14 = arith.addi %4, %c1_i32 : i32
    %15 = arith.index_cast %14 : i32 to index
    %c0_7 = arith.constant 0 : index
    %c0_8 = arith.constant 0 : index
    %16 = vector.load %arg6[%15, %c0_7, %c0_8] : memref<18x16x192xbf16, #tpu.memory_space<vmem>>, vector<8x16x192xbf16>
    %17 = vector.shape_cast %16 : vector<8x16x192xbf16> to vector<128x192xbf16>
    %c1 = arith.constant 1 : index
    %c0_9 = arith.constant 0 : index
    %c0_10 = arith.constant 0 : index
    %18 = vector.load %arg3[%c1, %c0_9, %c0_10] : memref<3x192x64xbf16, #tpu.memory_space<vmem>>, vector<1x192x64xbf16>
    %19 = vector.shape_cast %18 : vector<1x192x64xbf16> to vector<192x64xbf16>
    %cst_11 = arith.constant dense<0.000000e+00> : vector<128x64xf32>
    %20 = tpu.matmul %17, %19, %cst_11 {dimension_numbers = #tpu.dot_dimension_numbers<[1], [0], [0], [1], [0, 0, 1, 1], [], []>} : vector<128x192xbf16>, vector<192x64xbf16>, vector<128x64xf32> -> vector<128x64xf32>
    %21 = arith.addf %13, %20 : vector<128x64xf32>
    %c2_i32 = arith.constant 2 : i32
    %22 = arith.addi %4, %c2_i32 : i32
    %23 = arith.index_cast %22 : i32 to index
    %c0_12 = arith.constant 0 : index
    %c0_13 = arith.constant 0 : index
    %24 = vector.load %arg6[%23, %c0_12, %c0_13] : memref<18x16x192xbf16, #tpu.memory_space<vmem>>, vector<8x16x192xbf16>
    %25 = vector.shape_cast %24 : vector<8x16x192xbf16> to vector<128x192xbf16>
    %c2 = arith.constant 2 : index
    %c0_14 = arith.constant 0 : index
    %c0_15 = arith.constant 0 : index
    %26 = vector.load %arg3[%c2, %c0_14, %c0_15] : memref<3x192x64xbf16, #tpu.memory_space<vmem>>, vector<1x192x64xbf16>
    %27 = vector.shape_cast %26 : vector<1x192x64xbf16> to vector<192x64xbf16>
    %cst_16 = arith.constant dense<0.000000e+00> : vector<128x64xf32>
    %28 = tpu.matmul %25, %27, %cst_16 {dimension_numbers = #tpu.dot_dimension_numbers<[1], [0], [0], [1], [0, 0, 1, 1], [], []>} : vector<128x192xbf16>, vector<192x64xbf16>, vector<128x64xf32> -> vector<128x64xf32>
    %29 = arith.addf %21, %28 : vector<128x64xf32>
    %c0_17 = arith.constant 0 : index
    %c0_18 = arith.constant 0 : index
    %30 = vector.load %arg4[%c0_17, %c0_18] : memref<1x64xf32, #tpu.memory_space<vmem>>, vector<1x64xf32>
    %31 = vector.broadcast %30 : vector<1x64xf32> to vector<128x64xf32>
    %32 = arith.addf %29, %31 : vector<128x64xf32>
    %cst_19 = arith.constant 0.000000e+00 : f32
    %33 = vector.broadcast %cst_19 : f32 to vector<128x64xf32>
    %34 = arith.maximumf %32, %33 : vector<128x64xf32>
    %35 = vector.shape_cast %34 : vector<128x64xf32> to vector<8x16x64xf32>
    %36 = arith.truncf %35 : vector<8x16x64xf32> to vector<8x16x64xbf16>
    %c0_20 = arith.constant 0 : index
    %c0_21 = arith.constant 0 : index
    %c0_22 = arith.constant 0 : index
    %c0_23 = arith.constant 0 : index
    %37 = vector.load %arg5[%c0_20, %c0_21, %c0_22, %c0_23] : memref<1x8x16x64xbf16, #tpu.memory_space<vmem>>, vector<1x8x16x64xbf16>
    %38 = vector.shape_cast %37 : vector<1x8x16x64xbf16> to vector<8x16x64xbf16>
    %39 = vector.shape_cast %36 : vector<8x16x64xbf16> to vector<1x8x16x64xbf16>
    tpu.vector_store %arg5[%c0_20, %c0_21, %c0_22, %c0_23], %39 {strides = array<i32>} : memref<1x8x16x64xbf16, #tpu.memory_space<vmem>>, vector<1x8x16x64xbf16>,
    return
  }
  func.func @transform_0(%arg0: i32, %arg1: i32) -> (i32, i32, i32, i32) {
    %c0_i32 = arith.constant 0 : i32
    %c0_i32_0 = arith.constant 0 : i32
    %c0_i32_1 = arith.constant 0 : i32
    %c0_i32_2 = arith.constant 0 : i32
    return %arg0, %c0_i32, %c0_i32_0, %c0_i32_1 : i32, i32, i32, i32
  }
  func.func @transform_1(%arg0: i32, %arg1: i32) -> (i32, i32, i32) {
    %c0_i32 = arith.constant 0 : i32
    %c0_i32_0 = arith.constant 0 : i32
    %c0_i32_1 = arith.constant 0 : i32
    %c0_i32_2 = arith.constant 0 : i32
    return %c0_i32, %c0_i32_0, %c0_i32_1 : i32, i32, i32
  }
  func.func @transform_2(%arg0: i32, %arg1: i32) -> (i32, i32) {
    %c0_i32 = arith.constant 0 : i32
    %c0_i32_0 = arith.constant 0 : i32
    %c0_i32_1 = arith.constant 0 : i32
    return %c0_i32, %c0_i32_0 : i32, i32
  }
  func.func @transform_3(%arg0: i32, %arg1: i32) -> (i32, i32, i32, i32) {
    %c0_i32 = arith.constant 0 : i32
    %c0_i32_0 = arith.constant 0 : i32
    %c0_i32_1 = arith.constant 0 : i32
    return %arg0, %arg1, %c0_i32, %c0_i32_0 : i32, i32, i32, i32
  }
}

module attributes {stable_mosaic.version = 11 : i64} {
  func.func @_ln_stats_kernel(%arg0: i32, %arg1: i32, %arg2: memref<1x128x64xbf16, #tpu.memory_space<vmem>>, %arg3: memref<128x64xf32, #tpu.memory_space<vmem>>, %arg4: memref<1x1x128xf32, #tpu.memory_space<vmem>>, %arg5: memref<2xf32, #tpu.memory_space<smem>>) attributes {dimension_semantics = [#tpu.dimension_semantics<parallel>, #tpu.dimension_semantics<arbitrary>], iteration_bounds = array<i64: 2, 2>, scalar_prefetch = 0 : i64, scratch_operands = 1 : i64, tpu.core_type = #tpu.core_type<tc>, window_params = [{transform_indices = @transform_0, window_bounds = array<i64: 1, 128, 64>}, {transform_indices = @transform_1, window_bounds = array<i64: 128, 64>}, {transform_indices = @transform_2, window_bounds = array<i64: 1, 1, 128>}]} {
    %c0_i32 = arith.constant 0 : i32
    %0 = arith.cmpi eq, %arg1, %c0_i32 : i32
    %1 = arith.extui %0 : i1 to i32
    %c0_i32_0 = arith.constant 0 : i32
    %2 = arith.cmpi ne, %1, %c0_i32_0 : i32
    scf.if %2 {
      %cst_10 = arith.constant 0.000000e+00 : f32
      %c0_11 = arith.constant 0 : index
      %26 = memref.load %arg5[%c0_11] : memref<2xf32, #tpu.memory_space<smem>>
      memref.store %cst_10, %arg5[%c0_11] : memref<2xf32, #tpu.memory_space<smem>>
      %cst_12 = arith.constant 0.000000e+00 : f32
      %c1_13 = arith.constant 1 : index
      %27 = memref.load %arg5[%c1_13] : memref<2xf32, #tpu.memory_space<smem>>
      memref.store %cst_12, %arg5[%c1_13] : memref<2xf32, #tpu.memory_space<smem>>
    } else {
    }
    %c0 = arith.constant 0 : index
    %c0_1 = arith.constant 0 : index
    %c0_2 = arith.constant 0 : index
    %3 = vector.load %arg2[%c0, %c0_1, %c0_2] : memref<1x128x64xbf16, #tpu.memory_space<vmem>>, vector<1x128x64xbf16>
    %4 = vector.shape_cast %3 : vector<1x128x64xbf16> to vector<128x64xbf16>
    %5 = arith.extf %4 : vector<128x64xbf16> to vector<128x64xf32>
    %c0_3 = arith.constant 0 : index
    %c0_4 = arith.constant 0 : index
    %6 = vector.load %arg3[%c0_3, %c0_4] : memref<128x64xf32, #tpu.memory_space<vmem>>, vector<128x64xf32>
    %7 = arith.addf %5, %6 : vector<128x64xf32>
    %c0_5 = arith.constant 0 : index
    %8 = memref.load %arg5[%c0_5] : memref<2xf32, #tpu.memory_space<smem>>
    %9 = vector.shape_cast %7 : vector<128x64xf32> to vector<1x128x64xf32>
    %cst = arith.constant dense<0.000000e+00> : vector<1xf32>
    %10 = vector.multi_reduction <add>, %9, %cst [1, 2] : vector<1x128x64xf32> to vector<1xf32>
    %11 = vector.shape_cast %10 : vector<1xf32> to vector<1x1x1xf32>
    %12 = vector.extract %11[0, 0, 0] : f32 from vector<1x1x1xf32>
    %13 = arith.addf %8, %12 : f32
    %c0_6 = arith.constant 0 : index
    %14 = memref.load %arg5[%c0_6] : memref<2xf32, #tpu.memory_space<smem>>
    memref.store %13, %arg5[%c0_6] : memref<2xf32, #tpu.memory_space<smem>>
    %c1 = arith.constant 1 : index
    %15 = memref.load %arg5[%c1] : memref<2xf32, #tpu.memory_space<smem>>
    %16 = arith.mulf %7, %7 : vector<128x64xf32>
    %17 = vector.shape_cast %16 : vector<128x64xf32> to vector<1x128x64xf32>
    %cst_7 = arith.constant dense<0.000000e+00> : vector<1xf32>
    %18 = vector.multi_reduction <add>, %17, %cst_7 [1, 2] : vector<1x128x64xf32> to vector<1xf32>
    %19 = vector.shape_cast %18 : vector<1xf32> to vector<1x1x1xf32>
    %20 = vector.extract %19[0, 0, 0] : f32 from vector<1x1x1xf32>
    %21 = arith.addf %15, %20 : f32
    %c1_8 = arith.constant 1 : index
    %22 = memref.load %arg5[%c1_8] : memref<2xf32, #tpu.memory_space<smem>>
    memref.store %21, %arg5[%c1_8] : memref<2xf32, #tpu.memory_space<smem>>
    %c1_i32 = arith.constant 1 : i32
    %23 = arith.cmpi eq, %arg1, %c1_i32 : i32
    %24 = arith.extui %23 : i1 to i32
    %c0_i32_9 = arith.constant 0 : i32
    %25 = arith.cmpi ne, %24, %c0_i32_9 : i32
    scf.if %25 {
      %c0_10 = arith.constant 0 : index
      %26 = memref.load %arg5[%c0_10] : memref<2xf32, #tpu.memory_space<smem>>
      %cst_11 = arith.constant 6.10351563E-5 : f32
      %27 = arith.mulf %26, %cst_11 : f32
      %c1_12 = arith.constant 1 : index
      %28 = memref.load %arg5[%c1_12] : memref<2xf32, #tpu.memory_space<smem>>
      %cst_13 = arith.constant 6.10351563E-5 : f32
      %29 = arith.mulf %28, %cst_13 : f32
      %30 = arith.mulf %27, %27 : f32
      %31 = arith.subf %29, %30 : f32
      %cst_14 = arith.constant 9.99999974E-6 : f32
      %32 = arith.addf %31, %cst_14 : f32
      %33 = math.rsqrt %32 : f32
      %34 = tpu.iota {dimensions = array<i32: 1>} : vector<1x128xi32>
      %c0_i32_15 = arith.constant 0 : i32
      %35 = vector.broadcast %c0_i32_15 : i32 to vector<1x128xi32>
      %36 = arith.cmpi eq, %34, %35 : vector<1x128xi32>
      %c1_i32_16 = arith.constant 1 : i32
      %37 = vector.broadcast %c1_i32_16 : i32 to vector<1x128xi32>
      %38 = arith.cmpi eq, %34, %37 : vector<1x128xi32>
      %cst_17 = arith.constant 0.000000e+00 : f32
      %39 = vector.broadcast %33 : f32 to vector<1x128xf32>
      %40 = vector.broadcast %cst_17 : f32 to vector<1x128xf32>
      %41 = arith.select %38, %39, %40 : vector<1x128xi1>, vector<1x128xf32>
      %42 = vector.broadcast %27 : f32 to vector<1x128xf32>
      %43 = arith.select %36, %42, %41 : vector<1x128xi1>, vector<1x128xf32>
      %c0_18 = arith.constant 0 : index
      %c0_19 = arith.constant 0 : index
      %c0_20 = arith.constant 0 : index
      %44 = vector.load %arg4[%c0_18, %c0_19, %c0_20] : memref<1x1x128xf32, #tpu.memory_space<vmem>>, vector<1x1x128xf32>
      %45 = vector.shape_cast %44 : vector<1x1x128xf32> to vector<1x128xf32>
      %46 = vector.shape_cast %43 : vector<1x128xf32> to vector<1x1x128xf32>
      tpu.vector_store %arg4[%c0_18, %c0_19, %c0_20], %46 {strides = array<i32>} : memref<1x1x128xf32, #tpu.memory_space<vmem>>, vector<1x1x128xf32>,
    } else {
    }
    return
  }
  func.func @transform_0(%arg0: i32, %arg1: i32) -> (i32, i32, i32) {
    %c0_i32 = arith.constant 0 : i32
    %c0_i32_0 = arith.constant 0 : i32
    return %arg0, %arg1, %c0_i32 : i32, i32, i32
  }
  func.func @transform_1(%arg0: i32, %arg1: i32) -> (i32, i32) {
    %c0_i32 = arith.constant 0 : i32
    %c0_i32_0 = arith.constant 0 : i32
    return %arg1, %c0_i32 : i32, i32
  }
  func.func @transform_2(%arg0: i32, %arg1: i32) -> (i32, i32, i32) {
    %c0_i32 = arith.constant 0 : i32
    %c0_i32_0 = arith.constant 0 : i32
    %c0_i32_1 = arith.constant 0 : i32
    return %arg0, %c0_i32, %c0_i32_0 : i32, i32, i32
  }
}

module attributes {stable_mosaic.version = 11 : i64} {
  func.func @_tail_kernel(%arg0: i32, %arg1: i32, %arg2: memref<1x1x128xf32, #tpu.memory_space<vmem>>, %arg3: memref<1x128x64xbf16, #tpu.memory_space<vmem>>, %arg4: memref<128x64xf32, #tpu.memory_space<vmem>>, %arg5: memref<128x64xf32, #tpu.memory_space<vmem>>, %arg6: memref<128x64xf32, #tpu.memory_space<vmem>>, %arg7: memref<64x64xbf16, #tpu.memory_space<vmem>>, %arg8: memref<1x64xf32, #tpu.memory_space<vmem>>, %arg9: memref<64x64xbf16, #tpu.memory_space<vmem>>, %arg10: memref<1x64xf32, #tpu.memory_space<vmem>>, %arg11: memref<1x128x64xf32, #tpu.memory_space<vmem>>) attributes {dimension_semantics = [#tpu.dimension_semantics<parallel>, #tpu.dimension_semantics<parallel>], iteration_bounds = array<i64: 2, 2>, scalar_prefetch = 0 : i64, scratch_operands = 0 : i64, tpu.core_type = #tpu.core_type<tc>, window_params = [{transform_indices = @transform_0, window_bounds = array<i64: 1, 1, 128>}, {transform_indices = @transform_1, window_bounds = array<i64: 1, 128, 64>}, {transform_indices = @transform_2, window_bounds = array<i64: 128, 64>}, {transform_indices = @transform_3, window_bounds = array<i64: 128, 64>}, {transform_indices = @transform_4, window_bounds = array<i64: 128, 64>}, {pipeline_mode = #tpu.pipeline_mode<synchronous>, transform_indices = @transform_5, window_bounds = array<i64: 64, 64>}, {pipeline_mode = #tpu.pipeline_mode<synchronous>, transform_indices = @transform_6, window_bounds = array<i64: 1, 64>}, {pipeline_mode = #tpu.pipeline_mode<synchronous>, transform_indices = @transform_7, window_bounds = array<i64: 64, 64>}, {pipeline_mode = #tpu.pipeline_mode<synchronous>, transform_indices = @transform_8, window_bounds = array<i64: 1, 64>}, {transform_indices = @transform_9, window_bounds = array<i64: 1, 128, 64>}]} {
    %c0 = arith.constant 0 : index
    %c0_0 = arith.constant 0 : index
    %c0_1 = arith.constant 0 : index
    %0 = vector.load %arg2[%c0, %c0_0, %c0_1] : memref<1x1x128xf32, #tpu.memory_space<vmem>>, vector<1x1x1xf32>
    %1 = vector.shape_cast %0 : vector<1x1x1xf32> to vector<1x1xf32>
    %c0_2 = arith.constant 0 : index
    %c0_3 = arith.constant 0 : index
    %c1 = arith.constant 1 : index
    %2 = vector.load %arg2[%c0_2, %c0_3, %c1] : memref<1x1x128xf32, #tpu.memory_space<vmem>>, vector<1x1x1xf32>
    %3 = vector.shape_cast %2 : vector<1x1x1xf32> to vector<1x1xf32>
    %c0_4 = arith.constant 0 : index
    %c0_5 = arith.constant 0 : index
    %c0_6 = arith.constant 0 : index
    %4 = vector.load %arg3[%c0_4, %c0_5, %c0_6] : memref<1x128x64xbf16, #tpu.memory_space<vmem>>, vector<1x128x64xbf16>
    %5 = vector.shape_cast %4 : vector<1x128x64xbf16> to vector<128x64xbf16>
    %6 = arith.extf %5 : vector<128x64xbf16> to vector<128x64xf32>
    %c0_7 = arith.constant 0 : index
    %c0_8 = arith.constant 0 : index
    %7 = vector.load %arg4[%c0_7, %c0_8] : memref<128x64xf32, #tpu.memory_space<vmem>>, vector<128x64xf32>
    %8 = arith.addf %6, %7 : vector<128x64xf32>
    %9 = vector.broadcast %1 : vector<1x1xf32> to vector<128x64xf32>
    %10 = arith.subf %8, %9 : vector<128x64xf32>
    %11 = vector.broadcast %3 : vector<1x1xf32> to vector<128x64xf32>
    %12 = arith.mulf %10, %11 : vector<128x64xf32>
    %c0_9 = arith.constant 0 : index
    %c0_10 = arith.constant 0 : index
    %13 = vector.load %arg5[%c0_9, %c0_10] : memref<128x64xf32, #tpu.memory_space<vmem>>, vector<128x64xf32>
    %14 = arith.mulf %12, %13 : vector<128x64xf32>
    %c0_11 = arith.constant 0 : index
    %c0_12 = arith.constant 0 : index
    %15 = vector.load %arg6[%c0_11, %c0_12] : memref<128x64xf32, #tpu.memory_space<vmem>>, vector<128x64xf32>
    %16 = arith.addf %14, %15 : vector<128x64xf32>
    %17 = arith.truncf %16 : vector<128x64xf32> to vector<128x64xbf16>
    %c0_13 = arith.constant 0 : index
    %c0_14 = arith.constant 0 : index
    %18 = vector.load %arg7[%c0_13, %c0_14] : memref<64x64xbf16, #tpu.memory_space<vmem>>, vector<64x64xbf16>
    %cst = arith.constant dense<0.000000e+00> : vector<128x64xf32>
    %19 = tpu.matmul %17, %18, %cst {dimension_numbers = #tpu.dot_dimension_numbers<[1], [0], [0], [1], [0, 0, 1, 1], [], []>} : vector<128x64xbf16>, vector<64x64xbf16>, vector<128x64xf32> -> vector<128x64xf32>
    %c0_15 = arith.constant 0 : index
    %c0_16 = arith.constant 0 : index
    %20 = vector.load %arg8[%c0_15, %c0_16] : memref<1x64xf32, #tpu.memory_space<vmem>>, vector<1x64xf32>
    %21 = vector.broadcast %20 : vector<1x64xf32> to vector<128x64xf32>
    %22 = arith.addf %19, %21 : vector<128x64xf32>
    %cst_17 = arith.constant 0.000000e+00 : f32
    %23 = vector.broadcast %cst_17 : f32 to vector<128x64xf32>
    %24 = arith.maximumf %22, %23 : vector<128x64xf32>
    %25 = arith.truncf %24 : vector<128x64xf32> to vector<128x64xbf16>
    %c0_18 = arith.constant 0 : index
    %c0_19 = arith.constant 0 : index
    %26 = vector.load %arg9[%c0_18, %c0_19] : memref<64x64xbf16, #tpu.memory_space<vmem>>, vector<64x64xbf16>
    %cst_20 = arith.constant dense<0.000000e+00> : vector<128x64xf32>
    %27 = tpu.matmul %25, %26, %cst_20 {dimension_numbers = #tpu.dot_dimension_numbers<[1], [0], [0], [1], [0, 0, 1, 1], [], []>} : vector<128x64xbf16>, vector<64x64xbf16>, vector<128x64xf32> -> vector<128x64xf32>
    %c0_21 = arith.constant 0 : index
    %c0_22 = arith.constant 0 : index
    %28 = vector.load %arg10[%c0_21, %c0_22] : memref<1x64xf32, #tpu.memory_space<vmem>>, vector<1x64xf32>
    %29 = vector.broadcast %28 : vector<1x64xf32> to vector<128x64xf32>
    %30 = arith.addf %27, %29 : vector<128x64xf32>
    %c0_23 = arith.constant 0 : index
    %c0_24 = arith.constant 0 : index
    %c0_25 = arith.constant 0 : index
    %31 = vector.load %arg11[%c0_23, %c0_24, %c0_25] : memref<1x128x64xf32, #tpu.memory_space<vmem>>, vector<1x128x64xf32>
    %32 = vector.shape_cast %31 : vector<1x128x64xf32> to vector<128x64xf32>
    %33 = vector.shape_cast %30 : vector<128x64xf32> to vector<1x128x64xf32>
    tpu.vector_store %arg11[%c0_23, %c0_24, %c0_25], %33 {strides = array<i32>} : memref<1x128x64xf32, #tpu.memory_space<vmem>>, vector<1x128x64xf32>,
    return
  }
  func.func @transform_0(%arg0: i32, %arg1: i32) -> (i32, i32, i32) {
    %c0_i32 = arith.constant 0 : i32
    %c0_i32_0 = arith.constant 0 : i32
    %c0_i32_1 = arith.constant 0 : i32
    return %arg0, %c0_i32, %c0_i32_0 : i32, i32, i32
  }
  func.func @transform_1(%arg0: i32, %arg1: i32) -> (i32, i32, i32) {
    %c0_i32 = arith.constant 0 : i32
    %c0_i32_0 = arith.constant 0 : i32
    return %arg0, %arg1, %c0_i32 : i32, i32, i32
  }
  func.func @transform_2(%arg0: i32, %arg1: i32) -> (i32, i32) {
    %c0_i32 = arith.constant 0 : i32
    %c0_i32_0 = arith.constant 0 : i32
    return %arg1, %c0_i32 : i32, i32
  }
  func.func @transform_3(%arg0: i32, %arg1: i32) -> (i32, i32) {
    %c0_i32 = arith.constant 0 : i32
    %c0_i32_0 = arith.constant 0 : i32
    return %arg1, %c0_i32 : i32, i32
  }
  func.func @transform_4(%arg0: i32, %arg1: i32) -> (i32, i32) {
    %c0_i32 = arith.constant 0 : i32
    %c0_i32_0 = arith.constant 0 : i32
    return %arg1, %c0_i32 : i32, i32
  }
  func.func @transform_5(%arg0: i32, %arg1: i32) -> (i32, i32) {
    %c0_i32 = arith.constant 0 : i32
    %c0_i32_0 = arith.constant 0 : i32
    %c0_i32_1 = arith.constant 0 : i32
    return %c0_i32, %c0_i32_0 : i32, i32
  }
  func.func @transform_6(%arg0: i32, %arg1: i32) -> (i32, i32) {
    %c0_i32 = arith.constant 0 : i32
    %c0_i32_0 = arith.constant 0 : i32
    %c0_i32_1 = arith.constant 0 : i32
    return %c0_i32, %c0_i32_0 : i32, i32
  }
  func.func @transform_7(%arg0: i32, %arg1: i32) -> (i32, i32) {
    %c0_i32 = arith.constant 0 : i32
    %c0_i32_0 = arith.constant 0 : i32
    %c0_i32_1 = arith.constant 0 : i32
    return %c0_i32, %c0_i32_0 : i32, i32
  }
  func.func @transform_8(%arg0: i32, %arg1: i32) -> (i32, i32) {
    %c0_i32 = arith.constant 0 : i32
    %c0_i32_0 = arith.constant 0 : i32
    %c0_i32_1 = arith.constant 0 : i32
    return %c0_i32, %c0_i32_0 : i32, i32
  }
  func.func @transform_9(%arg0: i32, %arg1: i32) -> (i32, i32, i32) {
    %c0_i32 = arith.constant 0 : i32
    %c0_i32_0 = arith.constant 0 : i32
    return %arg0, %arg1, %c0_i32 : i32, i32, i32
  }
}

</mosaic_0001>

<llo_original>
// kernel: conv_backend_forward.10
$region0: #{conv_backend_forward.10}
  #allocation0 [shape = 'u32[]', space=smem, size = 0x4, offset = 0x4, fixed_abs, tag = 'smem constant byte address 0x4 - core index']
  #allocation1 [shape = 'u32[144,128]{1,0:T(1,128)}', space=vmem, size = 0x12000, scoped, tag = 'internal scratch']
  #allocation2 [shape = 'f32[2]{0:T(128)}', space=smem, size = 0x200, scoped, tag = 'scratch operand']
  %s0 = inlined_call_operand.vmem [shape: bf16[2,256,64], index: 0, kind: input, shape index: {}]
  %s1 = inlined_call_operand.vmem [shape: f32[256,64], index: 1, kind: input, shape index: {}]
  %s2 = inlined_call_operand.vmem [shape: f32[2,1,128], index: 2, kind: output, shape index: {}]
  %s3 = sld [smem:[#allocation0]]
  $region49: #{conv_backend_forward.10} parent=0
    _
  %s5 = ssub.s32 1, %s3
  %s6 = scalar_select 0, %s5, %s3
  loop: start=0, step=1, limit=6
  $region2: #{conv_backend_forward.10} parent=0 // loop_pre_header
    _
  $region3: #{conv_backend_forward.10} parent=0 // loop_header
    %s8 = sphi 0, %s12
    %p9 = scmp.ge.s32.totalorder %s8, 6
    %s15 = sphi 0, %s27
    %s16 = sphi 0, %s23
    %s17 = sphi 0, %s15
    %s18 = sphi 0, %s16
    %s19 = sphi 0, %s17
    %s20 = sphi 0, %s18
    %s32 = sphi 0, %s34
    %s35 = sphi 0, %s32
    %s36 = sphi 0, %s35
    %s52 = sphi 0, %s36
    %s58 = sphi 0, %s60
    %s61 = sphi 0, %s58
    %s62 = sphi 0, %s61
    %s78 = sphi 0, %s62
    %s84 = sphi 0, %s86
    %s87 = sphi 0, %s84
    %s88 = sphi 0, %s87
    %s104 = sphi 0, %s88
  $region4: #{conv_backend_forward.10} parent=0 // loop_header_branch
    %11 = sbr.rel (%p9) target = $region8
  $region5: #{conv_backend_forward.10} parent=0 // loop_body
    %s13 = ssub.s32 %s8, 1
    %s14 = ssub.s32 %s8, 2
    %s21 = sadd.s32 1, %s16
    %p22 = scmp.ge.s32.totalorder %s21, 2
    %s23 = scalar_select %p22, 0, %s21
    %s24 = sadd.s32 1, %s15
    %s25 = scalar_select %p22, %s24, %s15
    %p26 = scmp.ge.s32.totalorder %s25, 2
    %s27 = scalar_select %p26, 0, %s25
    %s28 = ssub.s32 %s15, %s27
    %s29 = ssub.s32 %s16, %s23
    %s30 = sor.u32 %s28, %s29
    %p31 = scmp.eq.s32.totalorder %s30, 0
    %s33 = sadd.s32 %s32, 1
    %s34 = scalar_select %p31, %s32, %s33
    %p37 = pneg %p31
    %p38 = scmp.eq.s32.totalorder %s8, 3
    %p39 = por %p37, %p38
    %p40 = scmp.ne.s32.totalorder %s32, %s35
    %p41 = scmp.eq.s32.totalorder %s8, 0
    %p42 = por %p40, %p41
    %p43 = scmp.ne.s32.totalorder %s32, %s35
    %p44 = scmp.eq.s32.totalorder %s13, 3
    %p45 = por %p43, %p44
    %p46 = scmp.ne.s32.totalorder %s35, %s36
    %p47 = scmp.eq.s32.totalorder %s13, 0
    %p48 = por %p46, %p47
    %p49 = scmp.ne.s32.totalorder %s35, %s36
    %p50 = scmp.eq.s32.totalorder %s14, 3
    %p51 = por %p49, %p50
    %p53 = scmp.ne.s32.totalorder %s36, %s52
    %p54 = scmp.eq.s32.totalorder %s14, 0
    %p55 = por %p53, %p54
    %s56 = ssub.s32 %s16, %s23
    %p57 = scmp.eq.s32.totalorder %s56, 0
    %s59 = sadd.s32 %s58, 1
    %s60 = scalar_select %p57, %s58, %s59
    %p63 = pneg %p57
    %p64 = scmp.eq.s32.totalorder %s8, 3
    %p65 = por %p63, %p64
    %p66 = scmp.ne.s32.totalorder %s58, %s61
    %p67 = scmp.eq.s32.totalorder %s8, 0
    %p68 = por %p66, %p67
    %p69 = scmp.ne.s32.totalorder %s58, %s61
    %p70 = scmp.eq.s32.totalorder %s13, 3
    %p71 = por %p69, %p70
    %p72 = scmp.ne.s32.totalorder %s61, %s62
    %p73 = scmp.eq.s32.totalorder %s13, 0
    %p74 = por %p72, %p73
    %p75 = scmp.ne.s32.totalorder %s61, %s62
    %p76 = scmp.eq.s32.totalorder %s14, 3
    %p77 = por %p75, %p76
    %p79 = scmp.ne.s32.totalorder %s62, %s78
    %p80 = scmp.eq.s32.totalorder %s14, 0
    %p81 = por %p79, %p80
    %s82 = ssub.s32 %s15, %s27
    %p83 = scmp.eq.s32.totalorder %s82, 0
    %s85 = sadd.s32 %s84, 1
    %s86 = scalar_select %p83, %s84, %s85
    %p89 = pneg %p83
    %p90 = scmp.eq.s32.totalorder %s8, 3
    %p91 = por %p89, %p90
    %p92 = scmp.ne.s32.totalorder %s84, %s87
    %p93 = scmp.eq.s32.totalorder %s8, 0
    %p94 = por %p92, %p93
    %p95 = scmp.ne.s32.totalorder %s84, %s87
    %p96 = scmp.eq.s32.totalorder %s13, 3
    %p97 = por %p95, %p96
    %p98 = scmp.ne.s32.totalorder %s87, %s88
    %p99 = scmp.eq.s32.totalorder %s13, 0
    %p100 = por %p98, %p99
    %p101 = scmp.ne.s32.totalorder %s87, %s88
    %p102 = scmp.eq.s32.totalorder %s14, 3
    %p103 = por %p101, %p102
    %p105 = scmp.ne.s32.totalorder %s88, %s104
    %p106 = scmp.eq.s32.totalorder %s14, 0
    %p107 = por %p105, %p106
    %p108 = scmp.le.s32.totalorder 1, %s8
    %p109 = scmp.lt.s32.totalorder %s8, 5
    %p110 = pnand %p108, %p109
    %p111 = pneg %p110
    // Predicated region
    $region9: #{conv_backend_forward.10} parent=5 // pred_check
      _
    $region10: #{conv_backend_forward.10} parent=5 // pred_check_branch
      %113 = sbr.rel (%p110) target = $region12
    $region11: #{conv_backend_forward.10} parent=5 // pred_region
      %s114 = ssub.s32 %s8, 1
    $region12: #{conv_backend_forward.10} parent=5 // pred_fallthru
      _
    %p115 = scmp.lt.s32.totalorder %s8, 4
    // Predicated region
    $region13: #{conv_backend_forward.10} parent=5 // pred_check
      %p116 = pneg %p115
    $region14: #{conv_backend_forward.10} parent=5 // pred_check_branch
      %118 = sbr.rel (%p116) target = $region16
    $region15: #{conv_backend_forward.10} parent=5 // pred_region
      // Predicated region
      $region17: #{conv_backend_forward.10} parent=15 // pred_check
        %p119 = pneg %p42
      $region18: #{conv_backend_forward.10} parent=15 // pred_check_branch
        %121 = sbr.rel (%p119) target = $region20
      $region19: #{conv_backend_forward.10} parent=15 // pred_region
        %s122 = smul.u32 16, %s16
        %p123 = scmp.lt.s32.totalorder %s15, 1
        %s124 = scalar_select %p123, %s15, 1
        %p125 = scmp.lt.s32.totalorder %s122, 31
        %s126 = scalar_select %p125, %s122, 31
        %s127 = smul.addr %s124, 32
        %s128 = sadd.s32 %s126, %s127
        %s129 = smul.addr %s128, 4
        %s130 = scalar_lea.vmem %s0, %s129
        %s131 = smul.u32 16, %s16
      $region20: #{conv_backend_forward.10} parent=15 // pred_fallthru
        _
      // Predicated region
      $region21: #{conv_backend_forward.10} parent=15 // pred_check
        %p132 = pneg %p68
      $region22: #{conv_backend_forward.10} parent=15 // pred_check_branch
        %134 = sbr.rel (%p132) target = $region24
      $region23: #{conv_backend_forward.10} parent=15 // pred_region
        %s135 = smul.u32 16, %s16
        %p136 = scmp.lt.s32.totalorder %s135, 31
        %s137 = scalar_select %p136, %s135, 31
        %s138 = smul.addr %s137, 8
        %s139 = scalar_lea.vmem %s1, %s138
        %s140 = smul.u32 16, %s16
      $region24: #{conv_backend_forward.10} parent=15 // pred_fallthru
        _
    $region16: #{conv_backend_forward.10} parent=5 // pred_fallthru
      _
    %p141 = scmp.le.s32.totalorder 1, %s8
    %p142 = scmp.lt.s32.totalorder %s8, 5
    %p143 = pnand %p141, %p142
    %p144 = pneg %p143
    // Predicated region
    $region25: #{conv_backend_forward.10} parent=5 // pred_check
      _
    $region26: #{conv_backend_forward.10} parent=5 // pred_check_branch
      %146 = sbr.rel (%p143) target = $region28
    $region27: #{conv_backend_forward.10} parent=5 // pred_region
      %s147 = ssub.s32 %s8, 1
      %s148 = smul.u32 16, %s18
      %p149 = scmp.lt.s32.totalorder %s17, 1
      %s150 = scalar_select %p149, %s17, 1
      %p151 = scmp.lt.s32.totalorder %s148, 31
      %s152 = scalar_select %p151, %s148, 31
      %s153 = smul.addr %s150, 32
      %s154 = sadd.s32 %s152, %s153
      %s155 = smul.addr %s154, 4
      %s156 = scalar_lea.vmem %s0, %s155
      %p157 = pneg %p48
      %p158 = pneg %p45
      %s159 = smul.u32 16, %s18
      %p160 = scmp.lt.s32.totalorder %s159, 31
      %s161 = scalar_select %p160, %s159, 31
      %s162 = smul.addr %s161, 8
      %s163 = scalar_lea.vmem %s1, %s162
      %p164 = pneg %p74
      %p165 = pneg %p71
      %p166 = pneg %p100
      %p167 = pneg %p97
      %p168 = scmp.lt.s32.totalorder %s17, 1
      %s169 = scalar_select %p168, %s17, 1
      %s170 = scalar_lea.vmem %s2, %s169
      %s171 = smul.u32 16, %s18
      %p172 = scmp.lt.s32.totalorder %s17, 1
      %s173 = scalar_select %p172, %s17, 1
      %p174 = scmp.lt.s32.totalorder %s171, 31
      %s175 = scalar_select %p174, %s171, 31
      %s176 = smul.addr %s173, 32
      %s177 = sadd.s32 %s175, %s176
      %s178 = smul.addr %s177, 4
      %s179 = scalar_lea.vmem %s0, %s178
      %s180 = smul.u32 16, %s18
      %s181 = smul.u32 16, %s18
      %p182 = scmp.lt.s32.totalorder %s181, 31
      %s183 = scalar_select %p182, %s181, 31
      %s184 = smul.addr %s183, 8
      %s185 = scalar_lea.vmem %s1, %s184
      %s186 = smul.u32 16, %s18
      %p187 = scmp.lt.s32.totalorder %s17, 1
      %s188 = scalar_select %p187, %s17, 1
      %s189 = scalar_lea.vmem %s2, %s188
      %p190 = scmp.eq.s32.totalorder %s18, 0
      // Predicated region
      $region29: #{conv_backend_forward.10} parent=27 // pred_check
        %p191 = pneg %p190
      $region30: #{conv_backend_forward.10} parent=27 // pred_check_branch
        %193 = sbr.rel (%p191) target = $region32
      $region31: #{conv_backend_forward.10} parent=27 // pred_region
        %s194 = scalar_lea.smem [#allocation2], 0
        %195 = sst [smem:[%s194]] 0.0
        %s196 = scalar_lea.smem [#allocation2], 1
        %197 = sst [smem:[%s196]] 0.0
      $region32: #{conv_backend_forward.10} parent=27 // pred_fallthru
        _
      %v198 = vld [vmem:[%s179] sm:$0xf]
      %v199 = vld [vmem:[%s179 + $0x4] sm:$0xf]
      %v200 = vld [vmem:[%s179 + $0x8] sm:$0xf]
      %v201 = vld [vmem:[%s179 + $0xc] sm:$0xf]
      %v202 = vld [vmem:[%s179 + $0x10] sm:$0xf]
      %v203 = vld [vmem:[%s179 + $0x14] sm:$0xf]
      %v204 = vld [vmem:[%s179 + $0x18] sm:$0xf]
      %v205 = vld [vmem:[%s179 + $0x1c] sm:$0xf]
      %v206 = vld [vmem:[%s179 + $0x20] sm:$0xf]
      %v207 = vld [vmem:[%s179 + $0x24] sm:$0xf]
      %v208 = vld [vmem:[%s179 + $0x28] sm:$0xf]
      %v209 = vld [vmem:[%s179 + $0x2c] sm:$0xf]
      %v210 = vld [vmem:[%s179 + $0x30] sm:$0xf]
      %v211 = vld [vmem:[%s179 + $0x34] sm:$0xf]
      %v212 = vld [vmem:[%s179 + $0x38] sm:$0xf]
      %v213 = vld [vmem:[%s179 + $0x3c] sm:$0xf]
      %v214 = vunpack.c.l.bf16 %v198
      %v215 = vunpack.c.l.bf16 %v199
      %v216 = vunpack.c.l.bf16 %v200
      %v217 = vunpack.c.l.bf16 %v201
      %v218 = vunpack.c.l.bf16 %v202
      %v219 = vunpack.c.l.bf16 %v203
      %v220 = vunpack.c.l.bf16 %v204
      %v221 = vunpack.c.l.bf16 %v205
      %v222 = vunpack.c.l.bf16 %v206
      %v223 = vunpack.c.l.bf16 %v207
      %v224 = vunpack.c.l.bf16 %v208
      %v225 = vunpack.c.l.bf16 %v209
      %v226 = vunpack.c.l.bf16 %v210
      %v227 = vunpack.c.l.bf16 %v211
      %v228 = vunpack.c.l.bf16 %v212
      %v229 = vunpack.c.l.bf16 %v213
      %v230 = vld [vmem:[%s185] sm:$0xff]
      %v231 = vld [vmem:[%s185 + $0x8] sm:$0xff]
      %v232 = vld [vmem:[%s185 + $0x10] sm:$0xff]
      %v233 = vld [vmem:[%s185 + $0x18] sm:$0xff]
      %v234 = vld [vmem:[%s185 + $0x20] sm:$0xff]
      %v235 = vld [vmem:[%s185 + $0x28] sm:$0xff]
      %v236 = vld [vmem:[%s185 + $0x30] sm:$0xff]
      %v237 = vld [vmem:[%s185 + $0x38] sm:$0xff]
      %v238 = vld [vmem:[%s185 + $0x40] sm:$0xff]
      %v239 = vld [vmem:[%s185 + $0x48] sm:$0xff]
      %v240 = vld [vmem:[%s185 + $0x50] sm:$0xff]
      %v241 = vld [vmem:[%s185 + $0x58] sm:$0xff]
      %v242 = vld [vmem:[%s185 + $0x60] sm:$0xff]
      %v243 = vld [vmem:[%s185 + $0x68] sm:$0xff]
      %v244 = vld [vmem:[%s185 + $0x70] sm:$0xff]
      %v245 = vld [vmem:[%s185 + $0x78] sm:$0xff]
      %v246 = vadd.f32 %v214, %v230
      %v247 = vadd.f32 %v215, %v231
      %v248 = vadd.f32 %v216, %v232
      %v249 = vadd.f32 %v217, %v233
      %v250 = vadd.f32 %v218, %v234
      %v251 = vadd.f32 %v219, %v235
      %v252 = vadd.f32 %v220, %v236
      %v253 = vadd.f32 %v221, %v237
      %v254 = vadd.f32 %v222, %v238
      %v255 = vadd.f32 %v223, %v239
      %v256 = vadd.f32 %v224, %v240
      %v257 = vadd.f32 %v225, %v241
      %v258 = vadd.f32 %v226, %v242
      %v259 = vadd.f32 %v227, %v243
      %v260 = vadd.f32 %v228, %v244
      %v261 = vadd.f32 %v229, %v245
      %s262 = sld [smem:[#allocation2]]
      %vm263 = vcmask 523264
      %v264 = vsel %vm263, %v246, 0.0
      %v265 = vsel %vm263, %v247, 0.0
      %v266 = vadd.f32 %v264, %v265
      %v267 = vsel %vm263, %v248, 0.0
      %v268 = vadd.f32 %v266, %v267
      %v269 = vsel %vm263, %v249, 0.0
      %v270 = vadd.f32 %v268, %v269
      %v271 = vsel %vm263, %v250, 0.0
      %v272 = vadd.f32 %v270, %v271
      %v273 = vsel %vm263, %v251, 0.0
      %v274 = vadd.f32 %v272, %v273
      %v275 = vsel %vm263, %v252, 0.0
      %v276 = vadd.f32 %v274, %v275
      %v277 = vsel %vm263, %v253, 0.0
      %v278 = vadd.f32 %v276, %v277
      %v279 = vsel %vm263, %v254, 0.0
      %v280 = vadd.f32 %v278, %v279
      %v281 = vsel %vm263, %v255, 0.0
      %v282 = vadd.f32 %v280, %v281
      %v283 = vsel %vm263, %v256, 0.0
      %v284 = vadd.f32 %v282, %v283
      %v285 = vsel %vm263, %v257, 0.0
      %v286 = vadd.f32 %v284, %v285
      %v287 = vsel %vm263, %v258, 0.0
      %v288 = vadd.f32 %v286, %v287
      %v289 = vsel %vm263, %v259, 0.0
      %v290 = vadd.f32 %v288, %v289
      %v291 = vsel %vm263, %v260, 0.0
      %v292 = vadd.f32 %v290, %v291
      %v293 = vsel %vm263, %v261, 0.0
      %v294 = vadd.f32 %v292, %v293
      %295 = vadd.xlane.f32.xlu0 %v294
      %v296 = vpop.xlane.xlu0 %295
      %v297 = vrot.slane %v296, 4
      %v298 = vadd.f32 %v296, %v297
      %v299 = vrot.slane %v298, 2
      %v300 = vadd.f32 %v298, %v299
      %v301 = vrot.slane %v300, 1
      %v302 = vadd.f32 %v300, %v301
      %s303 = vtos %v302
      %s304 = sadd.f32 %s262, %s303
      %s305 = scalar_lea.smem [#allocation2], 0
      %306 = sst [smem:[%s305]] %s304
      %s307 = sld [smem:[#allocation2 + $0x1]]
      %v308 = vmul.f32 %v246, %v246
      %v309 = vmul.f32 %v247, %v247
      %v310 = vmul.f32 %v248, %v248
      %v311 = vmul.f32 %v249, %v249
      %v312 = vmul.f32 %v250, %v250
      %v313 = vmul.f32 %v251, %v251
      %v314 = vmul.f32 %v252, %v252
      %v315 = vmul.f32 %v253, %v253
      %v316 = vmul.f32 %v254, %v254
      %v317 = vmul.f32 %v255, %v255
      %v318 = vmul.f32 %v256, %v256
      %v319 = vmul.f32 %v257, %v257
      %v320 = vmul.f32 %v258, %v258
      %v321 = vmul.f32 %v259, %v259
      %v322 = vmul.f32 %v260, %v260
      %v323 = vmul.f32 %v261, %v261
      %v324 = vsel %vm263, %v308, 0.0
      %v325 = vsel %vm263, %v309, 0.0
      %v326 = vadd.f32 %v324, %v325
      %v327 = vsel %vm263, %v310, 0.0
      %v328 = vadd.f32 %v326, %v327
      %v329 = vsel %vm263, %v311, 0.0
      %v330 = vadd.f32 %v328, %v329
      %v331 = vsel %vm263, %v312, 0.0
      %v332 = vadd.f32 %v330, %v331
      %v333 = vsel %vm263, %v313, 0.0
      %v334 = vadd.f32 %v332, %v333
      %v335 = vsel %vm263, %v314, 0.0
      %v336 = vadd.f32 %v334, %v335
      %v337 = vsel %vm263, %v315, 0.0
      %v338 = vadd.f32 %v336, %v337
      %v339 = vsel %vm263, %v316, 0.0
      %v340 = vadd.f32 %v338, %v339
      %v341 = vsel %vm263, %v317, 0.0
      %v342 = vadd.f32 %v340, %v341
      %v343 = vsel %vm263, %v318, 0.0
      %v344 = vadd.f32 %v342, %v343
      %v345 = vsel %vm263, %v319, 0.0
      %v346 = vadd.f32 %v344, %v345
      %v347 = vsel %vm263, %v320, 0.0
      %v348 = vadd.f32 %v346, %v347
      %v349 = vsel %vm263, %v321, 0.0
      %v350 = vadd.f32 %v348, %v349
      %v351 = vsel %vm263, %v322, 0.0
      %v352 = vadd.f32 %v350, %v351
      %v353 = vsel %vm263, %v323, 0.0
      %v354 = vadd.f32 %v352, %v353
      %355 = vadd.xlane.f32.xlu0 %v354
      %v356 = vpop.xlane.xlu0 %355
      %v357 = vrot.slane %v356, 4
      %v358 = vadd.f32 %v356, %v357
      %v359 = vrot.slane %v358, 2
      %v360 = vadd.f32 %v358, %v359
      %v361 = vrot.slane %v360, 1
      %v362 = vadd.f32 %v360, %v361
      %s363 = vtos %v362
      %s364 = sadd.f32 %s307, %s363
      %s365 = scalar_lea.smem [#allocation2], 1
      %366 = sst [smem:[%s365]] %s364
      %p367 = scmp.eq.s32.totalorder %s18, 1
      // Predicated region
      $region33: #{conv_backend_forward.10} parent=27 // pred_check
        %p368 = pneg %p367
      $region34: #{conv_backend_forward.10} parent=27 // pred_check_branch
        %370 = sbr.rel (%p368) target = $region36
      $region35: #{conv_backend_forward.10} parent=27 // pred_region
        %s371 = sld [smem:[#allocation2]]
        %s372 = smul.f32 %s371, 6.1035156e-05
        %s373 = sld [smem:[#allocation2 + $0x1]]
        %s374 = smul.f32 %s373, 6.1035156e-05
        %s375 = smul.f32 %s372, %s372
        %s376 = ssub.f32 %s374, %s375
        %s377 = sadd.f32 %s376, 1e-05
        %v378 = vstv %s377
        %v379 = vrsqrt.pop %v378
        %s380 = vtos %v379
        %v381 = vlaneseq
        %v382 = vand.u32 %v381, 127
        %vm383 = vcmp.eq.s32.totalorder %v382, 0
        %vm384 = vcmp.eq.s32.totalorder %v382, 1
        %v385 = vstv %s380
        %v386 = vsel %vm384, %v385, 0.0
        %v387 = vstv %s372
        %v388 = vsel %vm383, %v387, %v386
        %389 = vst [vmem:[%s189] sm:$0x1] %v388
      $region36: #{conv_backend_forward.10} parent=27 // pred_fallthru
        _
      %p390 = scmp.lt.s32.totalorder %s17, 1
      %s391 = scalar_select %p390, %s17, 1
      %s392 = scalar_lea.vmem %s2, %s391
      // Predicated region
      $region37: #{conv_backend_forward.10} parent=27 // pred_check
        %p393 = pneg %p97
      $region38: #{conv_backend_forward.10} parent=27 // pred_check_branch
        %395 = sbr.rel (%p393) target = $region40
      $region39: #{conv_backend_forward.10} parent=27 // pred_region
        _
      $region40: #{conv_backend_forward.10} parent=27 // pred_fallthru
        _
    $region28: #{conv_backend_forward.10} parent=5 // pred_fallthru
      _
    %p396 = scmp.le.s32.totalorder 2, %s8
    // Predicated region
    $region41: #{conv_backend_forward.10} parent=5 // pred_check
      %p397 = pneg %p396
    $region42: #{conv_backend_forward.10} parent=5 // pred_check_branch
      %399 = sbr.rel (%p397) target = $region44
    $region43: #{conv_backend_forward.10} parent=5 // pred_region
      %s400 = ssub.s32 %s8, 2
      // Predicated region
      $region45: #{conv_backend_forward.10} parent=43 // pred_check
        %p401 = pneg %p103
      $region46: #{conv_backend_forward.10} parent=43 // pred_check_branch
        %403 = sbr.rel (%p401) target = $region48
      $region47: #{conv_backend_forward.10} parent=43 // pred_region
        %p404 = scmp.lt.s32.totalorder %s19, 1
        %s405 = scalar_select %p404, %s19, 1
        %s406 = scalar_lea.vmem %s2, %s405
      $region48: #{conv_backend_forward.10} parent=43 // pred_fallthru
        _
    $region44: #{conv_backend_forward.10} parent=5 // pred_fallthru
      _
  $region6: #{conv_backend_forward.10} parent=0 // loop_footer
    %s12 = sadd.s32 1, %s8
  $region7: #{conv_backend_forward.10} parent=0 // loop_footer_branch
    %7 = sbr.rel target = $region3
  $region8: #{conv_backend_forward.10} parent=0 // loop_exit
    _

// kernel: conv_backend_forward.11
$region0: #{conv_backend_forward.11}
  #allocation0 [shape = 'u32[]', space=smem, size = 0x4, offset = 0x4, fixed_abs, tag = 'smem constant byte address 0x4 - core index']
  #allocation1 [shape = 'u32[144,128]{1,0:T(1,128)}', space=vmem, size = 0x12000, scoped, tag = 'internal scratch']
  %s0 = inlined_call_operand.vmem [shape: f32[2,1,128], index: 0, kind: input, shape index: {}]
  %s1 = inlined_call_operand.vmem [shape: bf16[2,256,64], index: 1, kind: input, shape index: {}]
  %s2 = inlined_call_operand.vmem [shape: f32[256,64], index: 2, kind: input, shape index: {}]
  %s3 = inlined_call_operand.vmem [shape: f32[256,64], index: 3, kind: input, shape index: {}]
  %s4 = inlined_call_operand.vmem [shape: f32[256,64], index: 4, kind: input, shape index: {}]
  %s5 = inlined_call_operand.vmem [shape: bf16[64,64], index: 5, kind: input, shape index: {}]
  %s6 = inlined_call_operand.vmem [shape: f32[1,64], index: 6, kind: input, shape index: {}]
  %s7 = inlined_call_operand.vmem [shape: bf16[64,64], index: 7, kind: input, shape index: {}]
  %s8 = inlined_call_operand.vmem [shape: f32[1,64], index: 8, kind: input, shape index: {}]
  %s9 = inlined_call_operand.vmem [shape: f32[2,256,64], index: 9, kind: output, shape index: {}]
  %s10 = sld [smem:[#allocation0]]
  $region69: #{conv_backend_forward.11} parent=0
    _
  %s12 = ssub.s32 1, %s10
  %s13 = scalar_select 0, %s12, %s10
  loop: start=0, step=1, limit=6
  $region2: #{conv_backend_forward.11} parent=0 // loop_pre_header
    _
  $region3: #{conv_backend_forward.11} parent=0 // loop_header
    %s15 = sphi 0, %s19
    %p16 = scmp.ge.s32.totalorder %s15, 6
    %s22 = sphi 0, %s34
    %s23 = sphi 0, %s30
    %s24 = sphi 0, %s22
    %s25 = sphi 0, %s23
    %s26 = sphi 0, %s24
    %s27 = sphi 0, %s25
    %s37 = sphi 0, %s39
    %s40 = sphi 0, %s37
    %s41 = sphi 0, %s40
    %s57 = sphi 0, %s41
    %s65 = sphi 0, %s67
    %s68 = sphi 0, %s65
    %s69 = sphi 0, %s68
    %s85 = sphi 0, %s69
    %s91 = sphi 0, %s93
    %s94 = sphi 0, %s91
    %s95 = sphi 0, %s94
    %s111 = sphi 0, %s95
    %s117 = sphi 0, %s119
    %s120 = sphi 0, %s117
    %s121 = sphi 0, %s120
    %s137 = sphi 0, %s121
    %s143 = sphi 0, %s145
    %s146 = sphi 0, %s143
    %s147 = sphi 0, %s146
    %s163 = sphi 0, %s147
    %s167 = sphi 0, %s167
    %s169 = sphi 0, %s167
    %s170 = sphi 0, %s169
    %s184 = sphi 0, %s170
    %s188 = sphi 0, %s188
    %s190 = sphi 0, %s188
    %s191 = sphi 0, %s190
    %s205 = sphi 0, %s191
    %s209 = sphi 0, %s209
    %s211 = sphi 0, %s209
    %s212 = sphi 0, %s211
    %s226 = sphi 0, %s212
    %s230 = sphi 0, %s230
    %s232 = sphi 0, %s230
    %s233 = sphi 0, %s232
    %s247 = sphi 0, %s233
    %s255 = sphi 0, %s257
    %s258 = sphi 0, %s255
    %s259 = sphi 0, %s258
    %s275 = sphi 0, %s259
  $region4: #{conv_backend_forward.11} parent=0 // loop_header_branch
    %18 = sbr.rel (%p16) target = $region8
  $region5: #{conv_backend_forward.11} parent=0 // loop_body
    %s20 = ssub.s32 %s15, 1
    %s21 = ssub.s32 %s15, 2
    %s28 = sadd.s32 1, %s23
    %p29 = scmp.ge.s32.totalorder %s28, 2
    %s30 = scalar_select %p29, 0, %s28
    %s31 = sadd.s32 1, %s22
    %s32 = scalar_select %p29, %s31, %s22
    %p33 = scmp.ge.s32.totalorder %s32, 2
    %s34 = scalar_select %p33, 0, %s32
    %s35 = ssub.s32 %s22, %s34
    %p36 = scmp.eq.s32.totalorder %s35, 0
    %s38 = sadd.s32 %s37, 1
    %s39 = scalar_select %p36, %s37, %s38
    %p42 = pneg %p36
    %p43 = scmp.eq.s32.totalorder %s15, 3
    %p44 = por %p42, %p43
    %p45 = scmp.ne.s32.totalorder %s37, %s40
    %p46 = scmp.eq.s32.totalorder %s15, 0
    %p47 = por %p45, %p46
    %p48 = scmp.ne.s32.totalorder %s37, %s40
    %p49 = scmp.eq.s32.totalorder %s20, 3
    %p50 = por %p48, %p49
    %p51 = scmp.ne.s32.totalorder %s40, %s41
    %p52 = scmp.eq.s32.totalorder %s20, 0
    %p53 = por %p51, %p52
    %p54 = scmp.ne.s32.totalorder %s40, %s41
    %p55 = scmp.eq.s32.totalorder %s21, 3
    %p56 = por %p54, %p55
    %p58 = scmp.ne.s32.totalorder %s41, %s57
    %p59 = scmp.eq.s32.totalorder %s21, 0
    %p60 = por %p58, %p59
    %s61 = ssub.s32 %s22, %s34
    %s62 = ssub.s32 %s23, %s30
    %s63 = sor.u32 %s61, %s62
    %p64 = scmp.eq.s32.totalorder %s63, 0
    %s66 = sadd.s32 %s65, 1
    %s67 = scalar_select %p64, %s65, %s66
    %p70 = pneg %p64
    %p71 = scmp.eq.s32.totalorder %s15, 3
    %p72 = por %p70, %p71
    %p73 = scmp.ne.s32.totalorder %s65, %s68
    %p74 = scmp.eq.s32.totalorder %s15, 0
    %p75 = por %p73, %p74
    %p76 = scmp.ne.s32.totalorder %s65, %s68
    %p77 = scmp.eq.s32.totalorder %s20, 3
    %p78 = por %p76, %p77
    %p79 = scmp.ne.s32.totalorder %s68, %s69
    %p80 = scmp.eq.s32.totalorder %s20, 0
    %p81 = por %p79, %p80
    %p82 = scmp.ne.s32.totalorder %s68, %s69
    %p83 = scmp.eq.s32.totalorder %s21, 3
    %p84 = por %p82, %p83
    %p86 = scmp.ne.s32.totalorder %s69, %s85
    %p87 = scmp.eq.s32.totalorder %s21, 0
    %p88 = por %p86, %p87
    %s89 = ssub.s32 %s23, %s30
    %p90 = scmp.eq.s32.totalorder %s89, 0
    %s92 = sadd.s32 %s91, 1
    %s93 = scalar_select %p90, %s91, %s92
    %p96 = pneg %p90
    %p97 = scmp.eq.s32.totalorder %s15, 3
    %p98 = por %p96, %p97
    %p99 = scmp.ne.s32.totalorder %s91, %s94
    %p100 = scmp.eq.s32.totalorder %s15, 0
    %p101 = por %p99, %p100
    %p102 = scmp.ne.s32.totalorder %s91, %s94
    %p103 = scmp.eq.s32.totalorder %s20, 3
    %p104 = por %p102, %p103
    %p105 = scmp.ne.s32.totalorder %s94, %s95
    %p106 = scmp.eq.s32.totalorder %s20, 0
    %p107 = por %p105, %p106
    %p108 = scmp.ne.s32.totalorder %s94, %s95
    %p109 = scmp.eq.s32.totalorder %s21, 3
    %p110 = por %p108, %p109
    %p112 = scmp.ne.s32.totalorder %s95, %s111
    %p113 = scmp.eq.s32.totalorder %s21, 0
    %p114 = por %p112, %p113
    %s115 = ssub.s32 %s23, %s30
    %p116 = scmp.eq.s32.totalorder %s115, 0
    %s118 = sadd.s32 %s117, 1
    %s119 = scalar_select %p116, %s117, %s118
    %p122 = pneg %p116
    %p123 = scmp.eq.s32.totalorder %s15, 3
    %p124 = por %p122, %p123
    %p125 = scmp.ne.s32.totalorder %s117, %s120
    %p126 = scmp.eq.s32.totalorder %s15, 0
    %p127 = por %p125, %p126
    %p128 = scmp.ne.s32.totalorder %s117, %s120
    %p129 = scmp.eq.s32.totalorder %s20, 3
    %p130 = por %p128, %p129
    %p131 = scmp.ne.s32.totalorder %s120, %s121
    %p132 = scmp.eq.s32.totalorder %s20, 0
    %p133 = por %p131, %p132
    %p134 = scmp.ne.s32.totalorder %s120, %s121
    %p135 = scmp.eq.s32.totalorder %s21, 3
    %p136 = por %p134, %p135
    %p138 = scmp.ne.s32.totalorder %s121, %s137
    %p139 = scmp.eq.s32.totalorder %s21, 0
    %p140 = por %p138, %p139
    %s141 = ssub.s32 %s23, %s30
    %p142 = scmp.eq.s32.totalorder %s141, 0
    %s144 = sadd.s32 %s143, 1
    %s145 = scalar_select %p142, %s143, %s144
    %p148 = pneg %p142
    %p149 = scmp.eq.s32.totalorder %s15, 3
    %p150 = por %p148, %p149
    %p151 = scmp.ne.s32.totalorder %s143, %s146
    %p152 = scmp.eq.s32.totalorder %s15, 0
    %p153 = por %p151, %p152
    %p154 = scmp.ne.s32.totalorder %s143, %s146
    %p155 = scmp.eq.s32.totalorder %s20, 3
    %p156 = por %p154, %p155
    %p157 = scmp.ne.s32.totalorder %s146, %s147
    %p158 = scmp.eq.s32.totalorder %s20, 0
    %p159 = por %p157, %p158
    %p160 = scmp.ne.s32.totalorder %s146, %s147
    %p161 = scmp.eq.s32.totalorder %s21, 3
    %p162 = por %p160, %p161
    %p164 = scmp.ne.s32.totalorder %s147, %s163
    %p165 = scmp.eq.s32.totalorder %s21, 0
    %p166 = por %p164, %p165
    %s168 = sadd.s32 %s167, 1
    %p171 = scmp.eq.s32.totalorder %s15, 3
    %p172 = scmp.ne.s32.totalorder %s167, %s169
    %p173 = scmp.eq.s32.totalorder %s15, 0
    %p174 = por %p172, %p173
    %p175 = scmp.ne.s32.totalorder %s167, %s169
    %p176 = scmp.eq.s32.totalorder %s20, 3
    %p177 = por %p175, %p176
    %p178 = scmp.ne.s32.totalorder %s169, %s170
    %p179 = scmp.eq.s32.totalorder %s20, 0
    %p180 = por %p178, %p179
    %p181 = scmp.ne.s32.totalorder %s169, %s170
    %p182 = scmp.eq.s32.totalorder %s21, 3
    %p183 = por %p181, %p182
    %p185 = scmp.ne.s32.totalorder %s170, %s184
    %p186 = scmp.eq.s32.totalorder %s21, 0
    %p187 = por %p185, %p186
    %s189 = sadd.s32 %s188, 1
    %p192 = scmp.eq.s32.totalorder %s15, 3
    %p193 = scmp.ne.s32.totalorder %s188, %s190
    %p194 = scmp.eq.s32.totalorder %s15, 0
    %p195 = por %p193, %p194
    %p196 = scmp.ne.s32.totalorder %s188, %s190
    %p197 = scmp.eq.s32.totalorder %s20, 3
    %p198 = por %p196, %p197
    %p199 = scmp.ne.s32.totalorder %s190, %s191
    %p200 = scmp.eq.s32.totalorder %s20, 0
    %p201 = por %p199, %p200
    %p202 = scmp.ne.s32.totalorder %s190, %s191
    %p203 = scmp.eq.s32.totalorder %s21, 3
    %p204 = por %p202, %p203
    %p206 = scmp.ne.s32.totalorder %s191, %s205
    %p207 = scmp.eq.s32.totalorder %s21, 0
    %p208 = por %p206, %p207
    %s210 = sadd.s32 %s209, 1
    %p213 = scmp.eq.s32.totalorder %s15, 3
    %p214 = scmp.ne.s32.totalorder %s209, %s211
    %p215 = scmp.eq.s32.totalorder %s15, 0
    %p216 = por %p214, %p215
    %p217 = scmp.ne.s32.totalorder %s209, %s211
    %p218 = scmp.eq.s32.totalorder %s20, 3
    %p219 = por %p217, %p218
    %p220 = scmp.ne.s32.totalorder %s211, %s212
    %p221 = scmp.eq.s32.totalorder %s20, 0
    %p222 = por %p220, %p221
    %p223 = scmp.ne.s32.totalorder %s211, %s212
    %p224 = scmp.eq.s32.totalorder %s21, 3
    %p225 = por %p223, %p224
    %p227 = scmp.ne.s32.totalorder %s212, %s226
    %p228 = scmp.eq.s32.totalorder %s21, 0
    %p229 = por %p227, %p228
    %s231 = sadd.s32 %s230, 1
    %p234 = scmp.eq.s32.totalorder %s15, 3
    %p235 = scmp.ne.s32.totalorder %s230, %s232
    %p236 = scmp.eq.s32.totalorder %s15, 0
    %p237 = por %p235, %p236
    %p238 = scmp.ne.s32.totalorder %s230, %s232
    %p239 = scmp.eq.s32.totalorder %s20, 3
    %p240 = por %p238, %p239
    %p241 = scmp.ne.s32.totalorder %s232, %s233
    %p242 = scmp.eq.s32.totalorder %s20, 0
    %p243 = por %p241, %p242
    %p244 = scmp.ne.s32.totalorder %s232, %s233
    %p245 = scmp.eq.s32.totalorder %s21, 3
    %p246 = por %p244, %p245
    %p248 = scmp.ne.s32.totalorder %s233, %s247
    %p249 = scmp.eq.s32.totalorder %s21, 0
    %p250 = por %p248, %p249
    %s251 = ssub.s32 %s22, %s34
    %s252 = ssub.s32 %s23, %s30
    %s253 = sor.u32 %s251, %s252
    %p254 = scmp.eq.s32.totalorder %s253, 0
    %s256 = sadd.s32 %s255, 1
    %s257 = scalar_select %p254, %s255, %s256
    %p260 = pneg %p254
    %p261 = scmp.eq.s32.totalorder %s15, 3
    %p262 = por %p260, %p261
    %p263 = scmp.ne.s32.totalorder %s255, %s258
    %p264 = scmp.eq.s32.totalorder %s15, 0
    %p265 = por %p263, %p264
    %p266 = scmp.ne.s32.totalorder %s255, %s258
    %p267 = scmp.eq.s32.totalorder %s20, 3
    %p268 = por %p266, %p267
    %p269 = scmp.ne.s32.totalorder %s258, %s259
    %p270 = scmp.eq.s32.totalorder %s20, 0
    %p271 = por %p269, %p270
    %p272 = scmp.ne.s32.totalorder %s258, %s259
    %p273 = scmp.eq.s32.totalorder %s21, 3
    %p274 = por %p272, %p273
    %p276 = scmp.ne.s32.totalorder %s259, %s275
    %p277 = scmp.eq.s32.totalorder %s21, 0
    %p278 = por %p276, %p277
    %p279 = scmp.le.s32.totalorder 1, %s15
    %p280 = scmp.lt.s32.totalorder %s15, 5
    %p281 = pnand %p279, %p280
    %p282 = pneg %p281
    // Predicated region
    $region9: #{conv_backend_forward.11} parent=5 // pred_check
      _
    $region10: #{conv_backend_forward.11} parent=5 // pred_check_branch
      %284 = sbr.rel (%p281) target = $region12
    $region11: #{conv_backend_forward.11} parent=5 // pred_region
      %s285 = ssub.s32 %s15, 1
      // Predicated region
      $region13: #{conv_backend_forward.11} parent=11 // pred_check
        %p286 = pneg %p180
      $region14: #{conv_backend_forward.11} parent=11 // pred_check_branch
        %288 = sbr.rel (%p286) target = $region16
      $region15: #{conv_backend_forward.11} parent=11 // pred_region
        _
      $region16: #{conv_backend_forward.11} parent=11 // pred_fallthru
        _
      // Predicated region
      $region17: #{conv_backend_forward.11} parent=11 // pred_check
        %p289 = pneg %p201
      $region18: #{conv_backend_forward.11} parent=11 // pred_check_branch
        %291 = sbr.rel (%p289) target = $region20
      $region19: #{conv_backend_forward.11} parent=11 // pred_region
        _
      $region20: #{conv_backend_forward.11} parent=11 // pred_fallthru
        _
      // Predicated region
      $region21: #{conv_backend_forward.11} parent=11 // pred_check
        %p292 = pneg %p222
      $region22: #{conv_backend_forward.11} parent=11 // pred_check_branch
        %294 = sbr.rel (%p292) target = $region24
      $region23: #{conv_backend_forward.11} parent=11 // pred_region
        _
      $region24: #{conv_backend_forward.11} parent=11 // pred_fallthru
        _
      // Predicated region
      $region25: #{conv_backend_forward.11} parent=11 // pred_check
        %p295 = pneg %p243
      $region26: #{conv_backend_forward.11} parent=11 // pred_check_branch
        %297 = sbr.rel (%p295) target = $region28
      $region27: #{conv_backend_forward.11} parent=11 // pred_region
        _
      $region28: #{conv_backend_forward.11} parent=11 // pred_fallthru
        _
    $region12: #{conv_backend_forward.11} parent=5 // pred_fallthru
      _
    %p298 = scmp.lt.s32.totalorder %s15, 4
    // Predicated region
    $region29: #{conv_backend_forward.11} parent=5 // pred_check
      %p299 = pneg %p298
    $region30: #{conv_backend_forward.11} parent=5 // pred_check_branch
      %301 = sbr.rel (%p299) target = $region32
    $region31: #{conv_backend_forward.11} parent=5 // pred_region
      // Predicated region
      $region33: #{conv_backend_forward.11} parent=31 // pred_check
        %p302 = pneg %p47
      $region34: #{conv_backend_forward.11} parent=31 // pred_check_branch
        %304 = sbr.rel (%p302) target = $region36
      $region35: #{conv_backend_forward.11} parent=31 // pred_region
        %p305 = scmp.lt.s32.totalorder %s22, 1
        %s306 = scalar_select %p305, %s22, 1
        %s307 = scalar_lea.vmem %s0, %s306
      $region36: #{conv_backend_forward.11} parent=31 // pred_fallthru
        _
      // Predicated region
      $region37: #{conv_backend_forward.11} parent=31 // pred_check
        %p308 = pneg %p75
      $region38: #{conv_backend_forward.11} parent=31 // pred_check_branch
        %310 = sbr.rel (%p308) target = $region40
      $region39: #{conv_backend_forward.11} parent=31 // pred_region
        %s311 = smul.u32 16, %s23
        %p312 = scmp.lt.s32.totalorder %s22, 1
        %s313 = scalar_select %p312, %s22, 1
        %p314 = scmp.lt.s32.totalorder %s311, 31
        %s315 = scalar_select %p314, %s311, 31
        %s316 = smul.addr %s313, 32
        %s317 = sadd.s32 %s315, %s316
        %s318 = smul.addr %s317, 4
        %s319 = scalar_lea.vmem %s1, %s318
        %s320 = smul.u32 16, %s23
      $region40: #{conv_backend_forward.11} parent=31 // pred_fallthru
        _
      // Predicated region
      $region41: #{conv_backend_forward.11} parent=31 // pred_check
        %p321 = pneg %p101
      $region42: #{conv_backend_forward.11} parent=31 // pred_check_branch
        %323 = sbr.rel (%p321) target = $region44
      $region43: #{conv_backend_forward.11} parent=31 // pred_region
        %s324 = smul.u32 16, %s23
        %p325 = scmp.lt.s32.totalorder %s324, 31
        %s326 = scalar_select %p325, %s324, 31
        %s327 = smul.addr %s326, 8
        %s328 = scalar_lea.vmem %s2, %s327
        %s329 = smul.u32 16, %s23
      $region44: #{conv_backend_forward.11} parent=31 // pred_fallthru
        _
      // Predicated region
      $region45: #{conv_backend_forward.11} parent=31 // pred_check
        %p330 = pneg %p127
      $region46: #{conv_backend_forward.11} parent=31 // pred_check_branch
        %332 = sbr.rel (%p330) target = $region48
      $region47: #{conv_backend_forward.11} parent=31 // pred_region
        %s333 = smul.u32 16, %s23
        %p334 = scmp.lt.s32.totalorder %s333, 31
        %s335 = scalar_select %p334, %s333, 31
        %s336 = smul.addr %s335, 8
        %s337 = scalar_lea.vmem %s3, %s336
        %s338 = smul.u32 16, %s23
      $region48: #{conv_backend_forward.11} parent=31 // pred_fallthru
        _
      // Predicated region
      $region49: #{conv_backend_forward.11} parent=31 // pred_check
        %p339 = pneg %p153
      $region50: #{conv_backend_forward.11} parent=31 // pred_check_branch
        %341 = sbr.rel (%p339) target = $region52
      $region51: #{conv_backend_forward.11} parent=31 // pred_region
        %s342 = smul.u32 16, %s23
        %p343 = scmp.lt.s32.totalorder %s342, 31
        %s344 = scalar_select %p343, %s342, 31
        %s345 = smul.addr %s344, 8
        %s346 = scalar_lea.vmem %s4, %s345
        %s347 = smul.u32 16, %s23
      $region52: #{conv_backend_forward.11} parent=31 // pred_fallthru
        _
    $region32: #{conv_backend_forward.11} parent=5 // pred_fallthru
      _
    %p348 = scmp.le.s32.totalorder 1, %s15
    %p349 = scmp.lt.s32.totalorder %s15, 5
    %p350 = pnand %p348, %p349
    %p351 = pneg %p350
    // Predicated region
    $region53: #{conv_backend_forward.11} parent=5 // pred_check
      _
    $region54: #{conv_backend_forward.11} parent=5 // pred_check_branch
      %353 = sbr.rel (%p350) target = $region56
    $region55: #{conv_backend_forward.11} parent=5 // pred_region
      %s354 = ssub.s32 %s15, 1
      %p355 = scmp.lt.s32.totalorder %s24, 1
      %s356 = scalar_select %p355, %s24, 1
      %s357 = scalar_lea.vmem %s0, %s356
      %p358 = pneg %p53
      %p359 = pneg %p50
      %s360 = smul.u32 16, %s25
      %p361 = scmp.lt.s32.totalorder %s24, 1
      %s362 = scalar_select %p361, %s24, 1
      %p363 = scmp.lt.s32.totalorder %s360, 31
      %s364 = scalar_select %p363, %s360, 31
      %s365 = smul.addr %s362, 32
      %s366 = sadd.s32 %s364, %s365
      %s367 = smul.addr %s366, 4
      %s368 = scalar_lea.vmem %s1, %s367
      %p369 = pneg %p81
      %p370 = pneg %p78
      %s371 = smul.u32 16, %s25
      %p372 = scmp.lt.s32.totalorder %s371, 31
      %s373 = scalar_select %p372, %s371, 31
      %s374 = smul.addr %s373, 8
      %s375 = scalar_lea.vmem %s2, %s374
      %p376 = pneg %p107
      %p377 = pneg %p104
      %s378 = smul.u32 16, %s25
      %p379 = scmp.lt.s32.totalorder %s378, 31
      %s380 = scalar_select %p379, %s378, 31
      %s381 = smul.addr %s380, 8
      %s382 = scalar_lea.vmem %s3, %s381
      %p383 = pneg %p133
      %p384 = pneg %p130
      %s385 = smul.u32 16, %s25
      %p386 = scmp.lt.s32.totalorder %s385, 31
      %s387 = scalar_select %p386, %s385, 31
      %s388 = smul.addr %s387, 8
      %s389 = scalar_lea.vmem %s4, %s388
      %p390 = pneg %p159
      %p391 = pneg %p156
      %p392 = pneg %p180
      %p393 = pneg %p177
      %p394 = pneg %p201
      %p395 = pneg %p198
      %p396 = pneg %p222
      %p397 = pneg %p219
      %p398 = pneg %p243
      %p399 = pneg %p240
      %p400 = pneg %p271
      %p401 = pneg %p268
      %s402 = smul.u32 16, %s25
      %p403 = scmp.lt.s32.totalorder %s24, 1
      %s404 = scalar_select %p403, %s24, 1
      %p405 = scmp.lt.s32.totalorder %s402, 31
      %s406 = scalar_select %p405, %s402, 31
      %s407 = smul.addr %s404, 32
      %s408 = sadd.s32 %s406, %s407
      %s409 = smul.addr %s408, 8
      %s410 = scalar_lea.vmem %s9, %s409
      %p411 = scmp.lt.s32.totalorder %s24, 1
      %s412 = scalar_select %p411, %s24, 1
      %s413 = scalar_lea.vmem %s0, %s412
      %s414 = smul.u32 16, %s25
      %p415 = scmp.lt.s32.totalorder %s24, 1
      %s416 = scalar_select %p415, %s24, 1
      %p417 = scmp.lt.s32.totalorder %s414, 31
      %s418 = scalar_select %p417, %s414, 31
      %s419 = smul.addr %s416, 32
      %s420 = sadd.s32 %s418, %s419
      %s421 = smul.addr %s420, 4
      %s422 = scalar_lea.vmem %s1, %s421
      %s423 = smul.u32 16, %s25
      %s424 = smul.u32 16, %s25
      %p425 = scmp.lt.s32.totalorder %s424, 31
      %s426 = scalar_select %p425, %s424, 31
      %s427 = smul.addr %s426, 8
      %s428 = scalar_lea.vmem %s2, %s427
      %s429 = smul.u32 16, %s25
      %s430 = smul.u32 16, %s25
      %p431 = scmp.lt.s32.totalorder %s430, 31
      %s432 = scalar_select %p431, %s430, 31
      %s433 = smul.addr %s432, 8
      %s434 = scalar_lea.vmem %s3, %s433
      %s435 = smul.u32 16, %s25
      %s436 = smul.u32 16, %s25
      %p437 = scmp.lt.s32.totalorder %s436, 31
      %s438 = scalar_select %p437, %s436, 31
      %s439 = smul.addr %s438, 8
      %s440 = scalar_lea.vmem %s4, %s439
      %s441 = smul.u32 16, %s25
      %s442 = smul.u32 16, %s25
      %p443 = scmp.lt.s32.totalorder %s24, 1
      %s444 = scalar_select %p443, %s24, 1
      %p445 = scmp.lt.s32.totalorder %s442, 31
      %s446 = scalar_select %p445, %s442, 31
      %s447 = smul.addr %s444, 32
      %s448 = sadd.s32 %s446, %s447
      %s449 = smul.addr %s448, 8
      %s450 = scalar_lea.vmem %s9, %s449
      %s451 = smul.u32 16, %s25
      %v453 = vld [vmem:[%s413] sm:$0x1]
      %v454 = vld [vmem:[%s422] sm:$0xf]
      %v455 = vld [vmem:[%s422 + $0x4] sm:$0xf]
      %v456 = vld [vmem:[%s422 + $0x8] sm:$0xf]
      %v457 = vld [vmem:[%s422 + $0xc] sm:$0xf]
      %v458 = vld [vmem:[%s422 + $0x10] sm:$0xf]
      %v459 = vld [vmem:[%s422 + $0x14] sm:$0xf]
      %v460 = vld [vmem:[%s422 + $0x18] sm:$0xf]
      %v461 = vld [vmem:[%s422 + $0x1c] sm:$0xf]
      %v462 = vld [vmem:[%s422 + $0x20] sm:$0xf]
      %v463 = vld [vmem:[%s422 + $0x24] sm:$0xf]
      %v464 = vld [vmem:[%s422 + $0x28] sm:$0xf]
      %v465 = vld [vmem:[%s422 + $0x2c] sm:$0xf]
      %v466 = vld [vmem:[%s422 + $0x30] sm:$0xf]
      %v467 = vld [vmem:[%s422 + $0x34] sm:$0xf]
      %v468 = vld [vmem:[%s422 + $0x38] sm:$0xf]
      %v469 = vld [vmem:[%s422 + $0x3c] sm:$0xf]
      %v470 = vunpack.c.l.bf16 %v454
      %v471 = vunpack.c.l.bf16 %v455
      %v472 = vunpack.c.l.bf16 %v456
      %v473 = vunpack.c.l.bf16 %v457
      %v474 = vunpack.c.l.bf16 %v458
      %v475 = vunpack.c.l.bf16 %v459
      %v476 = vunpack.c.l.bf16 %v460
      %v477 = vunpack.c.l.bf16 %v461
      %v478 = vunpack.c.l.bf16 %v462
      %v479 = vunpack.c.l.bf16 %v463
      %v480 = vunpack.c.l.bf16 %v464
      %v481 = vunpack.c.l.bf16 %v465
      %v482 = vunpack.c.l.bf16 %v466
      %v483 = vunpack.c.l.bf16 %v467
      %v484 = vunpack.c.l.bf16 %v468
      %v485 = vunpack.c.l.bf16 %v469
      %v486 = vld [vmem:[%s428] sm:$0xff]
      %v487 = vld [vmem:[%s428 + $0x8] sm:$0xff]
      %v488 = vld [vmem:[%s428 + $0x10] sm:$0xff]
      %v489 = vld [vmem:[%s428 + $0x18] sm:$0xff]
      %v490 = vld [vmem:[%s428 + $0x20] sm:$0xff]
      %v491 = vld [vmem:[%s428 + $0x28] sm:$0xff]
      %v492 = vld [vmem:[%s428 + $0x30] sm:$0xff]
      %v493 = vld [vmem:[%s428 + $0x38] sm:$0xff]
      %v494 = vld [vmem:[%s428 + $0x40] sm:$0xff]
      %v495 = vld [vmem:[%s428 + $0x48] sm:$0xff]
      %v496 = vld [vmem:[%s428 + $0x50] sm:$0xff]
      %v497 = vld [vmem:[%s428 + $0x58] sm:$0xff]
      %v498 = vld [vmem:[%s428 + $0x60] sm:$0xff]
      %v499 = vld [vmem:[%s428 + $0x68] sm:$0xff]
      %v500 = vld [vmem:[%s428 + $0x70] sm:$0xff]
      %v501 = vld [vmem:[%s428 + $0x78] sm:$0xff]
      %v502 = vadd.f32 %v470, %v486
      %v503 = vadd.f32 %v471, %v487
      %v504 = vadd.f32 %v472, %v488
      %v505 = vadd.f32 %v473, %v489
      %v506 = vadd.f32 %v474, %v490
      %v507 = vadd.f32 %v475, %v491
      %v508 = vadd.f32 %v476, %v492
      %v509 = vadd.f32 %v477, %v493
      %v510 = vadd.f32 %v478, %v494
      %v511 = vadd.f32 %v479, %v495
      %v512 = vadd.f32 %v480, %v496
      %v513 = vadd.f32 %v481, %v497
      %v514 = vadd.f32 %v482, %v498
      %v515 = vadd.f32 %v483, %v499
      %v516 = vadd.f32 %v484, %v500
      %v517 = vadd.f32 %v485, %v501
      %v519 = vlaneseq
      %v520 = vshrl.u32 %v519, 7
      %v521 = vsub.s32 0, %v520
      %v522 = vrot.slane %v453, %v521
      %523 = vset.pattern.permute.xlu0 0
      %524 = vperm.xlu0 %523, %v522
      %v525 = vpop.permute.xlu0 %524
      %v527 = vsub.f32 %v502, %v525
      %v528 = vsub.f32 %v503, %v525
      %v529 = vsub.f32 %v504, %v525
      %v530 = vsub.f32 %v505, %v525
      %v531 = vsub.f32 %v506, %v525
      %v532 = vsub.f32 %v507, %v525
      %v533 = vsub.f32 %v508, %v525
      %v534 = vsub.f32 %v509, %v525
      %v535 = vsub.f32 %v510, %v525
      %v536 = vsub.f32 %v511, %v525
      %v537 = vsub.f32 %v512, %v525
      %v538 = vsub.f32 %v513, %v525
      %v539 = vsub.f32 %v514, %v525
      %v540 = vsub.f32 %v515, %v525
      %v541 = vsub.f32 %v516, %v525
      %v542 = vsub.f32 %v517, %v525
      %543 = vset.pattern.permute.xlu0 1
      %544 = vperm.xlu0 %543, %v522
      %v545 = vpop.permute.xlu0 %544
      %v547 = vmul.f32 %v527, %v545
      %v548 = vmul.f32 %v528, %v545
      %v549 = vmul.f32 %v529, %v545
      %v550 = vmul.f32 %v530, %v545
      %v551 = vmul.f32 %v531, %v545
      %v552 = vmul.f32 %v532, %v545
      %v553 = vmul.f32 %v533, %v545
      %v554 = vmul.f32 %v534, %v545
      %v555 = vmul.f32 %v535, %v545
      %v556 = vmul.f32 %v536, %v545
      %v557 = vmul.f32 %v537, %v545
      %v558 = vmul.f32 %v538, %v545
      %v559 = vmul.f32 %v539, %v545
      %v560 = vmul.f32 %v540, %v545
      %v561 = vmul.f32 %v541, %v545
      %v562 = vmul.f32 %v542, %v545
      %v563 = vld [vmem:[%s434] sm:$0xff]
      %v564 = vld [vmem:[%s434 + $0x8] sm:$0xff]
      %v565 = vld [vmem:[%s434 + $0x10] sm:$0xff]
      %v566 = vld [vmem:[%s434 + $0x18] sm:$0xff]
      %v567 = vld [vmem:[%s434 + $0x20] sm:$0xff]
      %v568 = vld [vmem:[%s434 + $0x28] sm:$0xff]
      %v569 = vld [vmem:[%s434 + $0x30] sm:$0xff]
      %v570 = vld [vmem:[%s434 + $0x38] sm:$0xff]
      %v571 = vld [vmem:[%s434 + $0x40] sm:$0xff]
      %v572 = vld [vmem:[%s434 + $0x48] sm:$0xff]
      %v573 = vld [vmem:[%s434 + $0x50] sm:$0xff]
      %v574 = vld [vmem:[%s434 + $0x58] sm:$0xff]
      %v575 = vld [vmem:[%s434 + $0x60] sm:$0xff]
      %v576 = vld [vmem:[%s434 + $0x68] sm:$0xff]
      %v577 = vld [vmem:[%s434 + $0x70] sm:$0xff]
      %v578 = vld [vmem:[%s434 + $0x78] sm:$0xff]
      %v579 = vmul.f32 %v547, %v563
      %v580 = vmul.f32 %v548, %v564
      %v581 = vmul.f32 %v549, %v565
      %v582 = vmul.f32 %v550, %v566
      %v583 = vmul.f32 %v551, %v567
      %v584 = vmul.f32 %v552, %v568
      %v585 = vmul.f32 %v553, %v569
      %v586 = vmul.f32 %v554, %v570
      %v587 = vmul.f32 %v555, %v571
      %v588 = vmul.f32 %v556, %v572
      %v589 = vmul.f32 %v557, %v573
      %v590 = vmul.f32 %v558, %v574
      %v591 = vmul.f32 %v559, %v575
      %v592 = vmul.f32 %v560, %v576
      %v593 = vmul.f32 %v561, %v577
      %v594 = vmul.f32 %v562, %v578
      %v595 = vld [vmem:[%s440] sm:$0xff]
      %v596 = vld [vmem:[%s440 + $0x8] sm:$0xff]
      %v597 = vld [vmem:[%s440 + $0x10] sm:$0xff]
      %v598 = vld [vmem:[%s440 + $0x18] sm:$0xff]
      %v599 = vld [vmem:[%s440 + $0x20] sm:$0xff]
      %v600 = vld [vmem:[%s440 + $0x28] sm:$0xff]
      %v601 = vld [vmem:[%s440 + $0x30] sm:$0xff]
      %v602 = vld [vmem:[%s440 + $0x38] sm:$0xff]
      %v603 = vld [vmem:[%s440 + $0x40] sm:$0xff]
      %v604 = vld [vmem:[%s440 + $0x48] sm:$0xff]
      %v605 = vld [vmem:[%s440 + $0x50] sm:$0xff]
      %v606 = vld [vmem:[%s440 + $0x58] sm:$0xff]
      %v607 = vld [vmem:[%s440 + $0x60] sm:$0xff]
      %v608 = vld [vmem:[%s440 + $0x68] sm:$0xff]
      %v609 = vld [vmem:[%s440 + $0x70] sm:$0xff]
      %v610 = vld [vmem:[%s440 + $0x78] sm:$0xff]
      %v611 = vadd.f32 %v579, %v595
      %v612 = vadd.f32 %v580, %v596
      %v613 = vadd.f32 %v581, %v597
      %v614 = vadd.f32 %v582, %v598
      %v615 = vadd.f32 %v583, %v599
      %v616 = vadd.f32 %v584, %v600
      %v617 = vadd.f32 %v585, %v601
      %v618 = vadd.f32 %v586, %v602
      %v619 = vadd.f32 %v587, %v603
      %v620 = vadd.f32 %v588, %v604
      %v621 = vadd.f32 %v589, %v605
      %v622 = vadd.f32 %v590, %v606
      %v623 = vadd.f32 %v591, %v607
      %v624 = vadd.f32 %v592, %v608
      %v625 = vadd.f32 %v593, %v609
      %v626 = vadd.f32 %v594, %v610
      %v627 = vpack.c.bf16 %v612, %v611
      %v628 = vpack.c.bf16 %v614, %v613
      %v629 = vpack.c.bf16 %v616, %v615
      %v630 = vpack.c.bf16 %v618, %v617
      %v631 = vpack.c.bf16 %v620, %v619
      %v632 = vpack.c.bf16 %v622, %v621
      %v633 = vpack.c.bf16 %v624, %v623
      %v634 = vpack.c.bf16 %v626, %v625
      %v635 = vld [vmem:[%s5] sm:$0xf]
      %v636 = vld [vmem:[%s5 + $0x4] sm:$0xf]
      %v637 = vld [vmem:[%s5 + $0x8] sm:$0xf]
      %v638 = vld [vmem:[%s5 + $0xc] sm:$0xf]
      %v639 = vld [vmem:[%s5 + $0x10] sm:$0xf]
      %v640 = vld [vmem:[%s5 + $0x14] sm:$0xf]
      %v641 = vld [vmem:[%s5 + $0x18] sm:$0xf]
      %v642 = vld [vmem:[%s5 + $0x1c] sm:$0xf]
      %v643 = vld [vmem:[%s6] sm:$0x1]
      %v645 = vlaneseq
      %v646 = vshrl.u32 %v645, 7
      %v647 = vsub.s32 0, %v646
      %v648 = vrot.slane %v643, %v647
      %v658 = vunpack.c.l.b16 %v635
      %v659 = vunpack.c.l.b16 %v636
      %v660 = vunpack.c.l.b16 %v637
      %v661 = vunpack.c.l.b16 %v638
      %v662 = vunpack.c.l.b16 %v639
      %v663 = vunpack.c.l.b16 %v640
      %v664 = vunpack.c.l.b16 %v641
      %v665 = vunpack.c.l.b16 %v642
      %v666 = vpack.c.b16 %v659, %v658
      %v667 = vpack.c.b16 %v661, %v660
      %v668 = vpack.c.b16 %v663, %v662
      %v669 = vpack.c.b16 %v665, %v664
      %vm674 = vcmask 523264
      %v676 = vsel %vm674, %v627, 0
      %v679 = vsel %vm674, %v628, 0
      %v682 = vsel %vm674, %v629, 0
      %v685 = vsel %vm674, %v630, 0
      %v688 = vsel %vm674, %v631, 0
      %v691 = vsel %vm674, %v632, 0
      %v694 = vsel %vm674, %v633, 0
      %v697 = vsel %vm674, %v634, 0
      %699 = vmatprep.subr.bf16.mxu0 0
      %700 = vmatpush1.bf16.msra.mxu0 %v666
      %701 = vmatprep.subr.bf16.mxu0 0
      %702 = vmatpush1.bf16.msra.mxu0 %v667
      %703 = vmatprep.subr.bf16.mxu0 0
      %704 = vmatpush1.bf16.msra.mxu0 %v668
      %705 = vmatprep.subr.bf16.mxu0 0
      %706 = vmatpush1.bf16.msra.mxu0 %v669
      %707 = vmatprep.subr.bf16.mxu0 0
      %708 = vmatpush1.bf16.msra.mxu0 0
      %709 = vmatprep.subr.bf16.mxu0 0
      %710 = vmatpush1.bf16.msra.mxu0 0
      %711 = vmatprep.subr.bf16.mxu0 0
      %712 = vmatpush1.bf16.msra.mxu0 0
      %713 = vmatprep.subr.bf16.mxu0 0
      %714 = vmatpush1.bf16.msra.mxu0 0
      %715 = vmatprep.subr.bf16.mxu0 0
      %716 = vmatpush1.bf16.msra.mxu0 0
      %717 = vmatprep.subr.bf16.mxu0 0
      %718 = vmatpush1.bf16.msra.mxu0 0
      %719 = vmatprep.subr.bf16.mxu0 0
      %720 = vmatpush1.bf16.msra.mxu0 0
      %721 = vmatprep.subr.bf16.mxu0 0
      %722 = vmatpush1.bf16.msra.mxu0 0
      %723 = vmatprep.subr.bf16.mxu0 0
      %724 = vmatpush1.bf16.msra.mxu0 0
      %725 = vmatprep.subr.bf16.mxu0 0
      %726 = vmatpush1.bf16.msra.mxu0 0
      %727 = vmatprep.subr.bf16.mxu0 0
      %728 = vmatpush1.bf16.msra.mxu0 0
      %729 = vmatprep.subr.bf16.mxu0 0
      %730 = vmatpush1.bf16.msra.mxu0 0
      %731 = vmatprep.mubr.bf16.mxu0 0
      %732 = vmatmul.mubr.bf16.gmra.mrb[0].mxu0 %v676
      %v733 = vpop.f32.mrb[0].mxu0
      %v734 = vadd.f32 %v648, %v733
      %v735 = vpop.f32.mrb[0].mxu0
      %v736 = vpop.f32.mrb[0].mxu0
      %v737 = vadd.f32 %v648, %v736
      %v738 = vpop.f32.mrb[0].mxu0
      %739 = vmatprep.mubr.bf16.mxu0 0
      %740 = vmatmul.mubr.bf16.gmra.mrb[0].mxu0 %v679
      %v741 = vpop.f32.mrb[0].mxu0
      %v742 = vadd.f32 %v648, %v741
      %v743 = vpop.f32.mrb[0].mxu0
      %v744 = vpop.f32.mrb[0].mxu0
      %v745 = vadd.f32 %v648, %v744
      %v746 = vpop.f32.mrb[0].mxu0
      %747 = vmatprep.mubr.bf16.mxu0 0
      %748 = vmatmul.mubr.bf16.gmra.mrb[0].mxu0 %v682
      %v749 = vpop.f32.mrb[0].mxu0
      %v750 = vadd.f32 %v648, %v749
      %v751 = vpop.f32.mrb[0].mxu0
      %v752 = vpop.f32.mrb[0].mxu0
      %v753 = vadd.f32 %v648, %v752
      %v754 = vpop.f32.mrb[0].mxu0
      %755 = vmatprep.mubr.bf16.mxu0 0
      %756 = vmatmul.mubr.bf16.gmra.mrb[0].mxu0 %v685
      %v757 = vpop.f32.mrb[0].mxu0
      %v758 = vadd.f32 %v648, %v757
      %v759 = vpop.f32.mrb[0].mxu0
      %v760 = vpop.f32.mrb[0].mxu0
      %v761 = vadd.f32 %v648, %v760
      %v762 = vpop.f32.mrb[0].mxu0
      %763 = vmatprep.mubr.bf16.mxu0 0
      %764 = vmatmul.mubr.bf16.gmra.mrb[0].mxu0 %v688
      %v765 = vpop.f32.mrb[0].mxu0
      %v766 = vadd.f32 %v648, %v765
      %v767 = vpop.f32.mrb[0].mxu0
      %v768 = vpop.f32.mrb[0].mxu0
      %v769 = vadd.f32 %v648, %v768
      %v770 = vpop.f32.mrb[0].mxu0
      %771 = vmatprep.mubr.bf16.mxu0 0
      %772 = vmatmul.mubr.bf16.gmra.mrb[0].mxu0 %v691
      %v773 = vpop.f32.mrb[0].mxu0
      %v774 = vadd.f32 %v648, %v773
      %v775 = vpop.f32.mrb[0].mxu0
      %v776 = vpop.f32.mrb[0].mxu0
      %v777 = vadd.f32 %v648, %v776
      %v778 = vpop.f32.mrb[0].mxu0
      %779 = vmatprep.mubr.bf16.mxu0 0
      %780 = vmatmul.mubr.bf16.gmra.mrb[0].mxu0 %v694
      %v781 = vpop.f32.mrb[0].mxu0
      %v782 = vadd.f32 %v648, %v781
      %v783 = vpop.f32.mrb[0].mxu0
      %v784 = vpop.f32.mrb[0].mxu0
      %v785 = vadd.f32 %v648, %v784
      %v786 = vpop.f32.mrb[0].mxu0
      %787 = vmatprep.mubr.bf16.mxu0 0
      %788 = vmatmul.mubr.bf16.gmra.mrb[0].mxu0 %v697
      %v789 = vpop.f32.mrb[0].mxu0
      %v790 = vadd.f32 %v648, %v789
      %v791 = vpop.f32.mrb[0].mxu0
      %v792 = vpop.f32.mrb[0].mxu0
      %v793 = vadd.f32 %v648, %v792
      %v794 = vpop.f32.mrb[0].mxu0
      %795 = vdwg.mxu0
      %v796 = vmax.f32 %v734, 0.0
      %v797 = vmax.f32 %v737, 0.0
      %v798 = vmax.f32 %v742, 0.0
      %v799 = vmax.f32 %v745, 0.0
      %v800 = vmax.f32 %v750, 0.0
      %v801 = vmax.f32 %v753, 0.0
      %v802 = vmax.f32 %v758, 0.0
      %v803 = vmax.f32 %v761, 0.0
      %v804 = vmax.f32 %v766, 0.0
      %v805 = vmax.f32 %v769, 0.0
      %v806 = vmax.f32 %v774, 0.0
      %v807 = vmax.f32 %v777, 0.0
      %v808 = vmax.f32 %v782, 0.0
      %v809 = vmax.f32 %v785, 0.0
      %v810 = vmax.f32 %v790, 0.0
      %v811 = vmax.f32 %v793, 0.0
      %v812 = vpack.c.bf16 %v797, %v796
      %v813 = vpack.c.bf16 %v799, %v798
      %v814 = vpack.c.bf16 %v801, %v800
      %v815 = vpack.c.bf16 %v803, %v802
      %v816 = vpack.c.bf16 %v805, %v804
      %v817 = vpack.c.bf16 %v807, %v806
      %v818 = vpack.c.bf16 %v809, %v808
      %v819 = vpack.c.bf16 %v811, %v810
      %v820 = vld [vmem:[%s7] sm:$0xf]
      %v821 = vld [vmem:[%s7 + $0x4] sm:$0xf]
      %v822 = vld [vmem:[%s7 + $0x8] sm:$0xf]
      %v823 = vld [vmem:[%s7 + $0xc] sm:$0xf]
      %v824 = vld [vmem:[%s7 + $0x10] sm:$0xf]
      %v825 = vld [vmem:[%s7 + $0x14] sm:$0xf]
      %v826 = vld [vmem:[%s7 + $0x18] sm:$0xf]
      %v827 = vld [vmem:[%s7 + $0x1c] sm:$0xf]
      %v828 = vld [vmem:[%s8] sm:$0x1]
      %v830 = vlaneseq
      %v831 = vshrl.u32 %v830, 7
      %v832 = vsub.s32 0, %v831
      %v833 = vrot.slane %v828, %v832
      %v843 = vunpack.c.l.b16 %v820
      %v844 = vunpack.c.l.b16 %v821
      %v845 = vunpack.c.l.b16 %v822
      %v846 = vunpack.c.l.b16 %v823
      %v847 = vunpack.c.l.b16 %v824
      %v848 = vunpack.c.l.b16 %v825
      %v849 = vunpack.c.l.b16 %v826
      %v850 = vunpack.c.l.b16 %v827
      %v851 = vpack.c.b16 %v844, %v843
      %v852 = vpack.c.b16 %v846, %v845
      %v853 = vpack.c.b16 %v848, %v847
      %v854 = vpack.c.b16 %v850, %v849
      %v860 = vsel %vm674, %v812, 0
      %v863 = vsel %vm674, %v813, 0
      %v866 = vsel %vm674, %v814, 0
      %v869 = vsel %vm674, %v815, 0
      %v872 = vsel %vm674, %v816, 0
      %v875 = vsel %vm674, %v817, 0
      %v878 = vsel %vm674, %v818, 0
      %v881 = vsel %vm674, %v819, 0
      %883 = vmatprep.subr.bf16.mxu0 0
      %884 = vmatpush1.bf16.msra.mxu0 %v851
      %885 = vmatprep.subr.bf16.mxu0 0
      %886 = vmatpush1.bf16.msra.mxu0 %v852
      %887 = vmatprep.subr.bf16.mxu0 0
      %888 = vmatpush1.bf16.msra.mxu0 %v853
      %889 = vmatprep.subr.bf16.mxu0 0
      %890 = vmatpush1.bf16.msra.mxu0 %v854
      %891 = vmatprep.subr.bf16.mxu0 0
      %892 = vmatpush1.bf16.msra.mxu0 0
      %893 = vmatprep.subr.bf16.mxu0 0
      %894 = vmatpush1.bf16.msra.mxu0 0
      %895 = vmatprep.subr.bf16.mxu0 0
      %896 = vmatpush1.bf16.msra.mxu0 0
      %897 = vmatprep.subr.bf16.mxu0 0
      %898 = vmatpush1.bf16.msra.mxu0 0
      %899 = vmatprep.subr.bf16.mxu0 0
      %900 = vmatpush1.bf16.msra.mxu0 0
      %901 = vmatprep.subr.bf16.mxu0 0
      %902 = vmatpush1.bf16.msra.mxu0 0
      %903 = vmatprep.subr.bf16.mxu0 0
      %904 = vmatpush1.bf16.msra.mxu0 0
      %905 = vmatprep.subr.bf16.mxu0 0
      %906 = vmatpush1.bf16.msra.mxu0 0
      %907 = vmatprep.subr.bf16.mxu0 0
      %908 = vmatpush1.bf16.msra.mxu0 0
      %909 = vmatprep.subr.bf16.mxu0 0
      %910 = vmatpush1.bf16.msra.mxu0 0
      %911 = vmatprep.subr.bf16.mxu0 0
      %912 = vmatpush1.bf16.msra.mxu0 0
      %913 = vmatprep.subr.bf16.mxu0 0
      %914 = vmatpush1.bf16.msra.mxu0 0
      %915 = vmatprep.mubr.bf16.mxu0 0
      %916 = vmatmul.mubr.bf16.gmra.mrb[0].mxu0 %v860
      %v917 = vpop.f32.mrb[0].mxu0
      %v918 = vadd.f32 %v833, %v917
      %v919 = vpop.f32.mrb[0].mxu0
      %v920 = vpop.f32.mrb[0].mxu0
      %v921 = vadd.f32 %v833, %v920
      %v922 = vpop.f32.mrb[0].mxu0
      %923 = vmatprep.mubr.bf16.mxu0 0
      %924 = vmatmul.mubr.bf16.gmra.mrb[0].mxu0 %v863
      %v925 = vpop.f32.mrb[0].mxu0
      %v926 = vadd.f32 %v833, %v925
      %v927 = vpop.f32.mrb[0].mxu0
      %v928 = vpop.f32.mrb[0].mxu0
      %v929 = vadd.f32 %v833, %v928
      %v930 = vpop.f32.mrb[0].mxu0
      %931 = vmatprep.mubr.bf16.mxu0 0
      %932 = vmatmul.mubr.bf16.gmra.mrb[0].mxu0 %v866
      %v933 = vpop.f32.mrb[0].mxu0
      %v934 = vadd.f32 %v833, %v933
      %v935 = vpop.f32.mrb[0].mxu0
      %v936 = vpop.f32.mrb[0].mxu0
      %v937 = vadd.f32 %v833, %v936
      %v938 = vpop.f32.mrb[0].mxu0
      %939 = vmatprep.mubr.bf16.mxu0 0
      %940 = vmatmul.mubr.bf16.gmra.mrb[0].mxu0 %v869
      %v941 = vpop.f32.mrb[0].mxu0
      %v942 = vadd.f32 %v833, %v941
      %v943 = vpop.f32.mrb[0].mxu0
      %v944 = vpop.f32.mrb[0].mxu0
      %v945 = vadd.f32 %v833, %v944
      %v946 = vpop.f32.mrb[0].mxu0
      %947 = vmatprep.mubr.bf16.mxu0 0
      %948 = vmatmul.mubr.bf16.gmra.mrb[0].mxu0 %v872
      %v949 = vpop.f32.mrb[0].mxu0
      %v950 = vadd.f32 %v833, %v949
      %v951 = vpop.f32.mrb[0].mxu0
      %v952 = vpop.f32.mrb[0].mxu0
      %v953 = vadd.f32 %v833, %v952
      %v954 = vpop.f32.mrb[0].mxu0
      %955 = vmatprep.mubr.bf16.mxu0 0
      %956 = vmatmul.mubr.bf16.gmra.mrb[0].mxu0 %v875
      %v957 = vpop.f32.mrb[0].mxu0
      %v958 = vadd.f32 %v833, %v957
      %v959 = vpop.f32.mrb[0].mxu0
      %v960 = vpop.f32.mrb[0].mxu0
      %v961 = vadd.f32 %v833, %v960
      %v962 = vpop.f32.mrb[0].mxu0
      %963 = vmatprep.mubr.bf16.mxu0 0
      %964 = vmatmul.mubr.bf16.gmra.mrb[0].mxu0 %v878
      %v965 = vpop.f32.mrb[0].mxu0
      %v966 = vadd.f32 %v833, %v965
      %v967 = vpop.f32.mrb[0].mxu0
      %v968 = vpop.f32.mrb[0].mxu0
      %v969 = vadd.f32 %v833, %v968
      %v970 = vpop.f32.mrb[0].mxu0
      %971 = vmatprep.mubr.bf16.mxu0 0
      %972 = vmatmul.mubr.bf16.gmra.mrb[0].mxu0 %v881
      %v973 = vpop.f32.mrb[0].mxu0
      %v974 = vadd.f32 %v833, %v973
      %v975 = vpop.f32.mrb[0].mxu0
      %v976 = vpop.f32.mrb[0].mxu0
      %v977 = vadd.f32 %v833, %v976
      %v978 = vpop.f32.mrb[0].mxu0
      %979 = vdwg.mxu0
      %980 = vst.msk [vmem:[%s450] sm:$0xff] %vm674, %v918
      %981 = vst.msk [vmem:[%s450 + $0x8] sm:$0xff] %vm674, %v921
      %982 = vst.msk [vmem:[%s450 + $0x10] sm:$0xff] %vm674, %v926
      %983 = vst.msk [vmem:[%s450 + $0x18] sm:$0xff] %vm674, %v929
      %984 = vst.msk [vmem:[%s450 + $0x20] sm:$0xff] %vm674, %v934
      %985 = vst.msk [vmem:[%s450 + $0x28] sm:$0xff] %vm674, %v937
      %986 = vst.msk [vmem:[%s450 + $0x30] sm:$0xff] %vm674, %v942
      %987 = vst.msk [vmem:[%s450 + $0x38] sm:$0xff] %vm674, %v945
      %988 = vst.msk [vmem:[%s450 + $0x40] sm:$0xff] %vm674, %v950
      %989 = vst.msk [vmem:[%s450 + $0x48] sm:$0xff] %vm674, %v953
      %990 = vst.msk [vmem:[%s450 + $0x50] sm:$0xff] %vm674, %v958
      %991 = vst.msk [vmem:[%s450 + $0x58] sm:$0xff] %vm674, %v961
      %992 = vst.msk [vmem:[%s450 + $0x60] sm:$0xff] %vm674, %v966
      %993 = vst.msk [vmem:[%s450 + $0x68] sm:$0xff] %vm674, %v969
      %994 = vst.msk [vmem:[%s450 + $0x70] sm:$0xff] %vm674, %v974
      %995 = vst.msk [vmem:[%s450 + $0x78] sm:$0xff] %vm674, %v977
      %s996 = smul.u32 16, %s25
      %p997 = scmp.lt.s32.totalorder %s24, 1
      %s998 = scalar_select %p997, %s24, 1
      %p999 = scmp.lt.s32.totalorder %s996, 31
      %s1000 = scalar_select %p999, %s996, 31
      %s1001 = smul.addr %s998, 32
      %s1002 = sadd.s32 %s1000, %s1001
      %s1003 = smul.addr %s1002, 8
      %s1004 = scalar_lea.vmem %s9, %s1003
      // Predicated region
      $region57: #{conv_backend_forward.11} parent=55 // pred_check
        %p1005 = pneg %p268
      $region58: #{conv_backend_forward.11} parent=55 // pred_check_branch
        %1007 = sbr.rel (%p1005) target = $region60
      $region59: #{conv_backend_forward.11} parent=55 // pred_region
        %s1008 = smul.u32 16, %s25
      $region60: #{conv_backend_forward.11} parent=55 // pred_fallthru
        _
    $region56: #{conv_backend_forward.11} parent=5 // pred_fallthru
      _
    %p1009 = scmp.le.s32.totalorder 2, %s15
    // Predicated region
    $region61: #{conv_backend_forward.11} parent=5 // pred_check
      %p1010 = pneg %p1009
    $region62: #{conv_backend_forward.11} parent=5 // pred_check_branch
      %1012 = sbr.rel (%p1010) target = $region64
    $region63: #{conv_backend_forward.11} parent=5 // pred_region
      %s1013 = ssub.s32 %s15, 2
      // Predicated region
      $region65: #{conv_backend_forward.11} parent=63 // pred_check
        %p1014 = pneg %p274
      $region66: #{conv_backend_forward.11} parent=63 // pred_check_branch
        %1016 = sbr.rel (%p1014) target = $region68
      $region67: #{conv_backend_forward.11} parent=63 // pred_region
        %s1017 = smul.u32 16, %s27
        %p1018 = scmp.lt.s32.totalorder %s26, 1
        %s1019 = scalar_select %p1018, %s26, 1
        %p1020 = scmp.lt.s32.totalorder %s1017, 31
        %s1021 = scalar_select %p1020, %s1017, 31
        %s1022 = smul.addr %s1019, 32
        %s1023 = sadd.s32 %s1021, %s1022
        %s1024 = smul.addr %s1023, 8
        %s1025 = scalar_lea.vmem %s9, %s1024
      $region68: #{conv_backend_forward.11} parent=63 // pred_fallthru
        _
    $region64: #{conv_backend_forward.11} parent=5 // pred_fallthru
      _
  $region6: #{conv_backend_forward.11} parent=0 // loop_footer
    %s19 = sadd.s32 1, %s15
  $region7: #{conv_backend_forward.11} parent=0 // loop_footer_branch
    %14 = sbr.rel target = $region3
  $region8: #{conv_backend_forward.11} parent=0 // loop_exit
    _

// kernel: conv_backend_forward.6
$region0: #{conv_backend_forward.6}
  #allocation0 [shape = 'u32[]', space=smem, size = 0x4, offset = 0x4, fixed_abs, tag = 'smem constant byte address 0x4 - core index']
  #allocation1 [shape = 'u32[144,128]{1,0:T(1,128)}', space=vmem, size = 0x12000, scoped, tag = 'internal scratch']
  #allocation2 [shape = 'bf16[18,16,3]{2,1,0:T(16,128)(2,1)}', space=vmem, size = 0x12000, scoped, tag = 'scratch operand']
  %s0 = inlined_call_operand.vmem [shape: f32[2,16,16,1], index: 0, kind: input, shape index: {}]
  %s1 = inlined_call_operand.vmem [shape: bf16[3,3,64], index: 1, kind: input, shape index: {}]
  %s2 = inlined_call_operand.vmem [shape: f32[1,64], index: 2, kind: input, shape index: {}]
  %s3 = inlined_call_operand.vmem [shape: bf16[2,16,16,64], index: 3, kind: output, shape index: {}]
  %s4 = sld [smem:[#allocation0]]
  $region49: #{conv_backend_forward.6} parent=0
    _
  %s6 = ssub.s32 1, %s4
  %s7 = scalar_select 0, %s6, %s4
  loop: start=0, step=1, limit=6
  $region2: #{conv_backend_forward.6} parent=0 // loop_pre_header
    _
  $region3: #{conv_backend_forward.6} parent=0 // loop_header
    %s9 = sphi 0, %s13
    %p10 = scmp.ge.s32.totalorder %s9, 6
    %s16 = sphi 0, %s28
    %s17 = sphi 0, %s24
    %s18 = sphi 0, %s16
    %s19 = sphi 0, %s17
    %s20 = sphi 0, %s18
    %s21 = sphi 0, %s19
    %s31 = sphi 0, %s33
    %s34 = sphi 0, %s31
    %s35 = sphi 0, %s34
    %s51 = sphi 0, %s35
    %s55 = sphi 0, %s55
    %s57 = sphi 0, %s55
    %s58 = sphi 0, %s57
    %s72 = sphi 0, %s58
    %s76 = sphi 0, %s76
    %s78 = sphi 0, %s76
    %s79 = sphi 0, %s78
    %s93 = sphi 0, %s79
    %s101 = sphi 0, %s103
    %s104 = sphi 0, %s101
    %s105 = sphi 0, %s104
    %s121 = sphi 0, %s105
  $region4: #{conv_backend_forward.6} parent=0 // loop_header_branch
    %12 = sbr.rel (%p10) target = $region8
  $region5: #{conv_backend_forward.6} parent=0 // loop_body
    %s14 = ssub.s32 %s9, 1
    %s15 = ssub.s32 %s9, 2
    %s22 = sadd.s32 1, %s17
    %p23 = scmp.ge.s32.totalorder %s22, 2
    %s24 = scalar_select %p23, 0, %s22
    %s25 = sadd.s32 1, %s16
    %s26 = scalar_select %p23, %s25, %s16
    %p27 = scmp.ge.s32.totalorder %s26, 2
    %s28 = scalar_select %p27, 0, %s26
    %s29 = ssub.s32 %s16, %s28
    %p30 = scmp.eq.s32.totalorder %s29, 0
    %s32 = sadd.s32 %s31, 1
    %s33 = scalar_select %p30, %s31, %s32
    %p36 = pneg %p30
    %p37 = scmp.eq.s32.totalorder %s9, 3
    %p38 = por %p36, %p37
    %p39 = scmp.ne.s32.totalorder %s31, %s34
    %p40 = scmp.eq.s32.totalorder %s9, 0
    %p41 = por %p39, %p40
    %p42 = scmp.ne.s32.totalorder %s31, %s34
    %p43 = scmp.eq.s32.totalorder %s14, 3
    %p44 = por %p42, %p43
    %p45 = scmp.ne.s32.totalorder %s34, %s35
    %p46 = scmp.eq.s32.totalorder %s14, 0
    %p47 = por %p45, %p46
    %p48 = scmp.ne.s32.totalorder %s34, %s35
    %p49 = scmp.eq.s32.totalorder %s15, 3
    %p50 = por %p48, %p49
    %p52 = scmp.ne.s32.totalorder %s35, %s51
    %p53 = scmp.eq.s32.totalorder %s15, 0
    %p54 = por %p52, %p53
    %s56 = sadd.s32 %s55, 1
    %p59 = scmp.eq.s32.totalorder %s9, 3
    %p60 = scmp.ne.s32.totalorder %s55, %s57
    %p61 = scmp.eq.s32.totalorder %s9, 0
    %p62 = por %p60, %p61
    %p63 = scmp.ne.s32.totalorder %s55, %s57
    %p64 = scmp.eq.s32.totalorder %s14, 3
    %p65 = por %p63, %p64
    %p66 = scmp.ne.s32.totalorder %s57, %s58
    %p67 = scmp.eq.s32.totalorder %s14, 0
    %p68 = por %p66, %p67
    %p69 = scmp.ne.s32.totalorder %s57, %s58
    %p70 = scmp.eq.s32.totalorder %s15, 3
    %p71 = por %p69, %p70
    %p73 = scmp.ne.s32.totalorder %s58, %s72
    %p74 = scmp.eq.s32.totalorder %s15, 0
    %p75 = por %p73, %p74
    %s77 = sadd.s32 %s76, 1
    %p80 = scmp.eq.s32.totalorder %s9, 3
    %p81 = scmp.ne.s32.totalorder %s76, %s78
    %p82 = scmp.eq.s32.totalorder %s9, 0
    %p83 = por %p81, %p82
    %p84 = scmp.ne.s32.totalorder %s76, %s78
    %p85 = scmp.eq.s32.totalorder %s14, 3
    %p86 = por %p84, %p85
    %p87 = scmp.ne.s32.totalorder %s78, %s79
    %p88 = scmp.eq.s32.totalorder %s14, 0
    %p89 = por %p87, %p88
    %p90 = scmp.ne.s32.totalorder %s78, %s79
    %p91 = scmp.eq.s32.totalorder %s15, 3
    %p92 = por %p90, %p91
    %p94 = scmp.ne.s32.totalorder %s79, %s93
    %p95 = scmp.eq.s32.totalorder %s15, 0
    %p96 = por %p94, %p95
    %s97 = ssub.s32 %s16, %s28
    %s98 = ssub.s32 %s17, %s24
    %s99 = sor.u32 %s97, %s98
    %p100 = scmp.eq.s32.totalorder %s99, 0
    %s102 = sadd.s32 %s101, 1
    %s103 = scalar_select %p100, %s101, %s102
    %p106 = pneg %p100
    %p107 = scmp.eq.s32.totalorder %s9, 3
    %p108 = por %p106, %p107
    %p109 = scmp.ne.s32.totalorder %s101, %s104
    %p110 = scmp.eq.s32.totalorder %s9, 0
    %p111 = por %p109, %p110
    %p112 = scmp.ne.s32.totalorder %s101, %s104
    %p113 = scmp.eq.s32.totalorder %s14, 3
    %p114 = por %p112, %p113
    %p115 = scmp.ne.s32.totalorder %s104, %s105
    %p116 = scmp.eq.s32.totalorder %s14, 0
    %p117 = por %p115, %p116
    %p118 = scmp.ne.s32.totalorder %s104, %s105
    %p119 = scmp.eq.s32.totalorder %s15, 3
    %p120 = por %p118, %p119
    %p122 = scmp.ne.s32.totalorder %s105, %s121
    %p123 = scmp.eq.s32.totalorder %s15, 0
    %p124 = por %p122, %p123
    %p125 = scmp.le.s32.totalorder 1, %s9
    %p126 = scmp.lt.s32.totalorder %s9, 5
    %p127 = pnand %p125, %p126
    %p128 = pneg %p127
    // Predicated region
    $region9: #{conv_backend_forward.6} parent=5 // pred_check
      _
    $region10: #{conv_backend_forward.6} parent=5 // pred_check_branch
      %130 = sbr.rel (%p127) target = $region12
    $region11: #{conv_backend_forward.6} parent=5 // pred_region
      %s131 = ssub.s32 %s9, 1
      // Predicated region
      $region13: #{conv_backend_forward.6} parent=11 // pred_check
        %p132 = pneg %p68
      $region14: #{conv_backend_forward.6} parent=11 // pred_check_branch
        %134 = sbr.rel (%p132) target = $region16
      $region15: #{conv_backend_forward.6} parent=11 // pred_region
        _
      $region16: #{conv_backend_forward.6} parent=11 // pred_fallthru
        _
      // Predicated region
      $region17: #{conv_backend_forward.6} parent=11 // pred_check
        %p135 = pneg %p89
      $region18: #{conv_backend_forward.6} parent=11 // pred_check_branch
        %137 = sbr.rel (%p135) target = $region20
      $region19: #{conv_backend_forward.6} parent=11 // pred_region
        _
      $region20: #{conv_backend_forward.6} parent=11 // pred_fallthru
        _
    $region12: #{conv_backend_forward.6} parent=5 // pred_fallthru
      _
    %p138 = scmp.lt.s32.totalorder %s9, 4
    // Predicated region
    $region21: #{conv_backend_forward.6} parent=5 // pred_check
      %p139 = pneg %p138
    $region22: #{conv_backend_forward.6} parent=5 // pred_check_branch
      %141 = sbr.rel (%p139) target = $region24
    $region23: #{conv_backend_forward.6} parent=5 // pred_region
      // Predicated region
      $region25: #{conv_backend_forward.6} parent=23 // pred_check
        %p142 = pneg %p41
      $region26: #{conv_backend_forward.6} parent=23 // pred_check_branch
        %144 = sbr.rel (%p142) target = $region28
      $region27: #{conv_backend_forward.6} parent=23 // pred_region
        %p145 = scmp.lt.s32.totalorder %s16, 1
        %s146 = scalar_select %p145, %s16, 1
        %s147 = smul.addr %s146, 32
        %s148 = smul.addr %s147, 8
        %s149 = scalar_lea.vmem %s0, %s148
      $region28: #{conv_backend_forward.6} parent=23 // pred_fallthru
        _
    $region24: #{conv_backend_forward.6} parent=5 // pred_fallthru
      _
    %p150 = scmp.le.s32.totalorder 1, %s9
    %p151 = scmp.lt.s32.totalorder %s9, 5
    %p152 = pnand %p150, %p151
    %p153 = pneg %p152
    // Predicated region
    $region29: #{conv_backend_forward.6} parent=5 // pred_check
      _
    $region30: #{conv_backend_forward.6} parent=5 // pred_check_branch
      %155 = sbr.rel (%p152) target = $region32
    $region31: #{conv_backend_forward.6} parent=5 // pred_region
      %s156 = ssub.s32 %s9, 1
      %p157 = scmp.lt.s32.totalorder %s18, 1
      %s158 = scalar_select %p157, %s18, 1
      %s159 = smul.addr %s158, 32
      %s160 = smul.addr %s159, 8
      %s161 = scalar_lea.vmem %s0, %s160
      %p162 = pneg %p47
      %p163 = pneg %p44
      %p164 = pneg %p68
      %p165 = pneg %p65
      %p166 = pneg %p89
      %p167 = pneg %p86
      %p168 = pneg %p117
      %p169 = pneg %p114
      %s170 = smul.u32 8, %s19
      %p171 = scmp.lt.s32.totalorder %s18, 1
      %s172 = scalar_select %p171, %s18, 1
      %p173 = scmp.lt.s32.totalorder %s170, 15
      %s174 = scalar_select %p173, %s170, 15
      %s175 = smul.addr %s174, 2
      %s176 = smul.addr %s172, 32
      %s177 = sadd.s32 %s175, %s176
      %s178 = smul.addr %s177, 4
      %s179 = scalar_lea.vmem %s3, %s178
      %p180 = scmp.lt.s32.totalorder %s18, 1
      %s181 = scalar_select %p180, %s18, 1
      %s182 = smul.addr %s181, 32
      %s183 = smul.addr %s182, 8
      %s184 = scalar_lea.vmem %s0, %s183
      %s185 = smul.u32 8, %s19
      %p186 = scmp.lt.s32.totalorder %s18, 1
      %s187 = scalar_select %p186, %s18, 1
      %p188 = scmp.lt.s32.totalorder %s185, 15
      %s189 = scalar_select %p188, %s185, 15
      %s190 = smul.addr %s189, 2
      %s191 = smul.addr %s187, 32
      %s192 = sadd.s32 %s190, %s191
      %s193 = smul.addr %s192, 4
      %s194 = scalar_lea.vmem %s3, %s193
      %s195 = smul.u32 8, %s19
      %p197 = scmp.eq.s32.totalorder %s19, 0
      // Predicated region
      $region33: #{conv_backend_forward.6} parent=31 // pred_check
        %p198 = pneg %p197
      $region34: #{conv_backend_forward.6} parent=31 // pred_check_branch
        %200 = sbr.rel (%p198) target = $region36
      $region35: #{conv_backend_forward.6} parent=31 // pred_region
        %v201 = vld [vmem:[%s184] sm:$0xff]
        %v202 = vld [vmem:[%s184 + $0x8] sm:$0xff]
        %v203 = vld [vmem:[%s184 + $0x10] sm:$0xff]
        %v204 = vld [vmem:[%s184 + $0x18] sm:$0xff]
        %v205 = vld [vmem:[%s184 + $0x20] sm:$0xff]
        %v206 = vld [vmem:[%s184 + $0x28] sm:$0xff]
        %v207 = vld [vmem:[%s184 + $0x30] sm:$0xff]
        %v208 = vld [vmem:[%s184 + $0x38] sm:$0xff]
        %v209 = vld [vmem:[%s184 + $0x40] sm:$0xff]
        %v210 = vld [vmem:[%s184 + $0x48] sm:$0xff]
        %v211 = vld [vmem:[%s184 + $0x50] sm:$0xff]
        %v212 = vld [vmem:[%s184 + $0x58] sm:$0xff]
        %v213 = vld [vmem:[%s184 + $0x60] sm:$0xff]
        %v214 = vld [vmem:[%s184 + $0x68] sm:$0xff]
        %v215 = vld [vmem:[%s184 + $0x70] sm:$0xff]
        %v216 = vld [vmem:[%s184 + $0x78] sm:$0xff]
        %v217 = vld [vmem:[%s184 + $0x80] sm:$0xff]
        %v218 = vld [vmem:[%s184 + $0x88] sm:$0xff]
        %v219 = vld [vmem:[%s184 + $0x90] sm:$0xff]
        %v220 = vld [vmem:[%s184 + $0x98] sm:$0xff]
        %v221 = vld [vmem:[%s184 + $0xa0] sm:$0xff]
        %v222 = vld [vmem:[%s184 + $0xa8] sm:$0xff]
        %v223 = vld [vmem:[%s184 + $0xb0] sm:$0xff]
        %v224 = vld [vmem:[%s184 + $0xb8] sm:$0xff]
        %v225 = vld [vmem:[%s184 + $0xc0] sm:$0xff]
        %v226 = vld [vmem:[%s184 + $0xc8] sm:$0xff]
        %v227 = vld [vmem:[%s184 + $0xd0] sm:$0xff]
        %v228 = vld [vmem:[%s184 + $0xd8] sm:$0xff]
        %v229 = vld [vmem:[%s184 + $0xe0] sm:$0xff]
        %v230 = vld [vmem:[%s184 + $0xe8] sm:$0xff]
        %v231 = vld [vmem:[%s184 + $0xf0] sm:$0xff]
        %v232 = vld [vmem:[%s184 + $0xf8] sm:$0xff]
        %v233 = vpack.c.bf16 %v202, %v201
        %v234 = vpack.c.bf16 %v204, %v203
        %v235 = vpack.c.bf16 %v206, %v205
        %v236 = vpack.c.bf16 %v208, %v207
        %v237 = vpack.c.bf16 %v210, %v209
        %v238 = vpack.c.bf16 %v212, %v211
        %v239 = vpack.c.bf16 %v214, %v213
        %v240 = vpack.c.bf16 %v216, %v215
        %v241 = vpack.c.bf16 %v218, %v217
        %v242 = vpack.c.bf16 %v220, %v219
        %v243 = vpack.c.bf16 %v222, %v221
        %v244 = vpack.c.bf16 %v224, %v223
        %v245 = vpack.c.bf16 %v226, %v225
        %v246 = vpack.c.bf16 %v228, %v227
        %v247 = vpack.c.bf16 %v230, %v229
        %v248 = vpack.c.bf16 %v232, %v231
        %v250 = vshrl.u32 %v233, 16
        %v252 = vrot.slane %v250, 7
        %v253 = vshll.u32 %v233, 16
        %v255 = vor.u32 %v252, %v253
        %v257 = vshrl.u32 %v234, 16
        %v259 = vrot.slane %v257, 7
        %v260 = vshll.u32 %v234, 16
        %v262 = vor.u32 %v259, %v260
        %v264 = vshrl.u32 %v235, 16
        %v266 = vrot.slane %v264, 7
        %v267 = vshll.u32 %v235, 16
        %v269 = vor.u32 %v266, %v267
        %v271 = vshrl.u32 %v236, 16
        %v273 = vrot.slane %v271, 7
        %v274 = vshll.u32 %v236, 16
        %v276 = vor.u32 %v273, %v274
        %v278 = vshrl.u32 %v237, 16
        %v280 = vrot.slane %v278, 7
        %v281 = vshll.u32 %v237, 16
        %v283 = vor.u32 %v280, %v281
        %v285 = vshrl.u32 %v238, 16
        %v287 = vrot.slane %v285, 7
        %v288 = vshll.u32 %v238, 16
        %v290 = vor.u32 %v287, %v288
        %v292 = vshrl.u32 %v239, 16
        %v294 = vrot.slane %v292, 7
        %v295 = vshll.u32 %v239, 16
        %v297 = vor.u32 %v294, %v295
        %v299 = vshrl.u32 %v240, 16
        %v301 = vrot.slane %v299, 7
        %v302 = vshll.u32 %v240, 16
        %v304 = vor.u32 %v301, %v302
        %v306 = vshrl.u32 %v241, 16
        %v308 = vrot.slane %v306, 7
        %v309 = vshll.u32 %v241, 16
        %v311 = vor.u32 %v308, %v309
        %v313 = vshrl.u32 %v242, 16
        %v315 = vrot.slane %v313, 7
        %v316 = vshll.u32 %v242, 16
        %v318 = vor.u32 %v315, %v316
        %v320 = vshrl.u32 %v243, 16
        %v322 = vrot.slane %v320, 7
        %v323 = vshll.u32 %v243, 16
        %v325 = vor.u32 %v322, %v323
        %v327 = vshrl.u32 %v244, 16
        %v329 = vrot.slane %v327, 7
        %v330 = vshll.u32 %v244, 16
        %v332 = vor.u32 %v329, %v330
        %v334 = vshrl.u32 %v245, 16
        %v336 = vrot.slane %v334, 7
        %v337 = vshll.u32 %v245, 16
        %v339 = vor.u32 %v336, %v337
        %v341 = vshrl.u32 %v246, 16
        %v343 = vrot.slane %v341, 7
        %v344 = vshll.u32 %v246, 16
        %v346 = vor.u32 %v343, %v344
        %v348 = vshrl.u32 %v247, 16
        %v350 = vrot.slane %v348, 7
        %v351 = vshll.u32 %v247, 16
        %v353 = vor.u32 %v350, %v351
        %v355 = vshrl.u32 %v248, 16
        %v357 = vrot.slane %v355, 7
        %v358 = vshll.u32 %v248, 16
        %v360 = vor.u32 %v357, %v358
        %vm377 = vcmask 1040384
        %vm378 = vsmask.f32 256
        %vm379 = vmand %vm377, %vm378
        %v380 = vsel %vm379, 0, %v255
        %v381 = vsel %vm379, 0, %v262
        %v382 = vsel %vm379, 0, %v269
        %v383 = vsel %vm379, 0, %v276
        %v384 = vsel %vm379, 0, %v283
        %v385 = vsel %vm379, 0, %v290
        %v386 = vsel %vm379, 0, %v297
        %v387 = vsel %vm379, 0, %v304
        %v388 = vsel %vm379, 0, %v311
        %v389 = vsel %vm379, 0, %v318
        %v390 = vsel %vm379, 0, %v325
        %v391 = vsel %vm379, 0, %v332
        %v392 = vsel %vm379, 0, %v339
        %v393 = vsel %vm379, 0, %v346
        %v394 = vsel %vm379, 0, %v353
        %v395 = vsel %vm379, 0, %v360
        %v396 = vrot.slane %v253, 1
        %v397 = vor.u32 %v250, %v396
        %v398 = vrot.slane %v260, 1
        %v399 = vor.u32 %v257, %v398
        %v400 = vrot.slane %v267, 1
        %v401 = vor.u32 %v264, %v400
        %v402 = vrot.slane %v274, 1
        %v403 = vor.u32 %v271, %v402
        %v404 = vrot.slane %v281, 1
        %v405 = vor.u32 %v278, %v404
        %v406 = vrot.slane %v288, 1
        %v407 = vor.u32 %v285, %v406
        %v408 = vrot.slane %v295, 1
        %v409 = vor.u32 %v292, %v408
        %v410 = vrot.slane %v302, 1
        %v411 = vor.u32 %v299, %v410
        %v412 = vrot.slane %v309, 1
        %v413 = vor.u32 %v306, %v412
        %v414 = vrot.slane %v316, 1
        %v415 = vor.u32 %v313, %v414
        %v416 = vrot.slane %v323, 1
        %v417 = vor.u32 %v320, %v416
        %v418 = vrot.slane %v330, 1
        %v419 = vor.u32 %v327, %v418
        %v420 = vrot.slane %v337, 1
        %v421 = vor.u32 %v334, %v420
        %v422 = vrot.slane %v344, 1
        %v423 = vor.u32 %v341, %v422
        %v424 = vrot.slane %v351, 1
        %v425 = vor.u32 %v348, %v424
        %v426 = vrot.slane %v358, 1
        %v427 = vor.u32 %v355, %v426
        %vm444 = vcmask 1047552
        %vm445 = vsmask.f32 7424
        %vm446 = vmand %vm444, %vm445
        %v447 = vsel %vm446, %v397, 0
        %v448 = vsel %vm446, %v399, 0
        %v449 = vsel %vm446, %v401, 0
        %v450 = vsel %vm446, %v403, 0
        %v451 = vsel %vm446, %v405, 0
        %v452 = vsel %vm446, %v407, 0
        %v453 = vsel %vm446, %v409, 0
        %v454 = vsel %vm446, %v411, 0
        %v455 = vsel %vm446, %v413, 0
        %v456 = vsel %vm446, %v415, 0
        %v457 = vsel %vm446, %v417, 0
        %v458 = vsel %vm446, %v419, 0
        %v459 = vsel %vm446, %v421, 0
        %v460 = vsel %vm446, %v423, 0
        %v461 = vsel %vm446, %v425, 0
        %v462 = vsel %vm446, %v427, 0
        %s463 = scalar_lea.vmem [#allocation2], 8
        %vm464 = vcmask 7168
        %465 = vst.msk [vmem:[%s463] sm:$0xff] %vm464, %v380
        %466 = vst.msk [vmem:[%s463 + $0x8] sm:$0xff] %vm464, %v381
        %467 = vst.msk [vmem:[%s463 + $0x10] sm:$0xff] %vm464, %v382
        %468 = vst.msk [vmem:[%s463 + $0x18] sm:$0xff] %vm464, %v383
        %469 = vst.msk [vmem:[%s463 + $0x20] sm:$0xff] %vm464, %v384
        %470 = vst.msk [vmem:[%s463 + $0x28] sm:$0xff] %vm464, %v385
        %471 = vst.msk [vmem:[%s463 + $0x30] sm:$0xff] %vm464, %v386
        %472 = vst.msk [vmem:[%s463 + $0x38] sm:$0xff] %vm464, %v387
        %473 = vst.msk [vmem:[%s463 + $0x40] sm:$0xff] %vm464, %v388
        %474 = vst.msk [vmem:[%s463 + $0x48] sm:$0xff] %vm464, %v389
        %475 = vst.msk [vmem:[%s463 + $0x50] sm:$0xff] %vm464, %v390
        %476 = vst.msk [vmem:[%s463 + $0x58] sm:$0xff] %vm464, %v391
        %477 = vst.msk [vmem:[%s463 + $0x60] sm:$0xff] %vm464, %v392
        %478 = vst.msk [vmem:[%s463 + $0x68] sm:$0xff] %vm464, %v393
        %479 = vst.msk [vmem:[%s463 + $0x70] sm:$0xff] %vm464, %v394
        %480 = vst.msk [vmem:[%s463 + $0x78] sm:$0xff] %vm464, %v395
        %497 = vrot.lane.b32.xlu0 %v233, 1
        %v498 = vpop.permute.xlu0 %497
        %499 = vrot.lane.b32.xlu0 %v234, 1
        %v500 = vpop.permute.xlu0 %499
        %501 = vrot.lane.b32.xlu0 %v235, 1
        %v502 = vpop.permute.xlu0 %501
        %503 = vrot.lane.b32.xlu0 %v236, 1
        %v504 = vpop.permute.xlu0 %503
        %505 = vrot.lane.b32.xlu0 %v237, 1
        %v506 = vpop.permute.xlu0 %505
        %507 = vrot.lane.b32.xlu0 %v238, 1
        %v508 = vpop.permute.xlu0 %507
        %509 = vrot.lane.b32.xlu0 %v239, 1
        %v510 = vpop.permute.xlu0 %509
        %511 = vrot.lane.b32.xlu0 %v240, 1
        %v512 = vpop.permute.xlu0 %511
        %513 = vrot.lane.b32.xlu0 %v241, 1
        %v514 = vpop.permute.xlu0 %513
        %515 = vrot.lane.b32.xlu0 %v242, 1
        %v516 = vpop.permute.xlu0 %515
        %517 = vrot.lane.b32.xlu0 %v243, 1
        %v518 = vpop.permute.xlu0 %517
        %519 = vrot.lane.b32.xlu0 %v244, 1
        %v520 = vpop.permute.xlu0 %519
        %521 = vrot.lane.b32.xlu0 %v245, 1
        %v522 = vpop.permute.xlu0 %521
        %523 = vrot.lane.b32.xlu0 %v246, 1
        %v524 = vpop.permute.xlu0 %523
        %525 = vrot.lane.b32.xlu0 %v247, 1
        %v526 = vpop.permute.xlu0 %525
        %527 = vrot.lane.b32.xlu0 %v248, 1
        %v528 = vpop.permute.xlu0 %527
        %vm545 = vcmask 15368
        %546 = vst.msk [vmem:[%s463] sm:$0xff] %vm545, %v498
        %547 = vst.msk [vmem:[%s463 + $0x8] sm:$0xff] %vm545, %v500
        %548 = vst.msk [vmem:[%s463 + $0x10] sm:$0xff] %vm545, %v502
        %549 = vst.msk [vmem:[%s463 + $0x18] sm:$0xff] %vm545, %v504
        %550 = vst.msk [vmem:[%s463 + $0x20] sm:$0xff] %vm545, %v506
        %551 = vst.msk [vmem:[%s463 + $0x28] sm:$0xff] %vm545, %v508
        %552 = vst.msk [vmem:[%s463 + $0x30] sm:$0xff] %vm545, %v510
        %553 = vst.msk [vmem:[%s463 + $0x38] sm:$0xff] %vm545, %v512
        %554 = vst.msk [vmem:[%s463 + $0x40] sm:$0xff] %vm545, %v514
        %555 = vst.msk [vmem:[%s463 + $0x48] sm:$0xff] %vm545, %v516
        %556 = vst.msk [vmem:[%s463 + $0x50] sm:$0xff] %vm545, %v518
        %557 = vst.msk [vmem:[%s463 + $0x58] sm:$0xff] %vm545, %v520
        %558 = vst.msk [vmem:[%s463 + $0x60] sm:$0xff] %vm545, %v522
        %559 = vst.msk [vmem:[%s463 + $0x68] sm:$0xff] %vm545, %v524
        %560 = vst.msk [vmem:[%s463 + $0x70] sm:$0xff] %vm545, %v526
        %561 = vst.msk [vmem:[%s463 + $0x78] sm:$0xff] %vm545, %v528
        %578 = vrot.lane.b32.xlu0 %v447, 2
        %v579 = vpop.permute.xlu0 %578
        %580 = vrot.lane.b32.xlu0 %v448, 2
        %v581 = vpop.permute.xlu0 %580
        %582 = vrot.lane.b32.xlu0 %v449, 2
        %v583 = vpop.permute.xlu0 %582
        %584 = vrot.lane.b32.xlu0 %v450, 2
        %v585 = vpop.permute.xlu0 %584
        %586 = vrot.lane.b32.xlu0 %v451, 2
        %v587 = vpop.permute.xlu0 %586
        %588 = vrot.lane.b32.xlu0 %v452, 2
        %v589 = vpop.permute.xlu0 %588
        %590 = vrot.lane.b32.xlu0 %v453, 2
        %v591 = vpop.permute.xlu0 %590
        %592 = vrot.lane.b32.xlu0 %v454, 2
        %v593 = vpop.permute.xlu0 %592
        %594 = vrot.lane.b32.xlu0 %v455, 2
        %v595 = vpop.permute.xlu0 %594
        %596 = vrot.lane.b32.xlu0 %v456, 2
        %v597 = vpop.permute.xlu0 %596
        %598 = vrot.lane.b32.xlu0 %v457, 2
        %v599 = vpop.permute.xlu0 %598
        %600 = vrot.lane.b32.xlu0 %v458, 2
        %v601 = vpop.permute.xlu0 %600
        %602 = vrot.lane.b32.xlu0 %v459, 2
        %v603 = vpop.permute.xlu0 %602
        %604 = vrot.lane.b32.xlu0 %v460, 2
        %v605 = vpop.permute.xlu0 %604
        %606 = vrot.lane.b32.xlu0 %v461, 2
        %v607 = vpop.permute.xlu0 %606
        %608 = vrot.lane.b32.xlu0 %v462, 2
        %v609 = vpop.permute.xlu0 %608
        %vm626 = vcmask 23568
        %627 = vst.msk [vmem:[%s463] sm:$0xff] %vm626, %v579
        %628 = vst.msk [vmem:[%s463 + $0x8] sm:$0xff] %vm626, %v581
        %629 = vst.msk [vmem:[%s463 + $0x10] sm:$0xff] %vm626, %v583
        %630 = vst.msk [vmem:[%s463 + $0x18] sm:$0xff] %vm626, %v585
        %631 = vst.msk [vmem:[%s463 + $0x20] sm:$0xff] %vm626, %v587
        %632 = vst.msk [vmem:[%s463 + $0x28] sm:$0xff] %vm626, %v589
        %633 = vst.msk [vmem:[%s463 + $0x30] sm:$0xff] %vm626, %v591
        %634 = vst.msk [vmem:[%s463 + $0x38] sm:$0xff] %vm626, %v593
        %635 = vst.msk [vmem:[%s463 + $0x40] sm:$0xff] %vm626, %v595
        %636 = vst.msk [vmem:[%s463 + $0x48] sm:$0xff] %vm626, %v597
        %637 = vst.msk [vmem:[%s463 + $0x50] sm:$0xff] %vm626, %v599
        %638 = vst.msk [vmem:[%s463 + $0x58] sm:$0xff] %vm626, %v601
        %639 = vst.msk [vmem:[%s463 + $0x60] sm:$0xff] %vm626, %v603
        %640 = vst.msk [vmem:[%s463 + $0x68] sm:$0xff] %vm626, %v605
        %641 = vst.msk [vmem:[%s463 + $0x70] sm:$0xff] %vm626, %v607
        %642 = vst.msk [vmem:[%s463 + $0x78] sm:$0xff] %vm626, %v609
        %vm643 = vcmask 23552
        %644 = vst.msk [vmem:[#allocation2] sm:$0xff] %vm643, 0
        %s645 = scalar_lea.vmem [#allocation2], 136
        %646 = vst.msk [vmem:[%s645] sm:$0xff] %vm643, 0
      $region36: #{conv_backend_forward.6} parent=31 // pred_fallthru
        _
      %s647 = smul.u32 %s19, 8
      %s648 = smul.addr %s647, 8
      %s649 = scalar_lea.vmem [#allocation2], %s648
      %v650 = vld [vmem:[%s649] sm:$0xff]
      %v651 = vld [vmem:[%s649 + $0x8] sm:$0xff]
      %v652 = vld [vmem:[%s649 + $0x10] sm:$0xff]
      %v653 = vld [vmem:[%s649 + $0x18] sm:$0xff]
      %v654 = vld [vmem:[%s649 + $0x20] sm:$0xff]
      %v655 = vld [vmem:[%s649 + $0x28] sm:$0xff]
      %v656 = vld [vmem:[%s649 + $0x30] sm:$0xff]
      %v657 = vld [vmem:[%s649 + $0x38] sm:$0xff]
      %v658 = vld [vmem:[%s1] sm:$0x3]
      %s659 = sadd.s32 %s647, 1
      %s660 = smul.addr %s659, 8
      %s661 = scalar_lea.vmem [#allocation2], %s660
      %v662 = vld [vmem:[%s661] sm:$0xff]
      %v663 = vld [vmem:[%s661 + $0x8] sm:$0xff]
      %v664 = vld [vmem:[%s661 + $0x10] sm:$0xff]
      %v665 = vld [vmem:[%s661 + $0x18] sm:$0xff]
      %v666 = vld [vmem:[%s661 + $0x20] sm:$0xff]
      %v667 = vld [vmem:[%s661 + $0x28] sm:$0xff]
      %v668 = vld [vmem:[%s661 + $0x30] sm:$0xff]
      %v669 = vld [vmem:[%s661 + $0x38] sm:$0xff]
      %s670 = scalar_lea.vmem %s1, 2
      %v671 = vld [vmem:[%s670] sm:$0x3]
      %vm672 = vcmask 23552
      %v674 = vsel %vm672, %v662, 0
      %v677 = vsel %vm672, %v663, 0
      %v680 = vsel %vm672, %v664, 0
      %v683 = vsel %vm672, %v665, 0
      %v686 = vsel %vm672, %v666, 0
      %v689 = vsel %vm672, %v667, 0
      %v692 = vsel %vm672, %v668, 0
      %v695 = vsel %vm672, %v669, 0
      %vm697 = vcmask 1040384
      %vm698 = vcmask 1041408
      %v699 = vsel %vm697, 4294967295, 65535
      %v700 = vsel %vm698, %v699, 0
      %v702 = vand.u32 %v671, %v700
      %704 = vmatprep.subr.bf16.mxu0 0
      %705 = vmatpush1.bf16.msra.mxu0 %v702
      %706 = vmatprep.subr.bf16.mxu0 0
      %707 = vmatpush1.bf16.msra.mxu0 0
      %708 = vmatprep.subr.bf16.mxu0 0
      %709 = vmatpush1.bf16.msra.mxu0 0
      %710 = vmatprep.subr.bf16.mxu0 0
      %711 = vmatpush1.bf16.msra.mxu0 0
      %712 = vmatprep.subr.bf16.mxu0 0
      %713 = vmatpush1.bf16.msra.mxu0 0
      %714 = vmatprep.subr.bf16.mxu0 0
      %715 = vmatpush1.bf16.msra.mxu0 0
      %716 = vmatprep.subr.bf16.mxu0 0
      %717 = vmatpush1.bf16.msra.mxu0 0
      %718 = vmatprep.subr.bf16.mxu0 0
      %719 = vmatpush1.bf16.msra.mxu0 0
      %720 = vmatprep.subr.bf16.mxu0 0
      %721 = vmatpush1.bf16.msra.mxu0 0
      %722 = vmatprep.subr.bf16.mxu0 0
      %723 = vmatpush1.bf16.msra.mxu0 0
      %724 = vmatprep.subr.bf16.mxu0 0
      %725 = vmatpush1.bf16.msra.mxu0 0
      %726 = vmatprep.subr.bf16.mxu0 0
      %727 = vmatpush1.bf16.msra.mxu0 0
      %728 = vmatprep.subr.bf16.mxu0 0
      %729 = vmatpush1.bf16.msra.mxu0 0
      %730 = vmatprep.subr.bf16.mxu0 0
      %731 = vmatpush1.bf16.msra.mxu0 0
      %732 = vmatprep.subr.bf16.mxu0 0
      %733 = vmatpush1.bf16.msra.mxu0 0
      %734 = vmatprep.subr.bf16.mxu0 0
      %735 = vmatpush1.bf16.msra.mxu0 0
      %736 = vmatprep.mubr.bf16.mxu0 0
      %737 = vmatmul.mubr.bf16.gmra.mrb[0].mxu0 %v674
      %v738 = vpop.f32.mrb[0].mxu0
      %v739 = vadd.f32 0.0, %v738
      %v740 = vpop.f32.mrb[0].mxu0
      %v741 = vpop.f32.mrb[0].mxu0
      %v742 = vadd.f32 0.0, %v741
      %v743 = vpop.f32.mrb[0].mxu0
      %744 = vmatprep.mubr.bf16.mxu0 0
      %745 = vmatmul.mubr.bf16.gmra.mrb[0].mxu0 %v677
      %v746 = vpop.f32.mrb[0].mxu0
      %v747 = vadd.f32 0.0, %v746
      %v748 = vpop.f32.mrb[0].mxu0
      %v749 = vpop.f32.mrb[0].mxu0
      %v750 = vadd.f32 0.0, %v749
      %v751 = vpop.f32.mrb[0].mxu0
      %752 = vmatprep.mubr.bf16.mxu0 0
      %753 = vmatmul.mubr.bf16.gmra.mrb[0].mxu0 %v680
      %v754 = vpop.f32.mrb[0].mxu0
      %v755 = vadd.f32 0.0, %v754
      %v756 = vpop.f32.mrb[0].mxu0
      %v757 = vpop.f32.mrb[0].mxu0
      %v758 = vadd.f32 0.0, %v757
      %v759 = vpop.f32.mrb[0].mxu0
      %760 = vmatprep.mubr.bf16.mxu0 0
      %761 = vmatmul.mubr.bf16.gmra.mrb[0].mxu0 %v683
      %v762 = vpop.f32.mrb[0].mxu0
      %v763 = vadd.f32 0.0, %v762
      %v764 = vpop.f32.mrb[0].mxu0
      %v765 = vpop.f32.mrb[0].mxu0
      %v766 = vadd.f32 0.0, %v765
      %v767 = vpop.f32.mrb[0].mxu0
      %768 = vmatprep.mubr.bf16.mxu0 0
      %769 = vmatmul.mubr.bf16.gmra.mrb[0].mxu0 %v686
      %v770 = vpop.f32.mrb[0].mxu0
      %v771 = vadd.f32 0.0, %v770
      %v772 = vpop.f32.mrb[0].mxu0
      %v773 = vpop.f32.mrb[0].mxu0
      %v774 = vadd.f32 0.0, %v773
      %v775 = vpop.f32.mrb[0].mxu0
      %776 = vmatprep.mubr.bf16.mxu0 0
      %777 = vmatmul.mubr.bf16.gmra.mrb[0].mxu0 %v689
      %v778 = vpop.f32.mrb[0].mxu0
      %v779 = vadd.f32 0.0, %v778
      %v780 = vpop.f32.mrb[0].mxu0
      %v781 = vpop.f32.mrb[0].mxu0
      %v782 = vadd.f32 0.0, %v781
      %v783 = vpop.f32.mrb[0].mxu0
      %784 = vmatprep.mubr.bf16.mxu0 0
      %785 = vmatmul.mubr.bf16.gmra.mrb[0].mxu0 %v692
      %v786 = vpop.f32.mrb[0].mxu0
      %v787 = vadd.f32 0.0, %v786
      %v788 = vpop.f32.mrb[0].mxu0
      %v789 = vpop.f32.mrb[0].mxu0
      %v790 = vadd.f32 0.0, %v789
      %v791 = vpop.f32.mrb[0].mxu0
      %792 = vmatprep.mubr.bf16.mxu0 0
      %793 = vmatmul.mubr.bf16.gmra.mrb[0].mxu0 %v695
      %v794 = vpop.f32.mrb[0].mxu0
      %v795 = vadd.f32 0.0, %v794
      %v796 = vpop.f32.mrb[0].mxu0
      %v797 = vpop.f32.mrb[0].mxu0
      %v798 = vadd.f32 0.0, %v797
      %v799 = vpop.f32.mrb[0].mxu0
      %800 = vdwg.mxu0
      %v802 = vsel %vm672, %v650, 0
      %v805 = vsel %vm672, %v651, 0
      %v808 = vsel %vm672, %v652, 0
      %v811 = vsel %vm672, %v653, 0
      %v814 = vsel %vm672, %v654, 0
      %v817 = vsel %vm672, %v655, 0
      %v820 = vsel %vm672, %v656, 0
      %v823 = vsel %vm672, %v657, 0
      %v826 = vand.u32 %v658, %v700
      %828 = vmatprep.subr.bf16.mxu0 0
      %829 = vmatpush1.bf16.msra.mxu0 %v826
      %830 = vmatprep.subr.bf16.mxu0 0
      %831 = vmatpush1.bf16.msra.mxu0 0
      %832 = vmatprep.subr.bf16.mxu0 0
      %833 = vmatpush1.bf16.msra.mxu0 0
      %834 = vmatprep.subr.bf16.mxu0 0
      %835 = vmatpush1.bf16.msra.mxu0 0
      %836 = vmatprep.subr.bf16.mxu0 0
      %837 = vmatpush1.bf16.msra.mxu0 0
      %838 = vmatprep.subr.bf16.mxu0 0
      %839 = vmatpush1.bf16.msra.mxu0 0
      %840 = vmatprep.subr.bf16.mxu0 0
      %841 = vmatpush1.bf16.msra.mxu0 0
      %842 = vmatprep.subr.bf16.mxu0 0
      %843 = vmatpush1.bf16.msra.mxu0 0
      %844 = vmatprep.subr.bf16.mxu0 0
      %845 = vmatpush1.bf16.msra.mxu0 0
      %846 = vmatprep.subr.bf16.mxu0 0
      %847 = vmatpush1.bf16.msra.mxu0 0
      %848 = vmatprep.subr.bf16.mxu0 0
      %849 = vmatpush1.bf16.msra.mxu0 0
      %850 = vmatprep.subr.bf16.mxu0 0
      %851 = vmatpush1.bf16.msra.mxu0 0
      %852 = vmatprep.subr.bf16.mxu0 0
      %853 = vmatpush1.bf16.msra.mxu0 0
      %854 = vmatprep.subr.bf16.mxu0 0
      %855 = vmatpush1.bf16.msra.mxu0 0
      %856 = vmatprep.subr.bf16.mxu0 0
      %857 = vmatpush1.bf16.msra.mxu0 0
      %858 = vmatprep.subr.bf16.mxu0 0
      %859 = vmatpush1.bf16.msra.mxu0 0
      %860 = vmatprep.mubr.bf16.mxu0 0
      %861 = vmatmul.mubr.bf16.gmra.mrb[0].mxu0 %v802
      %v862 = vpop.f32.mrb[0].mxu0
      %v863 = vadd.f32 %v739, %v862
      %v864 = vpop.f32.mrb[0].mxu0
      %v865 = vpop.f32.mrb[0].mxu0
      %v866 = vadd.f32 %v742, %v865
      %v867 = vpop.f32.mrb[0].mxu0
      %868 = vmatprep.mubr.bf16.mxu0 0
      %869 = vmatmul.mubr.bf16.gmra.mrb[0].mxu0 %v805
      %v870 = vpop.f32.mrb[0].mxu0
      %v871 = vadd.f32 %v747, %v870
      %v872 = vpop.f32.mrb[0].mxu0
      %v873 = vpop.f32.mrb[0].mxu0
      %v874 = vadd.f32 %v750, %v873
      %v875 = vpop.f32.mrb[0].mxu0
      %876 = vmatprep.mubr.bf16.mxu0 0
      %877 = vmatmul.mubr.bf16.gmra.mrb[0].mxu0 %v808
      %v878 = vpop.f32.mrb[0].mxu0
      %v879 = vadd.f32 %v755, %v878
      %v880 = vpop.f32.mrb[0].mxu0
      %v881 = vpop.f32.mrb[0].mxu0
      %v882 = vadd.f32 %v758, %v881
      %v883 = vpop.f32.mrb[0].mxu0
      %884 = vmatprep.mubr.bf16.mxu0 0
      %885 = vmatmul.mubr.bf16.gmra.mrb[0].mxu0 %v811
      %v886 = vpop.f32.mrb[0].mxu0
      %v887 = vadd.f32 %v763, %v886
      %v888 = vpop.f32.mrb[0].mxu0
      %v889 = vpop.f32.mrb[0].mxu0
      %v890 = vadd.f32 %v766, %v889
      %v891 = vpop.f32.mrb[0].mxu0
      %892 = vmatprep.mubr.bf16.mxu0 0
      %893 = vmatmul.mubr.bf16.gmra.mrb[0].mxu0 %v814
      %v894 = vpop.f32.mrb[0].mxu0
      %v895 = vadd.f32 %v771, %v894
      %v896 = vpop.f32.mrb[0].mxu0
      %v897 = vpop.f32.mrb[0].mxu0
      %v898 = vadd.f32 %v774, %v897
      %v899 = vpop.f32.mrb[0].mxu0
      %900 = vmatprep.mubr.bf16.mxu0 0
      %901 = vmatmul.mubr.bf16.gmra.mrb[0].mxu0 %v817
      %v902 = vpop.f32.mrb[0].mxu0
      %v903 = vadd.f32 %v779, %v902
      %v904 = vpop.f32.mrb[0].mxu0
      %v905 = vpop.f32.mrb[0].mxu0
      %v906 = vadd.f32 %v782, %v905
      %v907 = vpop.f32.mrb[0].mxu0
      %908 = vmatprep.mubr.bf16.mxu0 0
      %909 = vmatmul.mubr.bf16.gmra.mrb[0].mxu0 %v820
      %v910 = vpop.f32.mrb[0].mxu0
      %v911 = vadd.f32 %v787, %v910
      %v912 = vpop.f32.mrb[0].mxu0
      %v913 = vpop.f32.mrb[0].mxu0
      %v914 = vadd.f32 %v790, %v913
      %v915 = vpop.f32.mrb[0].mxu0
      %916 = vmatprep.mubr.bf16.mxu0 0
      %917 = vmatmul.mubr.bf16.gmra.mrb[0].mxu0 %v823
      %v918 = vpop.f32.mrb[0].mxu0
      %v919 = vadd.f32 %v795, %v918
      %v920 = vpop.f32.mrb[0].mxu0
      %v921 = vpop.f32.mrb[0].mxu0
      %v922 = vadd.f32 %v798, %v921
      %v923 = vpop.f32.mrb[0].mxu0
      %924 = vdwg.mxu0
      %s925 = sadd.s32 %s647, 2
      %s926 = smul.addr %s925, 8
      %s927 = scalar_lea.vmem [#allocation2], %s926
      %v928 = vld [vmem:[%s927] sm:$0xff]
      %v929 = vld [vmem:[%s927 + $0x8] sm:$0xff]
      %v930 = vld [vmem:[%s927 + $0x10] sm:$0xff]
      %v931 = vld [vmem:[%s927 + $0x18] sm:$0xff]
      %v932 = vld [vmem:[%s927 + $0x20] sm:$0xff]
      %v933 = vld [vmem:[%s927 + $0x28] sm:$0xff]
      %v934 = vld [vmem:[%s927 + $0x30] sm:$0xff]
      %v935 = vld [vmem:[%s927 + $0x38] sm:$0xff]
      %s936 = scalar_lea.vmem %s1, 4
      %v937 = vld [vmem:[%s936] sm:$0x3]
      %v939 = vsel %vm672, %v928, 0
      %v942 = vsel %vm672, %v929, 0
      %v945 = vsel %vm672, %v930, 0
      %v948 = vsel %vm672, %v931, 0
      %v951 = vsel %vm672, %v932, 0
      %v954 = vsel %vm672, %v933, 0
      %v957 = vsel %vm672, %v934, 0
      %v960 = vsel %vm672, %v935, 0
      %v963 = vand.u32 %v937, %v700
      %965 = vmatprep.subr.bf16.mxu0 0
      %966 = vmatpush1.bf16.msra.mxu0 %v963
      %967 = vmatprep.subr.bf16.mxu0 0
      %968 = vmatpush1.bf16.msra.mxu0 0
      %969 = vmatprep.subr.bf16.mxu0 0
      %970 = vmatpush1.bf16.msra.mxu0 0
      %971 = vmatprep.subr.bf16.mxu0 0
      %972 = vmatpush1.bf16.msra.mxu0 0
      %973 = vmatprep.subr.bf16.mxu0 0
      %974 = vmatpush1.bf16.msra.mxu0 0
      %975 = vmatprep.subr.bf16.mxu0 0
      %976 = vmatpush1.bf16.msra.mxu0 0
      %977 = vmatprep.subr.bf16.mxu0 0
      %978 = vmatpush1.bf16.msra.mxu0 0
      %979 = vmatprep.subr.bf16.mxu0 0
      %980 = vmatpush1.bf16.msra.mxu0 0
      %981 = vmatprep.subr.bf16.mxu0 0
      %982 = vmatpush1.bf16.msra.mxu0 0
      %983 = vmatprep.subr.bf16.mxu0 0
      %984 = vmatpush1.bf16.msra.mxu0 0
      %985 = vmatprep.subr.bf16.mxu0 0
      %986 = vmatpush1.bf16.msra.mxu0 0
      %987 = vmatprep.subr.bf16.mxu0 0
      %988 = vmatpush1.bf16.msra.mxu0 0
      %989 = vmatprep.subr.bf16.mxu0 0
      %990 = vmatpush1.bf16.msra.mxu0 0
      %991 = vmatprep.subr.bf16.mxu0 0
      %992 = vmatpush1.bf16.msra.mxu0 0
      %993 = vmatprep.subr.bf16.mxu0 0
      %994 = vmatpush1.bf16.msra.mxu0 0
      %995 = vmatprep.subr.bf16.mxu0 0
      %996 = vmatpush1.bf16.msra.mxu0 0
      %997 = vmatprep.mubr.bf16.mxu0 0
      %998 = vmatmul.mubr.bf16.gmra.mrb[0].mxu0 %v939
      %v999 = vpop.f32.mrb[0].mxu0
      %v1000 = vadd.f32 0.0, %v999
      %v1001 = vpop.f32.mrb[0].mxu0
      %v1002 = vpop.f32.mrb[0].mxu0
      %v1003 = vadd.f32 0.0, %v1002
      %v1004 = vpop.f32.mrb[0].mxu0
      %1005 = vmatprep.mubr.bf16.mxu0 0
      %1006 = vmatmul.mubr.bf16.gmra.mrb[0].mxu0 %v942
      %v1007 = vpop.f32.mrb[0].mxu0
      %v1008 = vadd.f32 0.0, %v1007
      %v1009 = vpop.f32.mrb[0].mxu0
      %v1010 = vpop.f32.mrb[0].mxu0
      %v1011 = vadd.f32 0.0, %v1010
      %v1012 = vpop.f32.mrb[0].mxu0
      %1013 = vmatprep.mubr.bf16.mxu0 0
      %1014 = vmatmul.mubr.bf16.gmra.mrb[0].mxu0 %v945
      %v1015 = vpop.f32.mrb[0].mxu0
      %v1016 = vadd.f32 0.0, %v1015
      %v1017 = vpop.f32.mrb[0].mxu0
      %v1018 = vpop.f32.mrb[0].mxu0
      %v1019 = vadd.f32 0.0, %v1018
      %v1020 = vpop.f32.mrb[0].mxu0
      %1021 = vmatprep.mubr.bf16.mxu0 0
      %1022 = vmatmul.mubr.bf16.gmra.mrb[0].mxu0 %v948
      %v1023 = vpop.f32.mrb[0].mxu0
      %v1024 = vadd.f32 0.0, %v1023
      %v1025 = vpop.f32.mrb[0].mxu0
      %v1026 = vpop.f32.mrb[0].mxu0
      %v1027 = vadd.f32 0.0, %v1026
      %v1028 = vpop.f32.mrb[0].mxu0
      %1029 = vmatprep.mubr.bf16.mxu0 0
      %1030 = vmatmul.mubr.bf16.gmra.mrb[0].mxu0 %v951
      %v1031 = vpop.f32.mrb[0].mxu0
      %v1032 = vadd.f32 0.0, %v1031
      %v1033 = vpop.f32.mrb[0].mxu0
      %v1034 = vpop.f32.mrb[0].mxu0
      %v1035 = vadd.f32 0.0, %v1034
      %v1036 = vpop.f32.mrb[0].mxu0
      %1037 = vmatprep.mubr.bf16.mxu0 0
      %1038 = vmatmul.mubr.bf16.gmra.mrb[0].mxu0 %v954
      %v1039 = vpop.f32.mrb[0].mxu0
      %v1040 = vadd.f32 0.0, %v1039
      %v1041 = vpop.f32.mrb[0].mxu0
      %v1042 = vpop.f32.mrb[0].mxu0
      %v1043 = vadd.f32 0.0, %v1042
      %v1044 = vpop.f32.mrb[0].mxu0
      %1045 = vmatprep.mubr.bf16.mxu0 0
      %1046 = vmatmul.mubr.bf16.gmra.mrb[0].mxu0 %v957
      %v1047 = vpop.f32.mrb[0].mxu0
      %v1048 = vadd.f32 0.0, %v1047
      %v1049 = vpop.f32.mrb[0].mxu0
      %v1050 = vpop.f32.mrb[0].mxu0
      %v1051 = vadd.f32 0.0, %v1050
      %v1052 = vpop.f32.mrb[0].mxu0
      %1053 = vmatprep.mubr.bf16.mxu0 0
      %1054 = vmatmul.mubr.bf16.gmra.mrb[0].mxu0 %v960
      %v1055 = vpop.f32.mrb[0].mxu0
      %v1056 = vadd.f32 0.0, %v1055
      %v1057 = vpop.f32.mrb[0].mxu0
      %v1058 = vpop.f32.mrb[0].mxu0
      %v1059 = vadd.f32 0.0, %v1058
      %v1060 = vpop.f32.mrb[0].mxu0
      %1061 = vdwg.mxu0
      %v1062 = vadd.f32 %v863, %v1000
      %v1063 = vadd.f32 %v866, %v1003
      %v1064 = vadd.f32 %v871, %v1008
      %v1065 = vadd.f32 %v874, %v1011
      %v1066 = vadd.f32 %v879, %v1016
      %v1067 = vadd.f32 %v882, %v1019
      %v1068 = vadd.f32 %v887, %v1024
      %v1069 = vadd.f32 %v890, %v1027
      %v1070 = vadd.f32 %v895, %v1032
      %v1071 = vadd.f32 %v898, %v1035
      %v1072 = vadd.f32 %v903, %v1040
      %v1073 = vadd.f32 %v906, %v1043
      %v1074 = vadd.f32 %v911, %v1048
      %v1075 = vadd.f32 %v914, %v1051
      %v1076 = vadd.f32 %v919, %v1056
      %v1077 = vadd.f32 %v922, %v1059
      %v1078 = vld [vmem:[%s2] sm:$0x1]
      %v1080 = vlaneseq
      %v1081 = vshrl.u32 %v1080, 7
      %v1082 = vsub.s32 0, %v1081
      %v1083 = vrot.slane %v1078, %v1082
      %v1085 = vadd.f32 %v1062, %v1083
      %v1086 = vadd.f32 %v1063, %v1083
      %v1087 = vadd.f32 %v1064, %v1083
      %v1088 = vadd.f32 %v1065, %v1083
      %v1089 = vadd.f32 %v1066, %v1083
      %v1090 = vadd.f32 %v1067, %v1083
      %v1091 = vadd.f32 %v1068, %v1083
      %v1092 = vadd.f32 %v1069, %v1083
      %v1093 = vadd.f32 %v1070, %v1083
      %v1094 = vadd.f32 %v1071, %v1083
      %v1095 = vadd.f32 %v1072, %v1083
      %v1096 = vadd.f32 %v1073, %v1083
      %v1097 = vadd.f32 %v1074, %v1083
      %v1098 = vadd.f32 %v1075, %v1083
      %v1099 = vadd.f32 %v1076, %v1083
      %v1100 = vadd.f32 %v1077, %v1083
      %v1101 = vmax.f32 %v1085, 0.0
      %v1102 = vmax.f32 %v1086, 0.0
      %v1103 = vmax.f32 %v1087, 0.0
      %v1104 = vmax.f32 %v1088, 0.0
      %v1105 = vmax.f32 %v1089, 0.0
      %v1106 = vmax.f32 %v1090, 0.0
      %v1107 = vmax.f32 %v1091, 0.0
      %v1108 = vmax.f32 %v1092, 0.0
      %v1109 = vmax.f32 %v1093, 0.0
      %v1110 = vmax.f32 %v1094, 0.0
      %v1111 = vmax.f32 %v1095, 0.0
      %v1112 = vmax.f32 %v1096, 0.0
      %v1113 = vmax.f32 %v1097, 0.0
      %v1114 = vmax.f32 %v1098, 0.0
      %v1115 = vmax.f32 %v1099, 0.0
      %v1116 = vmax.f32 %v1100, 0.0
      %v1117 = vpack.c.bf16 %v1102, %v1101
      %v1118 = vpack.c.bf16 %v1104, %v1103
      %v1119 = vpack.c.bf16 %v1106, %v1105
      %v1120 = vpack.c.bf16 %v1108, %v1107
      %v1121 = vpack.c.bf16 %v1110, %v1109
      %v1122 = vpack.c.bf16 %v1112, %v1111
      %v1123 = vpack.c.bf16 %v1114, %v1113
      %v1124 = vpack.c.bf16 %v1116, %v1115
      %v1133 = vunpack.c.l.b16 %v1117
      %v1134 = vunpack.c.h.b16 %v1117
      %v1135 = vunpack.c.l.b16 %v1118
      %v1136 = vunpack.c.h.b16 %v1118
      %v1137 = vunpack.c.l.b16 %v1119
      %v1138 = vunpack.c.h.b16 %v1119
      %v1139 = vunpack.c.l.b16 %v1120
      %v1140 = vunpack.c.h.b16 %v1120
      %v1141 = vunpack.c.l.b16 %v1121
      %v1142 = vunpack.c.h.b16 %v1121
      %v1143 = vunpack.c.l.b16 %v1122
      %v1144 = vunpack.c.h.b16 %v1122
      %v1145 = vunpack.c.l.b16 %v1123
      %v1146 = vunpack.c.h.b16 %v1123
      %v1147 = vunpack.c.l.b16 %v1124
      %v1148 = vunpack.c.h.b16 %v1124
      %v1149 = vpack.c.b16 %v1133, %v1133
      %v1150 = vpack.c.b16 %v1134, %v1134
      %v1151 = vpack.c.b16 %v1135, %v1135
      %v1152 = vpack.c.b16 %v1136, %v1136
      %v1153 = vpack.c.b16 %v1137, %v1137
      %v1154 = vpack.c.b16 %v1138, %v1138
      %v1155 = vpack.c.b16 %v1139, %v1139
      %v1156 = vpack.c.b16 %v1140, %v1140
      %v1157 = vpack.c.b16 %v1141, %v1141
      %v1158 = vpack.c.b16 %v1142, %v1142
      %v1159 = vpack.c.b16 %v1143, %v1143
      %v1160 = vpack.c.b16 %v1144, %v1144
      %v1161 = vpack.c.b16 %v1145, %v1145
      %v1162 = vpack.c.b16 %v1146, %v1146
      %v1163 = vpack.c.b16 %v1147, %v1147
      %v1164 = vpack.c.b16 %v1148, %v1148
      %vm1181 = vcmask 519168
      %1182 = vst.msk [vmem:[%s194] sm:$0xf] %vm1181, %v1149
      %1183 = vst.msk [vmem:[%s194 + $0x4] sm:$0xf] %vm1181, %v1150
      %1184 = vst.msk [vmem:[%s194 + $0x8] sm:$0xf] %vm1181, %v1151
      %1185 = vst.msk [vmem:[%s194 + $0xc] sm:$0xf] %vm1181, %v1152
      %1186 = vst.msk [vmem:[%s194 + $0x10] sm:$0xf] %vm1181, %v1153
      %1187 = vst.msk [vmem:[%s194 + $0x14] sm:$0xf] %vm1181, %v1154
      %1188 = vst.msk [vmem:[%s194 + $0x18] sm:$0xf] %vm1181, %v1155
      %1189 = vst.msk [vmem:[%s194 + $0x1c] sm:$0xf] %vm1181, %v1156
      %1190 = vst.msk [vmem:[%s194 + $0x20] sm:$0xf] %vm1181, %v1157
      %1191 = vst.msk [vmem:[%s194 + $0x24] sm:$0xf] %vm1181, %v1158
      %1192 = vst.msk [vmem:[%s194 + $0x28] sm:$0xf] %vm1181, %v1159
      %1193 = vst.msk [vmem:[%s194 + $0x2c] sm:$0xf] %vm1181, %v1160
      %1194 = vst.msk [vmem:[%s194 + $0x30] sm:$0xf] %vm1181, %v1161
      %1195 = vst.msk [vmem:[%s194 + $0x34] sm:$0xf] %vm1181, %v1162
      %1196 = vst.msk [vmem:[%s194 + $0x38] sm:$0xf] %vm1181, %v1163
      %1197 = vst.msk [vmem:[%s194 + $0x3c] sm:$0xf] %vm1181, %v1164
      %s1198 = smul.u32 8, %s19
      %p1199 = scmp.lt.s32.totalorder %s18, 1
      %s1200 = scalar_select %p1199, %s18, 1
      %p1201 = scmp.lt.s32.totalorder %s1198, 15
      %s1202 = scalar_select %p1201, %s1198, 15
      %s1203 = smul.addr %s1202, 2
      %s1204 = smul.addr %s1200, 32
      %s1205 = sadd.s32 %s1203, %s1204
      %s1206 = smul.addr %s1205, 4
      %s1207 = scalar_lea.vmem %s3, %s1206
      // Predicated region
      $region37: #{conv_backend_forward.6} parent=31 // pred_check
        %p1208 = pneg %p114
      $region38: #{conv_backend_forward.6} parent=31 // pred_check_branch
        %1210 = sbr.rel (%p1208) target = $region40
      $region39: #{conv_backend_forward.6} parent=31 // pred_region
        %s1211 = smul.u32 8, %s19
      $region40: #{conv_backend_forward.6} parent=31 // pred_fallthru
        _
    $region32: #{conv_backend_forward.6} parent=5 // pred_fallthru
      _
    %p1212 = scmp.le.s32.totalorder 2, %s9
    // Predicated region
    $region41: #{conv_backend_forward.6} parent=5 // pred_check
      %p1213 = pneg %p1212
    $region42: #{conv_backend_forward.6} parent=5 // pred_check_branch
      %1215 = sbr.rel (%p1213) target = $region44
    $region43: #{conv_backend_forward.6} parent=5 // pred_region
      %s1216 = ssub.s32 %s9, 2
      // Predicated region
      $region45: #{conv_backend_forward.6} parent=43 // pred_check
        %p1217 = pneg %p120
      $region46: #{conv_backend_forward.6} parent=43 // pred_check_branch
        %1219 = sbr.rel (%p1217) target = $region48
      $region47: #{conv_backend_forward.6} parent=43 // pred_region
        %s1220 = smul.u32 8, %s21
        %p1221 = scmp.lt.s32.totalorder %s20, 1
        %s1222 = scalar_select %p1221, %s20, 1
        %p1223 = scmp.lt.s32.totalorder %s1220, 15
        %s1224 = scalar_select %p1223, %s1220, 15
        %s1225 = smul.addr %s1224, 2
        %s1226 = smul.addr %s1222, 32
        %s1227 = sadd.s32 %s1225, %s1226
        %s1228 = smul.addr %s1227, 4
        %s1229 = scalar_lea.vmem %s3, %s1228
      $region48: #{conv_backend_forward.6} parent=43 // pred_fallthru
        _
    $region44: #{conv_backend_forward.6} parent=5 // pred_fallthru
      _
  $region6: #{conv_backend_forward.6} parent=0 // loop_footer
    %s13 = sadd.s32 1, %s9
  $region7: #{conv_backend_forward.6} parent=0 // loop_footer_branch
    %8 = sbr.rel target = $region3
  $region8: #{conv_backend_forward.6} parent=0 // loop_exit
    _

// kernel: conv_backend_forward.7
$region0: #{conv_backend_forward.7}
  #allocation0 [shape = 'u32[]', space=smem, size = 0x4, offset = 0x4, fixed_abs, tag = 'smem constant byte address 0x4 - core index']
  #allocation1 [shape = 'u32[144,128]{1,0:T(1,128)}', space=vmem, size = 0x12000, scoped, tag = 'internal scratch']
  #allocation2 [shape = 'bf16[18,16,192]{2,1,0:T(16,128)(2,1)}', space=vmem, size = 0x24000, scoped, tag = 'scratch operand']
  %s0 = inlined_call_operand.vmem [shape: bf16[2,16,16,64], index: 0, kind: input, shape index: {}]
  %s1 = inlined_call_operand.vmem [shape: bf16[3,192,64], index: 1, kind: input, shape index: {}]
  %s2 = inlined_call_operand.vmem [shape: f32[1,64], index: 2, kind: input, shape index: {}]
  %s3 = inlined_call_operand.vmem [shape: bf16[2,16,16,64], index: 3, kind: output, shape index: {}]
  %s4 = sld [smem:[#allocation0]]
  $region49: #{conv_backend_forward.7} parent=0
    _
  %s6 = ssub.s32 1, %s4
  %s7 = scalar_select 0, %s6, %s4
  loop: start=0, step=1, limit=6
  $region2: #{conv_backend_forward.7} parent=0 // loop_pre_header
    _
  $region3: #{conv_backend_forward.7} parent=0 // loop_header
    %s9 = sphi 0, %s13
    %p10 = scmp.ge.s32.totalorder %s9, 6
    %s16 = sphi 0, %s28
    %s17 = sphi 0, %s24
    %s18 = sphi 0, %s16
    %s19 = sphi 0, %s17
    %s20 = sphi 0, %s18
    %s21 = sphi 0, %s19
    %s31 = sphi 0, %s33
    %s34 = sphi 0, %s31
    %s35 = sphi 0, %s34
    %s51 = sphi 0, %s35
    %s55 = sphi 0, %s55
    %s57 = sphi 0, %s55
    %s58 = sphi 0, %s57
    %s72 = sphi 0, %s58
    %s76 = sphi 0, %s76
    %s78 = sphi 0, %s76
    %s79 = sphi 0, %s78
    %s93 = sphi 0, %s79
    %s101 = sphi 0, %s103
    %s104 = sphi 0, %s101
    %s105 = sphi 0, %s104
    %s121 = sphi 0, %s105
  $region4: #{conv_backend_forward.7} parent=0 // loop_header_branch
    %12 = sbr.rel (%p10) target = $region8
  $region5: #{conv_backend_forward.7} parent=0 // loop_body
    %s14 = ssub.s32 %s9, 1
    %s15 = ssub.s32 %s9, 2
    %s22 = sadd.s32 1, %s17
    %p23 = scmp.ge.s32.totalorder %s22, 2
    %s24 = scalar_select %p23, 0, %s22
    %s25 = sadd.s32 1, %s16
    %s26 = scalar_select %p23, %s25, %s16
    %p27 = scmp.ge.s32.totalorder %s26, 2
    %s28 = scalar_select %p27, 0, %s26
    %s29 = ssub.s32 %s16, %s28
    %p30 = scmp.eq.s32.totalorder %s29, 0
    %s32 = sadd.s32 %s31, 1
    %s33 = scalar_select %p30, %s31, %s32
    %p36 = pneg %p30
    %p37 = scmp.eq.s32.totalorder %s9, 3
    %p38 = por %p36, %p37
    %p39 = scmp.ne.s32.totalorder %s31, %s34
    %p40 = scmp.eq.s32.totalorder %s9, 0
    %p41 = por %p39, %p40
    %p42 = scmp.ne.s32.totalorder %s31, %s34
    %p43 = scmp.eq.s32.totalorder %s14, 3
    %p44 = por %p42, %p43
    %p45 = scmp.ne.s32.totalorder %s34, %s35
    %p46 = scmp.eq.s32.totalorder %s14, 0
    %p47 = por %p45, %p46
    %p48 = scmp.ne.s32.totalorder %s34, %s35
    %p49 = scmp.eq.s32.totalorder %s15, 3
    %p50 = por %p48, %p49
    %p52 = scmp.ne.s32.totalorder %s35, %s51
    %p53 = scmp.eq.s32.totalorder %s15, 0
    %p54 = por %p52, %p53
    %s56 = sadd.s32 %s55, 1
    %p59 = scmp.eq.s32.totalorder %s9, 3
    %p60 = scmp.ne.s32.totalorder %s55, %s57
    %p61 = scmp.eq.s32.totalorder %s9, 0
    %p62 = por %p60, %p61
    %p63 = scmp.ne.s32.totalorder %s55, %s57
    %p64 = scmp.eq.s32.totalorder %s14, 3
    %p65 = por %p63, %p64
    %p66 = scmp.ne.s32.totalorder %s57, %s58
    %p67 = scmp.eq.s32.totalorder %s14, 0
    %p68 = por %p66, %p67
    %p69 = scmp.ne.s32.totalorder %s57, %s58
    %p70 = scmp.eq.s32.totalorder %s15, 3
    %p71 = por %p69, %p70
    %p73 = scmp.ne.s32.totalorder %s58, %s72
    %p74 = scmp.eq.s32.totalorder %s15, 0
    %p75 = por %p73, %p74
    %s77 = sadd.s32 %s76, 1
    %p80 = scmp.eq.s32.totalorder %s9, 3
    %p81 = scmp.ne.s32.totalorder %s76, %s78
    %p82 = scmp.eq.s32.totalorder %s9, 0
    %p83 = por %p81, %p82
    %p84 = scmp.ne.s32.totalorder %s76, %s78
    %p85 = scmp.eq.s32.totalorder %s14, 3
    %p86 = por %p84, %p85
    %p87 = scmp.ne.s32.totalorder %s78, %s79
    %p88 = scmp.eq.s32.totalorder %s14, 0
    %p89 = por %p87, %p88
    %p90 = scmp.ne.s32.totalorder %s78, %s79
    %p91 = scmp.eq.s32.totalorder %s15, 3
    %p92 = por %p90, %p91
    %p94 = scmp.ne.s32.totalorder %s79, %s93
    %p95 = scmp.eq.s32.totalorder %s15, 0
    %p96 = por %p94, %p95
    %s97 = ssub.s32 %s16, %s28
    %s98 = ssub.s32 %s17, %s24
    %s99 = sor.u32 %s97, %s98
    %p100 = scmp.eq.s32.totalorder %s99, 0
    %s102 = sadd.s32 %s101, 1
    %s103 = scalar_select %p100, %s101, %s102
    %p106 = pneg %p100
    %p107 = scmp.eq.s32.totalorder %s9, 3
    %p108 = por %p106, %p107
    %p109 = scmp.ne.s32.totalorder %s101, %s104
    %p110 = scmp.eq.s32.totalorder %s9, 0
    %p111 = por %p109, %p110
    %p112 = scmp.ne.s32.totalorder %s101, %s104
    %p113 = scmp.eq.s32.totalorder %s14, 3
    %p114 = por %p112, %p113
    %p115 = scmp.ne.s32.totalorder %s104, %s105
    %p116 = scmp.eq.s32.totalorder %s14, 0
    %p117 = por %p115, %p116
    %p118 = scmp.ne.s32.totalorder %s104, %s105
    %p119 = scmp.eq.s32.totalorder %s15, 3
    %p120 = por %p118, %p119
    %p122 = scmp.ne.s32.totalorder %s105, %s121
    %p123 = scmp.eq.s32.totalorder %s15, 0
    %p124 = por %p122, %p123
    %p125 = scmp.le.s32.totalorder 1, %s9
    %p126 = scmp.lt.s32.totalorder %s9, 5
    %p127 = pnand %p125, %p126
    %p128 = pneg %p127
    // Predicated region
    $region9: #{conv_backend_forward.7} parent=5 // pred_check
      _
    $region10: #{conv_backend_forward.7} parent=5 // pred_check_branch
      %130 = sbr.rel (%p127) target = $region12
    $region11: #{conv_backend_forward.7} parent=5 // pred_region
      %s131 = ssub.s32 %s9, 1
      // Predicated region
      $region13: #{conv_backend_forward.7} parent=11 // pred_check
        %p132 = pneg %p68
      $region14: #{conv_backend_forward.7} parent=11 // pred_check_branch
        %134 = sbr.rel (%p132) target = $region16
      $region15: #{conv_backend_forward.7} parent=11 // pred_region
        _
      $region16: #{conv_backend_forward.7} parent=11 // pred_fallthru
        _
      // Predicated region
      $region17: #{conv_backend_forward.7} parent=11 // pred_check
        %p135 = pneg %p89
      $region18: #{conv_backend_forward.7} parent=11 // pred_check_branch
        %137 = sbr.rel (%p135) target = $region20
      $region19: #{conv_backend_forward.7} parent=11 // pred_region
        _
      $region20: #{conv_backend_forward.7} parent=11 // pred_fallthru
        _
    $region12: #{conv_backend_forward.7} parent=5 // pred_fallthru
      _
    %p138 = scmp.lt.s32.totalorder %s9, 4
    // Predicated region
    $region21: #{conv_backend_forward.7} parent=5 // pred_check
      %p139 = pneg %p138
    $region22: #{conv_backend_forward.7} parent=5 // pred_check_branch
      %141 = sbr.rel (%p139) target = $region24
    $region23: #{conv_backend_forward.7} parent=5 // pred_region
      // Predicated region
      $region25: #{conv_backend_forward.7} parent=23 // pred_check
        %p142 = pneg %p41
      $region26: #{conv_backend_forward.7} parent=23 // pred_check_branch
        %144 = sbr.rel (%p142) target = $region28
      $region27: #{conv_backend_forward.7} parent=23 // pred_region
        %p145 = scmp.lt.s32.totalorder %s16, 1
        %s146 = scalar_select %p145, %s16, 1
        %s147 = smul.addr %s146, 32
        %s148 = smul.addr %s147, 4
        %s149 = scalar_lea.vmem %s0, %s148
      $region28: #{conv_backend_forward.7} parent=23 // pred_fallthru
        _
    $region24: #{conv_backend_forward.7} parent=5 // pred_fallthru
      _
    %p150 = scmp.le.s32.totalorder 1, %s9
    %p151 = scmp.lt.s32.totalorder %s9, 5
    %p152 = pnand %p150, %p151
    %p153 = pneg %p152
    // Predicated region
    $region29: #{conv_backend_forward.7} parent=5 // pred_check
      _
    $region30: #{conv_backend_forward.7} parent=5 // pred_check_branch
      %155 = sbr.rel (%p152) target = $region32
    $region31: #{conv_backend_forward.7} parent=5 // pred_region
      %s156 = ssub.s32 %s9, 1
      %p157 = scmp.lt.s32.totalorder %s18, 1
      %s158 = scalar_select %p157, %s18, 1
      %s159 = smul.addr %s158, 32
      %s160 = smul.addr %s159, 4
      %s161 = scalar_lea.vmem %s0, %s160
      %p162 = pneg %p47
      %p163 = pneg %p44
      %p164 = pneg %p68
      %p165 = pneg %p65
      %p166 = pneg %p89
      %p167 = pneg %p86
      %p168 = pneg %p117
      %p169 = pneg %p114
      %s170 = smul.u32 8, %s19
      %p171 = scmp.lt.s32.totalorder %s18, 1
      %s172 = scalar_select %p171, %s18, 1
      %p173 = scmp.lt.s32.totalorder %s170, 15
      %s174 = scalar_select %p173, %s170, 15
      %s175 = smul.addr %s174, 2
      %s176 = smul.addr %s172, 32
      %s177 = sadd.s32 %s175, %s176
      %s178 = smul.addr %s177, 4
      %s179 = scalar_lea.vmem %s3, %s178
      %p180 = scmp.lt.s32.totalorder %s18, 1
      %s181 = scalar_select %p180, %s18, 1
      %s182 = smul.addr %s181, 32
      %s183 = smul.addr %s182, 4
      %s184 = scalar_lea.vmem %s0, %s183
      %s185 = smul.u32 8, %s19
      %p186 = scmp.lt.s32.totalorder %s18, 1
      %s187 = scalar_select %p186, %s18, 1
      %p188 = scmp.lt.s32.totalorder %s185, 15
      %s189 = scalar_select %p188, %s185, 15
      %s190 = smul.addr %s189, 2
      %s191 = smul.addr %s187, 32
      %s192 = sadd.s32 %s190, %s191
      %s193 = smul.addr %s192, 4
      %s194 = scalar_lea.vmem %s3, %s193
      %s195 = smul.u32 8, %s19
      %p197 = scmp.eq.s32.totalorder %s19, 0
      // Predicated region
      $region33: #{conv_backend_forward.7} parent=31 // pred_check
        %p198 = pneg %p197
      $region34: #{conv_backend_forward.7} parent=31 // pred_check_branch
        %200 = sbr.rel (%p198) target = $region36
      $region35: #{conv_backend_forward.7} parent=31 // pred_region
        %v201 = vld [vmem:[%s184] sm:$0xf]
        %v202 = vld [vmem:[%s184 + $0x4] sm:$0xf]
        %v203 = vld [vmem:[%s184 + $0x8] sm:$0xf]
        %v204 = vld [vmem:[%s184 + $0xc] sm:$0xf]
        %v205 = vld [vmem:[%s184 + $0x10] sm:$0xf]
        %v206 = vld [vmem:[%s184 + $0x14] sm:$0xf]
        %v207 = vld [vmem:[%s184 + $0x18] sm:$0xf]
        %v208 = vld [vmem:[%s184 + $0x1c] sm:$0xf]
        %v209 = vld [vmem:[%s184 + $0x20] sm:$0xf]
        %v210 = vld [vmem:[%s184 + $0x24] sm:$0xf]
        %v211 = vld [vmem:[%s184 + $0x28] sm:$0xf]
        %v212 = vld [vmem:[%s184 + $0x2c] sm:$0xf]
        %v213 = vld [vmem:[%s184 + $0x30] sm:$0xf]
        %v214 = vld [vmem:[%s184 + $0x34] sm:$0xf]
        %v215 = vld [vmem:[%s184 + $0x38] sm:$0xf]
        %v216 = vld [vmem:[%s184 + $0x3c] sm:$0xf]
        %v217 = vld [vmem:[%s184 + $0x40] sm:$0xf]
        %v218 = vld [vmem:[%s184 + $0x44] sm:$0xf]
        %v219 = vld [vmem:[%s184 + $0x48] sm:$0xf]
        %v220 = vld [vmem:[%s184 + $0x4c] sm:$0xf]
        %v221 = vld [vmem:[%s184 + $0x50] sm:$0xf]
        %v222 = vld [vmem:[%s184 + $0x54] sm:$0xf]
        %v223 = vld [vmem:[%s184 + $0x58] sm:$0xf]
        %v224 = vld [vmem:[%s184 + $0x5c] sm:$0xf]
        %v225 = vld [vmem:[%s184 + $0x60] sm:$0xf]
        %v226 = vld [vmem:[%s184 + $0x64] sm:$0xf]
        %v227 = vld [vmem:[%s184 + $0x68] sm:$0xf]
        %v228 = vld [vmem:[%s184 + $0x6c] sm:$0xf]
        %v229 = vld [vmem:[%s184 + $0x70] sm:$0xf]
        %v230 = vld [vmem:[%s184 + $0x74] sm:$0xf]
        %v231 = vld [vmem:[%s184 + $0x78] sm:$0xf]
        %v232 = vld [vmem:[%s184 + $0x7c] sm:$0xf]
        %v265 = vunpack.c.l.b16 %v201
        %v266 = vunpack.c.l.b16 %v202
        %v267 = vunpack.c.l.b16 %v203
        %v268 = vunpack.c.l.b16 %v204
        %v269 = vunpack.c.l.b16 %v205
        %v270 = vunpack.c.l.b16 %v206
        %v271 = vunpack.c.l.b16 %v207
        %v272 = vunpack.c.l.b16 %v208
        %v273 = vunpack.c.l.b16 %v209
        %v274 = vunpack.c.l.b16 %v210
        %v275 = vunpack.c.l.b16 %v211
        %v276 = vunpack.c.l.b16 %v212
        %v277 = vunpack.c.l.b16 %v213
        %v278 = vunpack.c.l.b16 %v214
        %v279 = vunpack.c.l.b16 %v215
        %v280 = vunpack.c.l.b16 %v216
        %v281 = vunpack.c.l.b16 %v217
        %v282 = vunpack.c.l.b16 %v218
        %v283 = vunpack.c.l.b16 %v219
        %v284 = vunpack.c.l.b16 %v220
        %v285 = vunpack.c.l.b16 %v221
        %v286 = vunpack.c.l.b16 %v222
        %v287 = vunpack.c.l.b16 %v223
        %v288 = vunpack.c.l.b16 %v224
        %v289 = vunpack.c.l.b16 %v225
        %v290 = vunpack.c.l.b16 %v226
        %v291 = vunpack.c.l.b16 %v227
        %v292 = vunpack.c.l.b16 %v228
        %v293 = vunpack.c.l.b16 %v229
        %v294 = vunpack.c.l.b16 %v230
        %v295 = vunpack.c.l.b16 %v231
        %v296 = vunpack.c.l.b16 %v232
        %v297 = vpack.c.b16 %v266, %v265
        %v298 = vpack.c.b16 %v268, %v267
        %v299 = vpack.c.b16 %v270, %v269
        %v300 = vpack.c.b16 %v272, %v271
        %v301 = vpack.c.b16 %v274, %v273
        %v302 = vpack.c.b16 %v276, %v275
        %v303 = vpack.c.b16 %v278, %v277
        %v304 = vpack.c.b16 %v280, %v279
        %v305 = vpack.c.b16 %v282, %v281
        %v306 = vpack.c.b16 %v284, %v283
        %v307 = vpack.c.b16 %v286, %v285
        %v308 = vpack.c.b16 %v288, %v287
        %v309 = vpack.c.b16 %v290, %v289
        %v310 = vpack.c.b16 %v292, %v291
        %v311 = vpack.c.b16 %v294, %v293
        %v312 = vpack.c.b16 %v296, %v295
        %v314 = vshrl.u32 %v297, 16
        %v316 = vrot.slane %v314, 7
        %v317 = vshll.u32 %v297, 16
        %v319 = vor.u32 %v316, %v317
        %v321 = vshrl.u32 %v298, 16
        %v323 = vrot.slane %v321, 7
        %v324 = vshll.u32 %v298, 16
        %v326 = vor.u32 %v323, %v324
        %v328 = vshrl.u32 %v299, 16
        %v330 = vrot.slane %v328, 7
        %v331 = vshll.u32 %v299, 16
        %v333 = vor.u32 %v330, %v331
        %v335 = vshrl.u32 %v300, 16
        %v337 = vrot.slane %v335, 7
        %v338 = vshll.u32 %v300, 16
        %v340 = vor.u32 %v337, %v338
        %v342 = vshrl.u32 %v301, 16
        %v344 = vrot.slane %v342, 7
        %v345 = vshll.u32 %v301, 16
        %v347 = vor.u32 %v344, %v345
        %v349 = vshrl.u32 %v302, 16
        %v351 = vrot.slane %v349, 7
        %v352 = vshll.u32 %v302, 16
        %v354 = vor.u32 %v351, %v352
        %v356 = vshrl.u32 %v303, 16
        %v358 = vrot.slane %v356, 7
        %v359 = vshll.u32 %v303, 16
        %v361 = vor.u32 %v358, %v359
        %v363 = vshrl.u32 %v304, 16
        %v365 = vrot.slane %v363, 7
        %v366 = vshll.u32 %v304, 16
        %v368 = vor.u32 %v365, %v366
        %v370 = vshrl.u32 %v305, 16
        %v372 = vrot.slane %v370, 7
        %v373 = vshll.u32 %v305, 16
        %v375 = vor.u32 %v372, %v373
        %v377 = vshrl.u32 %v306, 16
        %v379 = vrot.slane %v377, 7
        %v380 = vshll.u32 %v306, 16
        %v382 = vor.u32 %v379, %v380
        %v384 = vshrl.u32 %v307, 16
        %v386 = vrot.slane %v384, 7
        %v387 = vshll.u32 %v307, 16
        %v389 = vor.u32 %v386, %v387
        %v391 = vshrl.u32 %v308, 16
        %v393 = vrot.slane %v391, 7
        %v394 = vshll.u32 %v308, 16
        %v396 = vor.u32 %v393, %v394
        %v398 = vshrl.u32 %v309, 16
        %v400 = vrot.slane %v398, 7
        %v401 = vshll.u32 %v309, 16
        %v403 = vor.u32 %v400, %v401
        %v405 = vshrl.u32 %v310, 16
        %v407 = vrot.slane %v405, 7
        %v408 = vshll.u32 %v310, 16
        %v410 = vor.u32 %v407, %v408
        %v412 = vshrl.u32 %v311, 16
        %v414 = vrot.slane %v412, 7
        %v415 = vshll.u32 %v311, 16
        %v417 = vor.u32 %v414, %v415
        %v419 = vshrl.u32 %v312, 16
        %v421 = vrot.slane %v419, 7
        %v422 = vshll.u32 %v312, 16
        %v424 = vor.u32 %v421, %v422
        %vm441 = vcmask 1040384
        %vm442 = vsmask.f32 256
        %vm443 = vmand %vm441, %vm442
        %v444 = vsel %vm443, 0, %v319
        %v445 = vsel %vm443, 0, %v326
        %v446 = vsel %vm443, 0, %v333
        %v447 = vsel %vm443, 0, %v340
        %v448 = vsel %vm443, 0, %v347
        %v449 = vsel %vm443, 0, %v354
        %v450 = vsel %vm443, 0, %v361
        %v451 = vsel %vm443, 0, %v368
        %v452 = vsel %vm443, 0, %v375
        %v453 = vsel %vm443, 0, %v382
        %v454 = vsel %vm443, 0, %v389
        %v455 = vsel %vm443, 0, %v396
        %v456 = vsel %vm443, 0, %v403
        %v457 = vsel %vm443, 0, %v410
        %v458 = vsel %vm443, 0, %v417
        %v459 = vsel %vm443, 0, %v424
        %v460 = vrot.slane %v317, 1
        %v461 = vor.u32 %v314, %v460
        %v462 = vrot.slane %v324, 1
        %v463 = vor.u32 %v321, %v462
        %v464 = vrot.slane %v331, 1
        %v465 = vor.u32 %v328, %v464
        %v466 = vrot.slane %v338, 1
        %v467 = vor.u32 %v335, %v466
        %v468 = vrot.slane %v345, 1
        %v469 = vor.u32 %v342, %v468
        %v470 = vrot.slane %v352, 1
        %v471 = vor.u32 %v349, %v470
        %v472 = vrot.slane %v359, 1
        %v473 = vor.u32 %v356, %v472
        %v474 = vrot.slane %v366, 1
        %v475 = vor.u32 %v363, %v474
        %v476 = vrot.slane %v373, 1
        %v477 = vor.u32 %v370, %v476
        %v478 = vrot.slane %v380, 1
        %v479 = vor.u32 %v377, %v478
        %v480 = vrot.slane %v387, 1
        %v481 = vor.u32 %v384, %v480
        %v482 = vrot.slane %v394, 1
        %v483 = vor.u32 %v391, %v482
        %v484 = vrot.slane %v401, 1
        %v485 = vor.u32 %v398, %v484
        %v486 = vrot.slane %v408, 1
        %v487 = vor.u32 %v405, %v486
        %v488 = vrot.slane %v415, 1
        %v489 = vor.u32 %v412, %v488
        %v490 = vrot.slane %v422, 1
        %v491 = vor.u32 %v419, %v490
        %vm508 = vcmask 1047552
        %vm509 = vsmask.f32 7424
        %vm510 = vmand %vm508, %vm509
        %v511 = vsel %vm510, %v461, 0
        %v512 = vsel %vm510, %v463, 0
        %v513 = vsel %vm510, %v465, 0
        %v514 = vsel %vm510, %v467, 0
        %v515 = vsel %vm510, %v469, 0
        %v516 = vsel %vm510, %v471, 0
        %v517 = vsel %vm510, %v473, 0
        %v518 = vsel %vm510, %v475, 0
        %v519 = vsel %vm510, %v477, 0
        %v520 = vsel %vm510, %v479, 0
        %v521 = vsel %vm510, %v481, 0
        %v522 = vsel %vm510, %v483, 0
        %v523 = vsel %vm510, %v485, 0
        %v524 = vsel %vm510, %v487, 0
        %v525 = vsel %vm510, %v489, 0
        %v526 = vsel %vm510, %v491, 0
        %s527 = scalar_lea.vmem [#allocation2], 16
        %vm528 = vcmask 523264
        %529 = vst.msk [vmem:[%s527] sm:$0xff] %vm528, %v444
        %530 = vst.msk [vmem:[%s527 + $0x10] sm:$0xff] %vm528, %v445
        %531 = vst.msk [vmem:[%s527 + $0x20] sm:$0xff] %vm528, %v446
        %532 = vst.msk [vmem:[%s527 + $0x30] sm:$0xff] %vm528, %v447
        %533 = vst.msk [vmem:[%s527 + $0x40] sm:$0xff] %vm528, %v448
        %534 = vst.msk [vmem:[%s527 + $0x50] sm:$0xff] %vm528, %v449
        %535 = vst.msk [vmem:[%s527 + $0x60] sm:$0xff] %vm528, %v450
        %536 = vst.msk [vmem:[%s527 + $0x70] sm:$0xff] %vm528, %v451
        %537 = vst.msk [vmem:[%s527 + $0x80] sm:$0xff] %vm528, %v452
        %538 = vst.msk [vmem:[%s527 + $0x90] sm:$0xff] %vm528, %v453
        %539 = vst.msk [vmem:[%s527 + $0xa0] sm:$0xff] %vm528, %v454
        %540 = vst.msk [vmem:[%s527 + $0xb0] sm:$0xff] %vm528, %v455
        %541 = vst.msk [vmem:[%s527 + $0xc0] sm:$0xff] %vm528, %v456
        %542 = vst.msk [vmem:[%s527 + $0xd0] sm:$0xff] %vm528, %v457
        %543 = vst.msk [vmem:[%s527 + $0xe0] sm:$0xff] %vm528, %v458
        %544 = vst.msk [vmem:[%s527 + $0xf0] sm:$0xff] %vm528, %v459
        %545 = vrot.lane.b32.xlu0 %v297, 64
        %v546 = vpop.permute.xlu0 %545
        %547 = vrot.lane.b32.xlu0 %v298, 64
        %v548 = vpop.permute.xlu0 %547
        %549 = vrot.lane.b32.xlu0 %v299, 64
        %v550 = vpop.permute.xlu0 %549
        %551 = vrot.lane.b32.xlu0 %v300, 64
        %v552 = vpop.permute.xlu0 %551
        %553 = vrot.lane.b32.xlu0 %v301, 64
        %v554 = vpop.permute.xlu0 %553
        %555 = vrot.lane.b32.xlu0 %v302, 64
        %v556 = vpop.permute.xlu0 %555
        %557 = vrot.lane.b32.xlu0 %v303, 64
        %v558 = vpop.permute.xlu0 %557
        %559 = vrot.lane.b32.xlu0 %v304, 64
        %v560 = vpop.permute.xlu0 %559
        %561 = vrot.lane.b32.xlu0 %v305, 64
        %v562 = vpop.permute.xlu0 %561
        %563 = vrot.lane.b32.xlu0 %v306, 64
        %v564 = vpop.permute.xlu0 %563
        %565 = vrot.lane.b32.xlu0 %v307, 64
        %v566 = vpop.permute.xlu0 %565
        %567 = vrot.lane.b32.xlu0 %v308, 64
        %v568 = vpop.permute.xlu0 %567
        %569 = vrot.lane.b32.xlu0 %v309, 64
        %v570 = vpop.permute.xlu0 %569
        %571 = vrot.lane.b32.xlu0 %v310, 64
        %v572 = vpop.permute.xlu0 %571
        %573 = vrot.lane.b32.xlu0 %v311, 64
        %v574 = vpop.permute.xlu0 %573
        %575 = vrot.lane.b32.xlu0 %v312, 64
        %v576 = vpop.permute.xlu0 %575
        %vm593 = vcmask 1048064
        %594 = vst.msk [vmem:[%s527] sm:$0xff] %vm593, %v546
        %595 = vst.msk [vmem:[%s527 + $0x10] sm:$0xff] %vm593, %v548
        %596 = vst.msk [vmem:[%s527 + $0x20] sm:$0xff] %vm593, %v550
        %597 = vst.msk [vmem:[%s527 + $0x30] sm:$0xff] %vm593, %v552
        %598 = vst.msk [vmem:[%s527 + $0x40] sm:$0xff] %vm593, %v554
        %599 = vst.msk [vmem:[%s527 + $0x50] sm:$0xff] %vm593, %v556
        %600 = vst.msk [vmem:[%s527 + $0x60] sm:$0xff] %vm593, %v558
        %601 = vst.msk [vmem:[%s527 + $0x70] sm:$0xff] %vm593, %v560
        %602 = vst.msk [vmem:[%s527 + $0x80] sm:$0xff] %vm593, %v562
        %603 = vst.msk [vmem:[%s527 + $0x90] sm:$0xff] %vm593, %v564
        %604 = vst.msk [vmem:[%s527 + $0xa0] sm:$0xff] %vm593, %v566
        %605 = vst.msk [vmem:[%s527 + $0xb0] sm:$0xff] %vm593, %v568
        %606 = vst.msk [vmem:[%s527 + $0xc0] sm:$0xff] %vm593, %v570
        %607 = vst.msk [vmem:[%s527 + $0xd0] sm:$0xff] %vm593, %v572
        %608 = vst.msk [vmem:[%s527 + $0xe0] sm:$0xff] %vm593, %v574
        %609 = vst.msk [vmem:[%s527 + $0xf0] sm:$0xff] %vm593, %v576
        %610 = vst.msk [vmem:[%s527 + $0x8] sm:$0xff] %vm528, %v511
        %611 = vst.msk [vmem:[%s527 + $0x18] sm:$0xff] %vm528, %v512
        %612 = vst.msk [vmem:[%s527 + $0x28] sm:$0xff] %vm528, %v513
        %613 = vst.msk [vmem:[%s527 + $0x38] sm:$0xff] %vm528, %v514
        %614 = vst.msk [vmem:[%s527 + $0x48] sm:$0xff] %vm528, %v515
        %615 = vst.msk [vmem:[%s527 + $0x58] sm:$0xff] %vm528, %v516
        %616 = vst.msk [vmem:[%s527 + $0x68] sm:$0xff] %vm528, %v517
        %617 = vst.msk [vmem:[%s527 + $0x78] sm:$0xff] %vm528, %v518
        %618 = vst.msk [vmem:[%s527 + $0x88] sm:$0xff] %vm528, %v519
        %619 = vst.msk [vmem:[%s527 + $0x98] sm:$0xff] %vm528, %v520
        %620 = vst.msk [vmem:[%s527 + $0xa8] sm:$0xff] %vm528, %v521
        %621 = vst.msk [vmem:[%s527 + $0xb8] sm:$0xff] %vm528, %v522
        %622 = vst.msk [vmem:[%s527 + $0xc8] sm:$0xff] %vm528, %v523
        %623 = vst.msk [vmem:[%s527 + $0xd8] sm:$0xff] %vm528, %v524
        %624 = vst.msk [vmem:[%s527 + $0xe8] sm:$0xff] %vm528, %v525
        %625 = vst.msk [vmem:[%s527 + $0xf8] sm:$0xff] %vm528, %v526
        %626 = vst [vmem:[#allocation2] sm:$0xff] 0
        %627 = vst.msk [vmem:[#allocation2 + $0x8] sm:$0xff] %vm528, 0
        %s628 = scalar_lea.vmem [#allocation2], 272
        %629 = vst [vmem:[%s628] sm:$0xff] 0
        %630 = vst.msk [vmem:[%s628 + $0x8] sm:$0xff] %vm528, 0
      $region36: #{conv_backend_forward.7} parent=31 // pred_fallthru
        _
      %s631 = smul.u32 %s19, 8
      %s632 = smul.u32 %s631, 2
      %s633 = smul.addr %s632, 8
      %s634 = scalar_lea.vmem [#allocation2], %s633
      %v635 = vld [vmem:[%s634] sm:$0xff]
      %v636 = vld [vmem:[%s634 + $0x8] sm:$0xff]
      %v637 = vld [vmem:[%s634 + $0x10] sm:$0xff]
      %v638 = vld [vmem:[%s634 + $0x18] sm:$0xff]
      %v639 = vld [vmem:[%s634 + $0x20] sm:$0xff]
      %v640 = vld [vmem:[%s634 + $0x28] sm:$0xff]
      %v641 = vld [vmem:[%s634 + $0x30] sm:$0xff]
      %v642 = vld [vmem:[%s634 + $0x38] sm:$0xff]
      %v643 = vld [vmem:[%s634 + $0x40] sm:$0xff]
      %v644 = vld [vmem:[%s634 + $0x48] sm:$0xff]
      %v645 = vld [vmem:[%s634 + $0x50] sm:$0xff]
      %v646 = vld [vmem:[%s634 + $0x58] sm:$0xff]
      %v647 = vld [vmem:[%s634 + $0x60] sm:$0xff]
      %v648 = vld [vmem:[%s634 + $0x68] sm:$0xff]
      %v649 = vld [vmem:[%s634 + $0x70] sm:$0xff]
      %v650 = vld [vmem:[%s634 + $0x78] sm:$0xff]
      %v651 = vld [vmem:[%s1] sm:$0xf]
      %v652 = vld [vmem:[%s1 + $0x4] sm:$0xf]
      %v653 = vld [vmem:[%s1 + $0x8] sm:$0xf]
      %v654 = vld [vmem:[%s1 + $0xc] sm:$0xf]
      %v655 = vld [vmem:[%s1 + $0x10] sm:$0xf]
      %v656 = vld [vmem:[%s1 + $0x14] sm:$0xf]
      %v657 = vld [vmem:[%s1 + $0x18] sm:$0xf]
      %v658 = vld [vmem:[%s1 + $0x1c] sm:$0xf]
      %v659 = vld [vmem:[%s1 + $0x20] sm:$0xf]
      %v660 = vld [vmem:[%s1 + $0x24] sm:$0xf]
      %v661 = vld [vmem:[%s1 + $0x28] sm:$0xf]
      %v662 = vld [vmem:[%s1 + $0x2c] sm:$0xf]
      %v663 = vld [vmem:[%s1 + $0x30] sm:$0xf]
      %v664 = vld [vmem:[%s1 + $0x34] sm:$0xf]
      %v665 = vld [vmem:[%s1 + $0x38] sm:$0xf]
      %v666 = vld [vmem:[%s1 + $0x3c] sm:$0xf]
      %v667 = vld [vmem:[%s1 + $0x40] sm:$0xf]
      %v668 = vld [vmem:[%s1 + $0x44] sm:$0xf]
      %v669 = vld [vmem:[%s1 + $0x48] sm:$0xf]
      %v670 = vld [vmem:[%s1 + $0x4c] sm:$0xf]
      %v671 = vld [vmem:[%s1 + $0x50] sm:$0xf]
      %v672 = vld [vmem:[%s1 + $0x54] sm:$0xf]
      %v673 = vld [vmem:[%s1 + $0x58] sm:$0xf]
      %v674 = vld [vmem:[%s1 + $0x5c] sm:$0xf]
      %s675 = sadd.s32 %s631, 1
      %s676 = smul.u32 %s675, 2
      %s677 = smul.addr %s676, 8
      %s678 = scalar_lea.vmem [#allocation2], %s677
      %v679 = vld [vmem:[%s678] sm:$0xff]
      %v680 = vld [vmem:[%s678 + $0x8] sm:$0xff]
      %v681 = vld [vmem:[%s678 + $0x10] sm:$0xff]
      %v682 = vld [vmem:[%s678 + $0x18] sm:$0xff]
      %v683 = vld [vmem:[%s678 + $0x20] sm:$0xff]
      %v684 = vld [vmem:[%s678 + $0x28] sm:$0xff]
      %v685 = vld [vmem:[%s678 + $0x30] sm:$0xff]
      %v686 = vld [vmem:[%s678 + $0x38] sm:$0xff]
      %v687 = vld [vmem:[%s678 + $0x40] sm:$0xff]
      %v688 = vld [vmem:[%s678 + $0x48] sm:$0xff]
      %v689 = vld [vmem:[%s678 + $0x50] sm:$0xff]
      %v690 = vld [vmem:[%s678 + $0x58] sm:$0xff]
      %v691 = vld [vmem:[%s678 + $0x60] sm:$0xff]
      %v692 = vld [vmem:[%s678 + $0x68] sm:$0xff]
      %v693 = vld [vmem:[%s678 + $0x70] sm:$0xff]
      %v694 = vld [vmem:[%s678 + $0x78] sm:$0xff]
      %s695 = scalar_lea.vmem %s1, 96
      %v696 = vld [vmem:[%s695] sm:$0xf]
      %v697 = vld [vmem:[%s695 + $0x4] sm:$0xf]
      %v698 = vld [vmem:[%s695 + $0x8] sm:$0xf]
      %v699 = vld [vmem:[%s695 + $0xc] sm:$0xf]
      %v700 = vld [vmem:[%s695 + $0x10] sm:$0xf]
      %v701 = vld [vmem:[%s695 + $0x14] sm:$0xf]
      %v702 = vld [vmem:[%s695 + $0x18] sm:$0xf]
      %v703 = vld [vmem:[%s695 + $0x1c] sm:$0xf]
      %v704 = vld [vmem:[%s695 + $0x20] sm:$0xf]
      %v705 = vld [vmem:[%s695 + $0x24] sm:$0xf]
      %v706 = vld [vmem:[%s695 + $0x28] sm:$0xf]
      %v707 = vld [vmem:[%s695 + $0x2c] sm:$0xf]
      %v708 = vld [vmem:[%s695 + $0x30] sm:$0xf]
      %v709 = vld [vmem:[%s695 + $0x34] sm:$0xf]
      %v710 = vld [vmem:[%s695 + $0x38] sm:$0xf]
      %v711 = vld [vmem:[%s695 + $0x3c] sm:$0xf]
      %v712 = vld [vmem:[%s695 + $0x40] sm:$0xf]
      %v713 = vld [vmem:[%s695 + $0x44] sm:$0xf]
      %v714 = vld [vmem:[%s695 + $0x48] sm:$0xf]
      %v715 = vld [vmem:[%s695 + $0x4c] sm:$0xf]
      %v716 = vld [vmem:[%s695 + $0x50] sm:$0xf]
      %v717 = vld [vmem:[%s695 + $0x54] sm:$0xf]
      %v718 = vld [vmem:[%s695 + $0x58] sm:$0xf]
      %v719 = vld [vmem:[%s695 + $0x5c] sm:$0xf]
      %v744 = vunpack.c.l.b16 %v696
      %v745 = vunpack.c.l.b16 %v697
      %v746 = vunpack.c.l.b16 %v698
      %v747 = vunpack.c.l.b16 %v699
      %v748 = vunpack.c.l.b16 %v700
      %v749 = vunpack.c.l.b16 %v701
      %v750 = vunpack.c.l.b16 %v702
      %v751 = vunpack.c.l.b16 %v703
      %v752 = vunpack.c.l.b16 %v704
      %v753 = vunpack.c.l.b16 %v705
      %v754 = vunpack.c.l.b16 %v706
      %v755 = vunpack.c.l.b16 %v707
      %v756 = vunpack.c.l.b16 %v708
      %v757 = vunpack.c.l.b16 %v709
      %v758 = vunpack.c.l.b16 %v710
      %v759 = vunpack.c.l.b16 %v711
      %v760 = vunpack.c.l.b16 %v712
      %v761 = vunpack.c.l.b16 %v713
      %v762 = vunpack.c.l.b16 %v714
      %v763 = vunpack.c.l.b16 %v715
      %v764 = vunpack.c.l.b16 %v716
      %v765 = vunpack.c.l.b16 %v717
      %v766 = vunpack.c.l.b16 %v718
      %v767 = vunpack.c.l.b16 %v719
      %v768 = vpack.c.b16 %v745, %v744
      %v769 = vpack.c.b16 %v747, %v746
      %v770 = vpack.c.b16 %v749, %v748
      %v771 = vpack.c.b16 %v751, %v750
      %v772 = vpack.c.b16 %v753, %v752
      %v773 = vpack.c.b16 %v755, %v754
      %v774 = vpack.c.b16 %v757, %v756
      %v775 = vpack.c.b16 %v759, %v758
      %v776 = vpack.c.b16 %v761, %v760
      %v777 = vpack.c.b16 %v763, %v762
      %v778 = vpack.c.b16 %v765, %v764
      %v779 = vpack.c.b16 %v767, %v766
      %vm792 = vcmask 523264
      %v794 = vsel %vm792, %v680, 0
      %v797 = vsel %vm792, %v682, 0
      %v800 = vsel %vm792, %v684, 0
      %v803 = vsel %vm792, %v686, 0
      %v806 = vsel %vm792, %v688, 0
      %v809 = vsel %vm792, %v690, 0
      %v812 = vsel %vm792, %v692, 0
      %v815 = vsel %vm792, %v694, 0
      %817 = vmatprep.subr.bf16.mxu0 0
      %818 = vmatpush1.bf16.msra.mxu0 %v768
      %819 = vmatprep.subr.bf16.mxu0 0
      %820 = vmatpush1.bf16.msra.mxu0 %v769
      %821 = vmatprep.subr.bf16.mxu0 0
      %822 = vmatpush1.bf16.msra.mxu0 %v770
      %823 = vmatprep.subr.bf16.mxu0 0
      %824 = vmatpush1.bf16.msra.mxu0 %v771
      %825 = vmatprep.subr.bf16.mxu0 0
      %826 = vmatpush1.bf16.msra.mxu0 %v772
      %827 = vmatprep.subr.bf16.mxu0 0
      %828 = vmatpush1.bf16.msra.mxu0 %v773
      %829 = vmatprep.subr.bf16.mxu0 0
      %830 = vmatpush1.bf16.msra.mxu0 %v774
      %831 = vmatprep.subr.bf16.mxu0 0
      %832 = vmatpush1.bf16.msra.mxu0 %v775
      %833 = vmatprep.subr.bf16.mxu0 0
      %834 = vmatpush1.bf16.msra.mxu0 %v776
      %835 = vmatprep.subr.bf16.mxu0 0
      %836 = vmatpush1.bf16.msra.mxu0 %v777
      %837 = vmatprep.subr.bf16.mxu0 0
      %838 = vmatpush1.bf16.msra.mxu0 %v778
      %839 = vmatprep.subr.bf16.mxu0 0
      %840 = vmatpush1.bf16.msra.mxu0 %v779
      %841 = vmatprep.subr.bf16.mxu0 0
      %842 = vmatpush1.bf16.msra.mxu0 0
      %843 = vmatprep.subr.bf16.mxu0 0
      %844 = vmatpush1.bf16.msra.mxu0 0
      %845 = vmatprep.subr.bf16.mxu0 0
      %846 = vmatpush1.bf16.msra.mxu0 0
      %847 = vmatprep.subr.bf16.mxu0 0
      %848 = vmatpush1.bf16.msra.mxu0 0
      %849 = vmatprep.mubr.bf16.mxu0 %v794
      %850 = vmatmul.mubr.bf16.gmra.mrb[0].mxu0 %v679
      %v851 = vpop.f32.mrb[0].mxu0
      %v852 = vadd.f32 0.0, %v851
      %v853 = vpop.f32.mrb[0].mxu0
      %v854 = vpop.f32.mrb[0].mxu0
      %v855 = vadd.f32 0.0, %v854
      %v856 = vpop.f32.mrb[0].mxu0
      %857 = vmatprep.mubr.bf16.mxu0 %v797
      %858 = vmatmul.mubr.bf16.gmra.mrb[0].mxu0 %v681
      %v859 = vpop.f32.mrb[0].mxu0
      %v860 = vadd.f32 0.0, %v859
      %v861 = vpop.f32.mrb[0].mxu0
      %v862 = vpop.f32.mrb[0].mxu0
      %v863 = vadd.f32 0.0, %v862
      %v864 = vpop.f32.mrb[0].mxu0
      %865 = vmatprep.mubr.bf16.mxu0 %v800
      %866 = vmatmul.mubr.bf16.gmra.mrb[0].mxu0 %v683
      %v867 = vpop.f32.mrb[0].mxu0
      %v868 = vadd.f32 0.0, %v867
      %v869 = vpop.f32.mrb[0].mxu0
      %v870 = vpop.f32.mrb[0].mxu0
      %v871 = vadd.f32 0.0, %v870
      %v872 = vpop.f32.mrb[0].mxu0
      %873 = vmatprep.mubr.bf16.mxu0 %v803
      %874 = vmatmul.mubr.bf16.gmra.mrb[0].mxu0 %v685
      %v875 = vpop.f32.mrb[0].mxu0
      %v876 = vadd.f32 0.0, %v875
      %v877 = vpop.f32.mrb[0].mxu0
      %v878 = vpop.f32.mrb[0].mxu0
      %v879 = vadd.f32 0.0, %v878
      %v880 = vpop.f32.mrb[0].mxu0
      %881 = vmatprep.mubr.bf16.mxu0 %v806
      %882 = vmatmul.mubr.bf16.gmra.mrb[0].mxu0 %v687
      %v883 = vpop.f32.mrb[0].mxu0
      %v884 = vadd.f32 0.0, %v883
      %v885 = vpop.f32.mrb[0].mxu0
      %v886 = vpop.f32.mrb[0].mxu0
      %v887 = vadd.f32 0.0, %v886
      %v888 = vpop.f32.mrb[0].mxu0
      %889 = vmatprep.mubr.bf16.mxu0 %v809
      %890 = vmatmul.mubr.bf16.gmra.mrb[0].mxu0 %v689
      %v891 = vpop.f32.mrb[0].mxu0
      %v892 = vadd.f32 0.0, %v891
      %v893 = vpop.f32.mrb[0].mxu0
      %v894 = vpop.f32.mrb[0].mxu0
      %v895 = vadd.f32 0.0, %v894
      %v896 = vpop.f32.mrb[0].mxu0
      %897 = vmatprep.mubr.bf16.mxu0 %v812
      %898 = vmatmul.mubr.bf16.gmra.mrb[0].mxu0 %v691
      %v899 = vpop.f32.mrb[0].mxu0
      %v900 = vadd.f32 0.0, %v899
      %v901 = vpop.f32.mrb[0].mxu0
      %v902 = vpop.f32.mrb[0].mxu0
      %v903 = vadd.f32 0.0, %v902
      %v904 = vpop.f32.mrb[0].mxu0
      %905 = vmatprep.mubr.bf16.mxu0 %v815
      %906 = vmatmul.mubr.bf16.gmra.mrb[0].mxu0 %v693
      %v907 = vpop.f32.mrb[0].mxu0
      %v908 = vadd.f32 0.0, %v907
      %v909 = vpop.f32.mrb[0].mxu0
      %v910 = vpop.f32.mrb[0].mxu0
      %v911 = vadd.f32 0.0, %v910
      %v912 = vpop.f32.mrb[0].mxu0
      %913 = vdwg.mxu0
      %v938 = vunpack.c.l.b16 %v651
      %v939 = vunpack.c.l.b16 %v652
      %v940 = vunpack.c.l.b16 %v653
      %v941 = vunpack.c.l.b16 %v654
      %v942 = vunpack.c.l.b16 %v655
      %v943 = vunpack.c.l.b16 %v656
      %v944 = vunpack.c.l.b16 %v657
      %v945 = vunpack.c.l.b16 %v658
      %v946 = vunpack.c.l.b16 %v659
      %v947 = vunpack.c.l.b16 %v660
      %v948 = vunpack.c.l.b16 %v661
      %v949 = vunpack.c.l.b16 %v662
      %v950 = vunpack.c.l.b16 %v663
      %v951 = vunpack.c.l.b16 %v664
      %v952 = vunpack.c.l.b16 %v665
      %v953 = vunpack.c.l.b16 %v666
      %v954 = vunpack.c.l.b16 %v667
      %v955 = vunpack.c.l.b16 %v668
      %v956 = vunpack.c.l.b16 %v669
      %v957 = vunpack.c.l.b16 %v670
      %v958 = vunpack.c.l.b16 %v671
      %v959 = vunpack.c.l.b16 %v672
      %v960 = vunpack.c.l.b16 %v673
      %v961 = vunpack.c.l.b16 %v674
      %v962 = vpack.c.b16 %v939, %v938
      %v963 = vpack.c.b16 %v941, %v940
      %v964 = vpack.c.b16 %v943, %v942
      %v965 = vpack.c.b16 %v945, %v944
      %v966 = vpack.c.b16 %v947, %v946
      %v967 = vpack.c.b16 %v949, %v948
      %v968 = vpack.c.b16 %v951, %v950
      %v969 = vpack.c.b16 %v953, %v952
      %v970 = vpack.c.b16 %v955, %v954
      %v971 = vpack.c.b16 %v957, %v956
      %v972 = vpack.c.b16 %v959, %v958
      %v973 = vpack.c.b16 %v961, %v960
      %v987 = vsel %vm792, %v636, 0
      %v990 = vsel %vm792, %v638, 0
      %v993 = vsel %vm792, %v640, 0
      %v996 = vsel %vm792, %v642, 0
      %v999 = vsel %vm792, %v644, 0
      %v1002 = vsel %vm792, %v646, 0
      %v1005 = vsel %vm792, %v648, 0
      %v1008 = vsel %vm792, %v650, 0
      %1010 = vmatprep.subr.bf16.mxu0 0
      %1011 = vmatpush1.bf16.msra.mxu0 %v962
      %1012 = vmatprep.subr.bf16.mxu0 0
      %1013 = vmatpush1.bf16.msra.mxu0 %v963
      %1014 = vmatprep.subr.bf16.mxu0 0
      %1015 = vmatpush1.bf16.msra.mxu0 %v964
      %1016 = vmatprep.subr.bf16.mxu0 0
      %1017 = vmatpush1.bf16.msra.mxu0 %v965
      %1018 = vmatprep.subr.bf16.mxu0 0
      %1019 = vmatpush1.bf16.msra.mxu0 %v966
      %1020 = vmatprep.subr.bf16.mxu0 0
      %1021 = vmatpush1.bf16.msra.mxu0 %v967
      %1022 = vmatprep.subr.bf16.mxu0 0
      %1023 = vmatpush1.bf16.msra.mxu0 %v968
      %1024 = vmatprep.subr.bf16.mxu0 0
      %1025 = vmatpush1.bf16.msra.mxu0 %v969
      %1026 = vmatprep.subr.bf16.mxu0 0
      %1027 = vmatpush1.bf16.msra.mxu0 %v970
      %1028 = vmatprep.subr.bf16.mxu0 0
      %1029 = vmatpush1.bf16.msra.mxu0 %v971
      %1030 = vmatprep.subr.bf16.mxu0 0
      %1031 = vmatpush1.bf16.msra.mxu0 %v972
      %1032 = vmatprep.subr.bf16.mxu0 0
      %1033 = vmatpush1.bf16.msra.mxu0 %v973
      %1034 = vmatprep.subr.bf16.mxu0 0
      %1035 = vmatpush1.bf16.msra.mxu0 0
      %1036 = vmatprep.subr.bf16.mxu0 0
      %1037 = vmatpush1.bf16.msra.mxu0 0
      %1038 = vmatprep.subr.bf16.mxu0 0
      %1039 = vmatpush1.bf16.msra.mxu0 0
      %1040 = vmatprep.subr.bf16.mxu0 0
      %1041 = vmatpush1.bf16.msra.mxu0 0
      %1042 = vmatprep.mubr.bf16.mxu0 %v987
      %1043 = vmatmul.mubr.bf16.gmra.mrb[0].mxu0 %v635
      %v1044 = vpop.f32.mrb[0].mxu0
      %v1045 = vadd.f32 %v852, %v1044
      %v1046 = vpop.f32.mrb[0].mxu0
      %v1047 = vpop.f32.mrb[0].mxu0
      %v1048 = vadd.f32 %v855, %v1047
      %v1049 = vpop.f32.mrb[0].mxu0
      %1050 = vmatprep.mubr.bf16.mxu0 %v990
      %1051 = vmatmul.mubr.bf16.gmra.mrb[0].mxu0 %v637
      %v1052 = vpop.f32.mrb[0].mxu0
      %v1053 = vadd.f32 %v860, %v1052
      %v1054 = vpop.f32.mrb[0].mxu0
      %v1055 = vpop.f32.mrb[0].mxu0
      %v1056 = vadd.f32 %v863, %v1055
      %v1057 = vpop.f32.mrb[0].mxu0
      %1058 = vmatprep.mubr.bf16.mxu0 %v993
      %1059 = vmatmul.mubr.bf16.gmra.mrb[0].mxu0 %v639
      %v1060 = vpop.f32.mrb[0].mxu0
      %v1061 = vadd.f32 %v868, %v1060
      %v1062 = vpop.f32.mrb[0].mxu0
      %v1063 = vpop.f32.mrb[0].mxu0
      %v1064 = vadd.f32 %v871, %v1063
      %v1065 = vpop.f32.mrb[0].mxu0
      %1066 = vmatprep.mubr.bf16.mxu0 %v996
      %1067 = vmatmul.mubr.bf16.gmra.mrb[0].mxu0 %v641
      %v1068 = vpop.f32.mrb[0].mxu0
      %v1069 = vadd.f32 %v876, %v1068
      %v1070 = vpop.f32.mrb[0].mxu0
      %v1071 = vpop.f32.mrb[0].mxu0
      %v1072 = vadd.f32 %v879, %v1071
      %v1073 = vpop.f32.mrb[0].mxu0
      %1074 = vmatprep.mubr.bf16.mxu0 %v999
      %1075 = vmatmul.mubr.bf16.gmra.mrb[0].mxu0 %v643
      %v1076 = vpop.f32.mrb[0].mxu0
      %v1077 = vadd.f32 %v884, %v1076
      %v1078 = vpop.f32.mrb[0].mxu0
      %v1079 = vpop.f32.mrb[0].mxu0
      %v1080 = vadd.f32 %v887, %v1079
      %v1081 = vpop.f32.mrb[0].mxu0
      %1082 = vmatprep.mubr.bf16.mxu0 %v1002
      %1083 = vmatmul.mubr.bf16.gmra.mrb[0].mxu0 %v645
      %v1084 = vpop.f32.mrb[0].mxu0
      %v1085 = vadd.f32 %v892, %v1084
      %v1086 = vpop.f32.mrb[0].mxu0
      %v1087 = vpop.f32.mrb[0].mxu0
      %v1088 = vadd.f32 %v895, %v1087
      %v1089 = vpop.f32.mrb[0].mxu0
      %1090 = vmatprep.mubr.bf16.mxu0 %v1005
      %1091 = vmatmul.mubr.bf16.gmra.mrb[0].mxu0 %v647
      %v1092 = vpop.f32.mrb[0].mxu0
      %v1093 = vadd.f32 %v900, %v1092
      %v1094 = vpop.f32.mrb[0].mxu0
      %v1095 = vpop.f32.mrb[0].mxu0
      %v1096 = vadd.f32 %v903, %v1095
      %v1097 = vpop.f32.mrb[0].mxu0
      %1098 = vmatprep.mubr.bf16.mxu0 %v1008
      %1099 = vmatmul.mubr.bf16.gmra.mrb[0].mxu0 %v649
      %v1100 = vpop.f32.mrb[0].mxu0
      %v1101 = vadd.f32 %v908, %v1100
      %v1102 = vpop.f32.mrb[0].mxu0
      %v1103 = vpop.f32.mrb[0].mxu0
      %v1104 = vadd.f32 %v911, %v1103
      %v1105 = vpop.f32.mrb[0].mxu0
      %1106 = vdwg.mxu0
      %s1107 = sadd.s32 %s631, 2
      %s1108 = smul.u32 %s1107, 2
      %s1109 = smul.addr %s1108, 8
      %s1110 = scalar_lea.vmem [#allocation2], %s1109
      %v1111 = vld [vmem:[%s1110] sm:$0xff]
      %v1112 = vld [vmem:[%s1110 + $0x8] sm:$0xff]
      %v1113 = vld [vmem:[%s1110 + $0x10] sm:$0xff]
      %v1114 = vld [vmem:[%s1110 + $0x18] sm:$0xff]
      %v1115 = vld [vmem:[%s1110 + $0x20] sm:$0xff]
      %v1116 = vld [vmem:[%s1110 + $0x28] sm:$0xff]
      %v1117 = vld [vmem:[%s1110 + $0x30] sm:$0xff]
      %v1118 = vld [vmem:[%s1110 + $0x38] sm:$0xff]
      %v1119 = vld [vmem:[%s1110 + $0x40] sm:$0xff]
      %v1120 = vld [vmem:[%s1110 + $0x48] sm:$0xff]
      %v1121 = vld [vmem:[%s1110 + $0x50] sm:$0xff]
      %v1122 = vld [vmem:[%s1110 + $0x58] sm:$0xff]
      %v1123 = vld [vmem:[%s1110 + $0x60] sm:$0xff]
      %v1124 = vld [vmem:[%s1110 + $0x68] sm:$0xff]
      %v1125 = vld [vmem:[%s1110 + $0x70] sm:$0xff]
      %v1126 = vld [vmem:[%s1110 + $0x78] sm:$0xff]
      %s1127 = scalar_lea.vmem %s1, 192
      %v1128 = vld [vmem:[%s1127] sm:$0xf]
      %v1129 = vld [vmem:[%s1127 + $0x4] sm:$0xf]
      %v1130 = vld [vmem:[%s1127 + $0x8] sm:$0xf]
      %v1131 = vld [vmem:[%s1127 + $0xc] sm:$0xf]
      %v1132 = vld [vmem:[%s1127 + $0x10] sm:$0xf]
      %v1133 = vld [vmem:[%s1127 + $0x14] sm:$0xf]
      %v1134 = vld [vmem:[%s1127 + $0x18] sm:$0xf]
      %v1135 = vld [vmem:[%s1127 + $0x1c] sm:$0xf]
      %v1136 = vld [vmem:[%s1127 + $0x20] sm:$0xf]
      %v1137 = vld [vmem:[%s1127 + $0x24] sm:$0xf]
      %v1138 = vld [vmem:[%s1127 + $0x28] sm:$0xf]
      %v1139 = vld [vmem:[%s1127 + $0x2c] sm:$0xf]
      %v1140 = vld [vmem:[%s1127 + $0x30] sm:$0xf]
      %v1141 = vld [vmem:[%s1127 + $0x34] sm:$0xf]
      %v1142 = vld [vmem:[%s1127 + $0x38] sm:$0xf]
      %v1143 = vld [vmem:[%s1127 + $0x3c] sm:$0xf]
      %v1144 = vld [vmem:[%s1127 + $0x40] sm:$0xf]
      %v1145 = vld [vmem:[%s1127 + $0x44] sm:$0xf]
      %v1146 = vld [vmem:[%s1127 + $0x48] sm:$0xf]
      %v1147 = vld [vmem:[%s1127 + $0x4c] sm:$0xf]
      %v1148 = vld [vmem:[%s1127 + $0x50] sm:$0xf]
      %v1149 = vld [vmem:[%s1127 + $0x54] sm:$0xf]
      %v1150 = vld [vmem:[%s1127 + $0x58] sm:$0xf]
      %v1151 = vld [vmem:[%s1127 + $0x5c] sm:$0xf]
      %v1176 = vunpack.c.l.b16 %v1128
      %v1177 = vunpack.c.l.b16 %v1129
      %v1178 = vunpack.c.l.b16 %v1130
      %v1179 = vunpack.c.l.b16 %v1131
      %v1180 = vunpack.c.l.b16 %v1132
      %v1181 = vunpack.c.l.b16 %v1133
      %v1182 = vunpack.c.l.b16 %v1134
      %v1183 = vunpack.c.l.b16 %v1135
      %v1184 = vunpack.c.l.b16 %v1136
      %v1185 = vunpack.c.l.b16 %v1137
      %v1186 = vunpack.c.l.b16 %v1138
      %v1187 = vunpack.c.l.b16 %v1139
      %v1188 = vunpack.c.l.b16 %v1140
      %v1189 = vunpack.c.l.b16 %v1141
      %v1190 = vunpack.c.l.b16 %v1142
      %v1191 = vunpack.c.l.b16 %v1143
      %v1192 = vunpack.c.l.b16 %v1144
      %v1193 = vunpack.c.l.b16 %v1145
      %v1194 = vunpack.c.l.b16 %v1146
      %v1195 = vunpack.c.l.b16 %v1147
      %v1196 = vunpack.c.l.b16 %v1148
      %v1197 = vunpack.c.l.b16 %v1149
      %v1198 = vunpack.c.l.b16 %v1150
      %v1199 = vunpack.c.l.b16 %v1151
      %v1200 = vpack.c.b16 %v1177, %v1176
      %v1201 = vpack.c.b16 %v1179, %v1178
      %v1202 = vpack.c.b16 %v1181, %v1180
      %v1203 = vpack.c.b16 %v1183, %v1182
      %v1204 = vpack.c.b16 %v1185, %v1184
      %v1205 = vpack.c.b16 %v1187, %v1186
      %v1206 = vpack.c.b16 %v1189, %v1188
      %v1207 = vpack.c.b16 %v1191, %v1190
      %v1208 = vpack.c.b16 %v1193, %v1192
      %v1209 = vpack.c.b16 %v1195, %v1194
      %v1210 = vpack.c.b16 %v1197, %v1196
      %v1211 = vpack.c.b16 %v1199, %v1198
      %v1225 = vsel %vm792, %v1112, 0
      %v1228 = vsel %vm792, %v1114, 0
      %v1231 = vsel %vm792, %v1116, 0
      %v1234 = vsel %vm792, %v1118, 0
      %v1237 = vsel %vm792, %v1120, 0
      %v1240 = vsel %vm792, %v1122, 0
      %v1243 = vsel %vm792, %v1124, 0
      %v1246 = vsel %vm792, %v1126, 0
      %1248 = vmatprep.subr.bf16.mxu0 0
      %1249 = vmatpush1.bf16.msra.mxu0 %v1200
      %1250 = vmatprep.subr.bf16.mxu0 0
      %1251 = vmatpush1.bf16.msra.mxu0 %v1201
      %1252 = vmatprep.subr.bf16.mxu0 0
      %1253 = vmatpush1.bf16.msra.mxu0 %v1202
      %1254 = vmatprep.subr.bf16.mxu0 0
      %1255 = vmatpush1.bf16.msra.mxu0 %v1203
      %1256 = vmatprep.subr.bf16.mxu0 0
      %1257 = vmatpush1.bf16.msra.mxu0 %v1204
      %1258 = vmatprep.subr.bf16.mxu0 0
      %1259 = vmatpush1.bf16.msra.mxu0 %v1205
      %1260 = vmatprep.subr.bf16.mxu0 0
      %1261 = vmatpush1.bf16.msra.mxu0 %v1206
      %1262 = vmatprep.subr.bf16.mxu0 0
      %1263 = vmatpush1.bf16.msra.mxu0 %v1207
      %1264 = vmatprep.subr.bf16.mxu0 0
      %1265 = vmatpush1.bf16.msra.mxu0 %v1208
      %1266 = vmatprep.subr.bf16.mxu0 0
      %1267 = vmatpush1.bf16.msra.mxu0 %v1209
      %1268 = vmatprep.subr.bf16.mxu0 0
      %1269 = vmatpush1.bf16.msra.mxu0 %v1210
      %1270 = vmatprep.subr.bf16.mxu0 0
      %1271 = vmatpush1.bf16.msra.mxu0 %v1211
      %1272 = vmatprep.subr.bf16.mxu0 0
      %1273 = vmatpush1.bf16.msra.mxu0 0
      %1274 = vmatprep.subr.bf16.mxu0 0
      %1275 = vmatpush1.bf16.msra.mxu0 0
      %1276 = vmatprep.subr.bf16.mxu0 0
      %1277 = vmatpush1.bf16.msra.mxu0 0
      %1278 = vmatprep.subr.bf16.mxu0 0
      %1279 = vmatpush1.bf16.msra.mxu0 0
      %1280 = vmatprep.mubr.bf16.mxu0 %v1225
      %1281 = vmatmul.mubr.bf16.gmra.mrb[0].mxu0 %v1111
      %v1282 = vpop.f32.mrb[0].mxu0
      %v1283 = vadd.f32 0.0, %v1282
      %v1284 = vpop.f32.mrb[0].mxu0
      %v1285 = vpop.f32.mrb[0].mxu0
      %v1286 = vadd.f32 0.0, %v1285
      %v1287 = vpop.f32.mrb[0].mxu0
      %1288 = vmatprep.mubr.bf16.mxu0 %v1228
      %1289 = vmatmul.mubr.bf16.gmra.mrb[0].mxu0 %v1113
      %v1290 = vpop.f32.mrb[0].mxu0
      %v1291 = vadd.f32 0.0, %v1290
      %v1292 = vpop.f32.mrb[0].mxu0
      %v1293 = vpop.f32.mrb[0].mxu0
      %v1294 = vadd.f32 0.0, %v1293
      %v1295 = vpop.f32.mrb[0].mxu0
      %1296 = vmatprep.mubr.bf16.mxu0 %v1231
      %1297 = vmatmul.mubr.bf16.gmra.mrb[0].mxu0 %v1115
      %v1298 = vpop.f32.mrb[0].mxu0
      %v1299 = vadd.f32 0.0, %v1298
      %v1300 = vpop.f32.mrb[0].mxu0
      %v1301 = vpop.f32.mrb[0].mxu0
      %v1302 = vadd.f32 0.0, %v1301
      %v1303 = vpop.f32.mrb[0].mxu0
      %1304 = vmatprep.mubr.bf16.mxu0 %v1234
      %1305 = vmatmul.mubr.bf16.gmra.mrb[0].mxu0 %v1117
      %v1306 = vpop.f32.mrb[0].mxu0
      %v1307 = vadd.f32 0.0, %v1306
      %v1308 = vpop.f32.mrb[0].mxu0
      %v1309 = vpop.f32.mrb[0].mxu0
      %v1310 = vadd.f32 0.0, %v1309
      %v1311 = vpop.f32.mrb[0].mxu0
      %1312 = vmatprep.mubr.bf16.mxu0 %v1237
      %1313 = vmatmul.mubr.bf16.gmra.mrb[0].mxu0 %v1119
      %v1314 = vpop.f32.mrb[0].mxu0
      %v1315 = vadd.f32 0.0, %v1314
      %v1316 = vpop.f32.mrb[0].mxu0
      %v1317 = vpop.f32.mrb[0].mxu0
      %v1318 = vadd.f32 0.0, %v1317
      %v1319 = vpop.f32.mrb[0].mxu0
      %1320 = vmatprep.mubr.bf16.mxu0 %v1240
      %1321 = vmatmul.mubr.bf16.gmra.mrb[0].mxu0 %v1121
      %v1322 = vpop.f32.mrb[0].mxu0
      %v1323 = vadd.f32 0.0, %v1322
      %v1324 = vpop.f32.mrb[0].mxu0
      %v1325 = vpop.f32.mrb[0].mxu0
      %v1326 = vadd.f32 0.0, %v1325
      %v1327 = vpop.f32.mrb[0].mxu0
      %1328 = vmatprep.mubr.bf16.mxu0 %v1243
      %1329 = vmatmul.mubr.bf16.gmra.mrb[0].mxu0 %v1123
      %v1330 = vpop.f32.mrb[0].mxu0
      %v1331 = vadd.f32 0.0, %v1330
      %v1332 = vpop.f32.mrb[0].mxu0
      %v1333 = vpop.f32.mrb[0].mxu0
      %v1334 = vadd.f32 0.0, %v1333
      %v1335 = vpop.f32.mrb[0].mxu0
      %1336 = vmatprep.mubr.bf16.mxu0 %v1246
      %1337 = vmatmul.mubr.bf16.gmra.mrb[0].mxu0 %v1125
      %v1338 = vpop.f32.mrb[0].mxu0
      %v1339 = vadd.f32 0.0, %v1338
      %v1340 = vpop.f32.mrb[0].mxu0
      %v1341 = vpop.f32.mrb[0].mxu0
      %v1342 = vadd.f32 0.0, %v1341
      %v1343 = vpop.f32.mrb[0].mxu0
      %1344 = vdwg.mxu0
      %v1345 = vadd.f32 %v1045, %v1283
      %v1346 = vadd.f32 %v1048, %v1286
      %v1347 = vadd.f32 %v1053, %v1291
      %v1348 = vadd.f32 %v1056, %v1294
      %v1349 = vadd.f32 %v1061, %v1299
      %v1350 = vadd.f32 %v1064, %v1302
      %v1351 = vadd.f32 %v1069, %v1307
      %v1352 = vadd.f32 %v1072, %v1310
      %v1353 = vadd.f32 %v1077, %v1315
      %v1354 = vadd.f32 %v1080, %v1318
      %v1355 = vadd.f32 %v1085, %v1323
      %v1356 = vadd.f32 %v1088, %v1326
      %v1357 = vadd.f32 %v1093, %v1331
      %v1358 = vadd.f32 %v1096, %v1334
      %v1359 = vadd.f32 %v1101, %v1339
      %v1360 = vadd.f32 %v1104, %v1342
      %v1361 = vld [vmem:[%s2] sm:$0x1]
      %v1363 = vlaneseq
      %v1364 = vshrl.u32 %v1363, 7
      %v1365 = vsub.s32 0, %v1364
      %v1366 = vrot.slane %v1361, %v1365
      %v1368 = vadd.f32 %v1345, %v1366
      %v1369 = vadd.f32 %v1346, %v1366
      %v1370 = vadd.f32 %v1347, %v1366
      %v1371 = vadd.f32 %v1348, %v1366
      %v1372 = vadd.f32 %v1349, %v1366
      %v1373 = vadd.f32 %v1350, %v1366
      %v1374 = vadd.f32 %v1351, %v1366
      %v1375 = vadd.f32 %v1352, %v1366
      %v1376 = vadd.f32 %v1353, %v1366
      %v1377 = vadd.f32 %v1354, %v1366
      %v1378 = vadd.f32 %v1355, %v1366
      %v1379 = vadd.f32 %v1356, %v1366
      %v1380 = vadd.f32 %v1357, %v1366
      %v1381 = vadd.f32 %v1358, %v1366
      %v1382 = vadd.f32 %v1359, %v1366
      %v1383 = vadd.f32 %v1360, %v1366
      %v1384 = vmax.f32 %v1368, 0.0
      %v1385 = vmax.f32 %v1369, 0.0
      %v1386 = vmax.f32 %v1370, 0.0
      %v1387 = vmax.f32 %v1371, 0.0
      %v1388 = vmax.f32 %v1372, 0.0
      %v1389 = vmax.f32 %v1373, 0.0
      %v1390 = vmax.f32 %v1374, 0.0
      %v1391 = vmax.f32 %v1375, 0.0
      %v1392 = vmax.f32 %v1376, 0.0
      %v1393 = vmax.f32 %v1377, 0.0
      %v1394 = vmax.f32 %v1378, 0.0
      %v1395 = vmax.f32 %v1379, 0.0
      %v1396 = vmax.f32 %v1380, 0.0
      %v1397 = vmax.f32 %v1381, 0.0
      %v1398 = vmax.f32 %v1382, 0.0
      %v1399 = vmax.f32 %v1383, 0.0
      %v1400 = vpack.c.bf16 %v1385, %v1384
      %v1401 = vpack.c.bf16 %v1387, %v1386
      %v1402 = vpack.c.bf16 %v1389, %v1388
      %v1403 = vpack.c.bf16 %v1391, %v1390
      %v1404 = vpack.c.bf16 %v1393, %v1392
      %v1405 = vpack.c.bf16 %v1395, %v1394
      %v1406 = vpack.c.bf16 %v1397, %v1396
      %v1407 = vpack.c.bf16 %v1399, %v1398
      %v1416 = vunpack.c.l.b16 %v1400
      %v1417 = vunpack.c.h.b16 %v1400
      %v1418 = vunpack.c.l.b16 %v1401
      %v1419 = vunpack.c.h.b16 %v1401
      %v1420 = vunpack.c.l.b16 %v1402
      %v1421 = vunpack.c.h.b16 %v1402
      %v1422 = vunpack.c.l.b16 %v1403
      %v1423 = vunpack.c.h.b16 %v1403
      %v1424 = vunpack.c.l.b16 %v1404
      %v1425 = vunpack.c.h.b16 %v1404
      %v1426 = vunpack.c.l.b16 %v1405
      %v1427 = vunpack.c.h.b16 %v1405
      %v1428 = vunpack.c.l.b16 %v1406
      %v1429 = vunpack.c.h.b16 %v1406
      %v1430 = vunpack.c.l.b16 %v1407
      %v1431 = vunpack.c.h.b16 %v1407
      %v1432 = vpack.c.b16 %v1416, %v1416
      %v1433 = vpack.c.b16 %v1417, %v1417
      %v1434 = vpack.c.b16 %v1418, %v1418
      %v1435 = vpack.c.b16 %v1419, %v1419
      %v1436 = vpack.c.b16 %v1420, %v1420
      %v1437 = vpack.c.b16 %v1421, %v1421
      %v1438 = vpack.c.b16 %v1422, %v1422
      %v1439 = vpack.c.b16 %v1423, %v1423
      %v1440 = vpack.c.b16 %v1424, %v1424
      %v1441 = vpack.c.b16 %v1425, %v1425
      %v1442 = vpack.c.b16 %v1426, %v1426
      %v1443 = vpack.c.b16 %v1427, %v1427
      %v1444 = vpack.c.b16 %v1428, %v1428
      %v1445 = vpack.c.b16 %v1429, %v1429
      %v1446 = vpack.c.b16 %v1430, %v1430
      %v1447 = vpack.c.b16 %v1431, %v1431
      %vm1464 = vcmask 519168
      %1465 = vst.msk [vmem:[%s194] sm:$0xf] %vm1464, %v1432
      %1466 = vst.msk [vmem:[%s194 + $0x4] sm:$0xf] %vm1464, %v1433
      %1467 = vst.msk [vmem:[%s194 + $0x8] sm:$0xf] %vm1464, %v1434
      %1468 = vst.msk [vmem:[%s194 + $0xc] sm:$0xf] %vm1464, %v1435
      %1469 = vst.msk [vmem:[%s194 + $0x10] sm:$0xf] %vm1464, %v1436
      %1470 = vst.msk [vmem:[%s194 + $0x14] sm:$0xf] %vm1464, %v1437
      %1471 = vst.msk [vmem:[%s194 + $0x18] sm:$0xf] %vm1464, %v1438
      %1472 = vst.msk [vmem:[%s194 + $0x1c] sm:$0xf] %vm1464, %v1439
      %1473 = vst.msk [vmem:[%s194 + $0x20] sm:$0xf] %vm1464, %v1440
      %1474 = vst.msk [vmem:[%s194 + $0x24] sm:$0xf] %vm1464, %v1441
      %1475 = vst.msk [vmem:[%s194 + $0x28] sm:$0xf] %vm1464, %v1442
      %1476 = vst.msk [vmem:[%s194 + $0x2c] sm:$0xf] %vm1464, %v1443
      %1477 = vst.msk [vmem:[%s194 + $0x30] sm:$0xf] %vm1464, %v1444
      %1478 = vst.msk [vmem:[%s194 + $0x34] sm:$0xf] %vm1464, %v1445
      %1479 = vst.msk [vmem:[%s194 + $0x38] sm:$0xf] %vm1464, %v1446
      %1480 = vst.msk [vmem:[%s194 + $0x3c] sm:$0xf] %vm1464, %v1447
      %s1481 = smul.u32 8, %s19
      %p1482 = scmp.lt.s32.totalorder %s18, 1
      %s1483 = scalar_select %p1482, %s18, 1
      %p1484 = scmp.lt.s32.totalorder %s1481, 15
      %s1485 = scalar_select %p1484, %s1481, 15
      %s1486 = smul.addr %s1485, 2
      %s1487 = smul.addr %s1483, 32
      %s1488 = sadd.s32 %s1486, %s1487
      %s1489 = smul.addr %s1488, 4
      %s1490 = scalar_lea.vmem %s3, %s1489
      // Predicated region
      $region37: #{conv_backend_forward.7} parent=31 // pred_check
        %p1491 = pneg %p114
      $region38: #{conv_backend_forward.7} parent=31 // pred_check_branch
        %1493 = sbr.rel (%p1491) target = $region40
      $region39: #{conv_backend_forward.7} parent=31 // pred_region
        %s1494 = smul.u32 8, %s19
      $region40: #{conv_backend_forward.7} parent=31 // pred_fallthru
        _
    $region32: #{conv_backend_forward.7} parent=5 // pred_fallthru
      _
    %p1495 = scmp.le.s32.totalorder 2, %s9
    // Predicated region
    $region41: #{conv_backend_forward.7} parent=5 // pred_check
      %p1496 = pneg %p1495
    $region42: #{conv_backend_forward.7} parent=5 // pred_check_branch
      %1498 = sbr.rel (%p1496) target = $region44
    $region43: #{conv_backend_forward.7} parent=5 // pred_region
      %s1499 = ssub.s32 %s9, 2
      // Predicated region
      $region45: #{conv_backend_forward.7} parent=43 // pred_check
        %p1500 = pneg %p120
      $region46: #{conv_backend_forward.7} parent=43 // pred_check_branch
        %1502 = sbr.rel (%p1500) target = $region48
      $region47: #{conv_backend_forward.7} parent=43 // pred_region
        %s1503 = smul.u32 8, %s21
        %p1504 = scmp.lt.s32.totalorder %s20, 1
        %s1505 = scalar_select %p1504, %s20, 1
        %p1506 = scmp.lt.s32.totalorder %s1503, 15
        %s1507 = scalar_select %p1506, %s1503, 15
        %s1508 = smul.addr %s1507, 2
        %s1509 = smul.addr %s1505, 32
        %s1510 = sadd.s32 %s1508, %s1509
        %s1511 = smul.addr %s1510, 4
        %s1512 = scalar_lea.vmem %s3, %s1511
      $region48: #{conv_backend_forward.7} parent=43 // pred_fallthru
        _
    $region44: #{conv_backend_forward.7} parent=5 // pred_fallthru
      _
  $region6: #{conv_backend_forward.7} parent=0 // loop_footer
    %s13 = sadd.s32 1, %s9
  $region7: #{conv_backend_forward.7} parent=0 // loop_footer_branch
    %8 = sbr.rel target = $region3
  $region8: #{conv_backend_forward.7} parent=0 // loop_exit
    _

</llo_original>
